<compile_context>
chip_gen: v5e
topology: v5e:2x2
jax: 0.10.0
libtpu: 0.0.40
codegen_flags: <defaults>
</compile_context>

<pallas_src>
import math

import jax
import jax.numpy as jnp
from jax.experimental import pallas as pl
from jax.experimental.pallas import tpu as pltpu


# ----------------------------- kernels ---------------------------------------


def _ffn_kernel_resident(x_ref, w1_ref, b1_ref, w2_ref, b2_ref, o_ref):
    """Whole FFN for one row tile; W1/W2/b1/b2 stay resident in VMEM."""
    h = jnp.dot(x_ref[...], w1_ref[...], preferred_element_type=jnp.float32)
    h = jnp.maximum(h + b1_ref[...].astype(jnp.float32), 0.0)
    # TODO(synk): dropout is identity here (inference semantics); training-mode
    # dropout would mask `h` using pltpu.prng_seed / pltpu.prng_random_bits.
    y = jnp.dot(h.astype(w2_ref.dtype), w2_ref[...],
                preferred_element_type=jnp.float32)
    o_ref[...] = (y + b2_ref[...].astype(jnp.float32)).astype(o_ref.dtype)


def _ffn_kernel_tiled(x_ref, w1_ref, b1_ref, w2_ref, b2_ref, o_ref, acc_ref):
    """Fallback: contract over hidden tiles into a resident f32 accumulator."""
    j = pl.program_id(1)

    @pl.when(j == 0)
    def _init():
        acc_ref[...] = jnp.zeros_like(acc_ref)

    h = jnp.dot(x_ref[...], w1_ref[...], preferred_element_type=jnp.float32)
    h = jnp.maximum(h + b1_ref[...].astype(jnp.float32), 0.0)
    acc_ref[...] += jnp.dot(h.astype(w2_ref.dtype), w2_ref[...],
                            preferred_element_type=jnp.float32)

    @pl.when(j == pl.num_programs(1) - 1)
    def _finalize():
        o_ref[...] = (acc_ref[...] + b2_ref[...].astype(jnp.float32)).astype(o_ref.dtype)


# ----------------------------- tiling helpers ---------------------------------


def _round_up(n, m):
    return -(-n // m) * m


def _align_down(n, m):
    return (n // m) * m


def _cdiv(a, b):
    return -(-a // b)


def _vmem_budget_bytes():
    """Generation-aware VMEM budget: ~3/4 of physical VMEM per TensorCore."""
    try:
        cap = int(pltpu.get_tpu_info().vmem_capacity_bytes)
    except Exception:
        cap = 64 * 1024 * 1024          # conservative fallback (v7x-sized)
    cap = max(32 * 1024 * 1024, min(cap, 128 * 1024 * 1024))
    return (cap * 3) // 4               # ~48 MiB on v7x, ~96 MiB on v5e/v6e


def _pick_divisor_tile(total, target, align):
    """Largest multiple of `align` <= target that divides `total`; else full extent."""
    t = _align_down(min(target, total), align)
    while t >= align:
        if total % t == 0:
            return t
        t -= align
    return total


def _pick_row_tile(rows, cap_rows, target=1024):
    """Row tile: large, MXU-aligned, >=2 tiles when rows permit (megacore)."""
    t = max(8, min(cap_rows, target, _round_up(rows, 8)))
    for align in (256, 128, 8):
        if t >= align:
            t = _align_down(t, align)
            break
    # Guarantee >=2 row tiles when rows allow so the 'parallel' row axis can
    # shard across both v7x TensorCores.
    if rows >= 2 * 128 and _cdiv(rows, t) < 2:
        t = min(t, _round_up(_cdiv(rows, 2), 128))
    return max(8, t)


# ----------------------------- public wrapper ---------------------------------


def feed_forward_pallas(x, w1, b1, w2, b2):
    """y = relu(x @ w1 + b1) @ w2 + b2   (dropout in eval mode = identity).

    w1: (d_model, hidden), w2: (hidden, d_model)  (torch Linear weights transposed).
    """
    d_model = x.shape[-1]
    hidden = w1.shape[1]
    assert w1.shape == (d_model, hidden)
    assert w2.shape == (hidden, d_model)

    orig_shape = x.shape
    rows = math.prod(orig_shape[:-1])          # static shapes -> pure Python math
    x2 = x.reshape(rows, d_model)
    b1_2 = b1.reshape(1, hidden)
    b2_2 = b2.reshape(1, d_model)

    x_isz = jnp.dtype(x.dtype).itemsize
    w_isz = jnp.dtype(w1.dtype).itemsize
    o_isz = x_isz

    budget = _vmem_budget_bytes()
    tile_budget = budget - 4 * 1024 * 1024     # headroom for compiler scratch

    # --- fast path: weights fully resident in VMEM (constant block indices) ---
    # Fixed cost counts the weight/bias blocks double-buffered (conservative).
    fixed_resident = (2 * (d_model * hidden + hidden * d_model) * w_isz
                      + 2 * (hidden + d_model) * w_isz)
    # Per-row cost: x + out blocks (double-buffered) + f32 intermediates (h, y).
    per_row_resident = (2 * d_model * x_isz + 2 * d_model * o_isz
                        + hidden * 4 + d_model * 4)
    use_resident = fixed_resident + 128 * per_row_resident <= tile_budget

    if use_resident:
        tm_cap = max(8, (tile_budget - fixed_resident) // per_row_resident)
        tm = _pick_row_tile(rows, tm_cap)
        grid = (_cdiv(rows, tm),)
        out = pl.pallas_call(
            _ffn_kernel_resident,
            out_shape=jax.ShapeDtypeStruct((rows, d_model), x.dtype),
            grid_spec=pltpu.PrefetchScalarGridSpec(
                num_scalar_prefetch=0,
                grid=grid,
                in_specs=[
                    pl.BlockSpec((tm, d_model), lambda i: (i, 0)),       # x tile
                    pl.BlockSpec((d_model, hidden), lambda i: (0, 0)),   # W1 (resident)
                    pl.BlockSpec((1, hidden), lambda i: (0, 0)),         # b1 (resident)
                    pl.BlockSpec((hidden, d_model), lambda i: (0, 0)),   # W2 (resident)
                    pl.BlockSpec((1, d_model), lambda i: (0, 0)),        # b2 (resident)
                ],
                out_specs=pl.BlockSpec((tm, d_model), lambda i: (i, 0)),
            ),
            compiler_params=pltpu.CompilerParams(
                dimension_semantics=("parallel",),
                vmem_limit_bytes=budget,
            ),
        )(x2, w1, b1_2, w2, b2_2)
    else:
        # --- fallback: hidden (reduction) axis tiled, weights streamed ---
        th = _pick_divisor_tile(hidden, 512, 128)
        fixed_tiled = (2 * (d_model * th + th * d_model) * w_isz
                       + 2 * (th + d_model) * w_isz)
        per_row_tiled = (2 * d_model * x_isz + 2 * d_model * o_isz
                         + d_model * 4            # f32 accumulator scratch
                         + th * 4 + d_model * 4)  # f32 intermediates
        tm_cap = max(8, (tile_budget - fixed_tiled) // per_row_tiled)
        tm = _pick_row_tile(rows, tm_cap)
        grid = (_cdiv(rows, tm), hidden // th)
        out = pl.pallas_call(
            _ffn_kernel_tiled,
            out_shape=jax.ShapeDtypeStruct((rows, d_model), x.dtype),
            grid_spec=pltpu.PrefetchScalarGridSpec(
                num_scalar_prefetch=0,
                grid=grid,
                in_specs=[
                    pl.BlockSpec((tm, d_model), lambda i, j: (i, 0)),    # x tile
                    pl.BlockSpec((d_model, th), lambda i, j: (0, j)),    # W1 chunk
                    pl.BlockSpec((1, th), lambda i, j: (0, j)),          # b1 chunk
                    pl.BlockSpec((th, d_model), lambda i, j: (j, 0)),    # W2 chunk
                    pl.BlockSpec((1, d_model), lambda i, j: (0, 0)),     # b2
                ],
                out_specs=pl.BlockSpec((tm, d_model), lambda i, j: (i, 0)),
                scratch_shapes=[pltpu.VMEM((tm, d_model), jnp.float32)],
            ),
            compiler_params=pltpu.CompilerParams(
                dimension_semantics=("parallel", "arbitrary"),
                vmem_limit_bytes=budget,
            ),
        )(x2, w1, b1_2, w2, b2_2)

    return out.reshape(orig_shape)


if __name__ == "__main__":
    key = jax.random.PRNGKey(0)
    k_x, k_w1, k_b1, k_w2, k_b2 = jax.random.split(key, 5)

    # BertConfig dims: d_model=384, hidden_dim=2048; small batch/seq for the smoke test.
    batch, seq, d_model, hidden_dim = 2, 8, 384, 2048

    x = jax.random.normal(k_x, (batch, seq, d_model), dtype=jnp.float32)
    w1 = jax.random.normal(k_w1, (d_model, hidden_dim), dtype=jnp.float32) / jnp.sqrt(d_model)
    b1 = jax.random.normal(k_b1, (hidden_dim,), dtype=jnp.float32) * 0.02
    w2 = jax.random.normal(k_w2, (hidden_dim, d_model), dtype=jnp.float32) / jnp.sqrt(hidden_dim)
    b2 = jax.random.normal(k_b2, (d_model,), dtype=jnp.float32) * 0.02

    out = feed_forward_pallas(x, w1, b1, w2, b2)
    out = jax.block_until_ready(out)

    # Pure-JAX reference of the PyTorch forward (dropout in eval mode = identity).
    h = jnp.maximum(
        jnp.dot(x, w1, precision=jax.lax.Precision.HIGHEST) + b1, 0.0)
    ref = jnp.dot(h, w2, precision=jax.lax.Precision.HIGHEST) + b2

    assert out.shape == x.shape and out.dtype == x.dtype
    assert jnp.allclose(out, ref, atol=2e-2, rtol=2e-2), float(jnp.max(jnp.abs(out - ref)))

    print("KERNEL_OK")
</pallas_src>

<mosaic_0001>
module attributes {stable_mosaic.version = 11 : i64} {
  func.func @_ffn_kernel_resident(%arg0: i32, %arg1: memref<16x384xf32, #tpu.memory_space<vmem>>, %arg2: memref<384x2048xf32, #tpu.memory_space<vmem>>, %arg3: memref<1x2048xf32, #tpu.memory_space<vmem>>, %arg4: memref<2048x384xf32, #tpu.memory_space<vmem>>, %arg5: memref<1x384xf32, #tpu.memory_space<vmem>>, %arg6: memref<16x384xf32, #tpu.memory_space<vmem>>) attributes {dimension_semantics = [#tpu.dimension_semantics<parallel>], iteration_bounds = array<i64: 1>, scalar_prefetch = 0 : i64, scratch_operands = 0 : i64, tpu.core_type = #tpu.core_type<tc>, window_params = [{transform_indices = @transform_0, window_bounds = array<i64: 16, 384>}, {pipeline_mode = #tpu.pipeline_mode<synchronous>, transform_indices = @transform_1, window_bounds = array<i64: 384, 2048>}, {pipeline_mode = #tpu.pipeline_mode<synchronous>, transform_indices = @transform_2, window_bounds = array<i64: 1, 2048>}, {pipeline_mode = #tpu.pipeline_mode<synchronous>, transform_indices = @transform_3, window_bounds = array<i64: 2048, 384>}, {pipeline_mode = #tpu.pipeline_mode<synchronous>, transform_indices = @transform_4, window_bounds = array<i64: 1, 384>}, {transform_indices = @transform_5, window_bounds = array<i64: 16, 384>}]} {
    %c0 = arith.constant 0 : index
    %c0_0 = arith.constant 0 : index
    %0 = vector.load %arg1[%c0, %c0_0] : memref<16x384xf32, #tpu.memory_space<vmem>>, vector<16x384xf32>
    %c0_1 = arith.constant 0 : index
    %c0_2 = arith.constant 0 : index
    %1 = vector.load %arg2[%c0_1, %c0_2] : memref<384x2048xf32, #tpu.memory_space<vmem>>, vector<384x2048xf32>
    %cst = arith.constant dense<0.000000e+00> : vector<16x2048xf32>
    %2 = tpu.matmul %0, %1, %cst {dimension_numbers = #tpu.dot_dimension_numbers<[1], [0], [0], [1], [0, 0, 1, 1], [], []>} : vector<16x384xf32>, vector<384x2048xf32>, vector<16x2048xf32> -> vector<16x2048xf32>
    %c0_3 = arith.constant 0 : index
    %c0_4 = arith.constant 0 : index
    %3 = vector.load %arg3[%c0_3, %c0_4] : memref<1x2048xf32, #tpu.memory_space<vmem>>, vector<1x2048xf32>
    %4 = vector.broadcast %3 : vector<1x2048xf32> to vector<16x2048xf32>
    %5 = arith.addf %2, %4 : vector<16x2048xf32>
    %cst_5 = arith.constant 0.000000e+00 : f32
    %6 = vector.broadcast %cst_5 : f32 to vector<16x2048xf32>
    %7 = arith.maximumf %5, %6 : vector<16x2048xf32>
    %c0_6 = arith.constant 0 : index
    %c0_7 = arith.constant 0 : index
    %8 = vector.load %arg4[%c0_6, %c0_7] : memref<2048x384xf32, #tpu.memory_space<vmem>>, vector<2048x384xf32>
    %cst_8 = arith.constant dense<0.000000e+00> : vector<16x384xf32>
    %9 = tpu.matmul %7, %8, %cst_8 {dimension_numbers = #tpu.dot_dimension_numbers<[1], [0], [0], [1], [0, 0, 1, 1], [], []>} : vector<16x2048xf32>, vector<2048x384xf32>, vector<16x384xf32> -> vector<16x384xf32>
    %c0_9 = arith.constant 0 : index
    %c0_10 = arith.constant 0 : index
    %10 = vector.load %arg5[%c0_9, %c0_10] : memref<1x384xf32, #tpu.memory_space<vmem>>, vector<1x384xf32>
    %11 = vector.broadcast %10 : vector<1x384xf32> to vector<16x384xf32>
    %12 = arith.addf %9, %11 : vector<16x384xf32>
    %c0_11 = arith.constant 0 : index
    %c0_12 = arith.constant 0 : index
    %13 = vector.load %arg6[%c0_11, %c0_12] : memref<16x384xf32, #tpu.memory_space<vmem>>, vector<16x384xf32>
    tpu.vector_store %arg6[%c0_11, %c0_12], %12 {strides = array<i32>} : memref<16x384xf32, #tpu.memory_space<vmem>>, vector<16x384xf32>,
    return
  }
  func.func @transform_0(%arg0: i32) -> (i32, i32) {
    %c0_i32 = arith.constant 0 : i32
    %c0_i32_0 = arith.constant 0 : i32
    return %arg0, %c0_i32 : i32, i32
  }
  func.func @transform_1(%arg0: i32) -> (i32, i32) {
    %c0_i32 = arith.constant 0 : i32
    %c0_i32_0 = arith.constant 0 : i32
    %c0_i32_1 = arith.constant 0 : i32
    return %c0_i32, %c0_i32_0 : i32, i32
  }
  func.func @transform_2(%arg0: i32) -> (i32, i32) {
    %c0_i32 = arith.constant 0 : i32
    %c0_i32_0 = arith.constant 0 : i32
    %c0_i32_1 = arith.constant 0 : i32
    return %c0_i32, %c0_i32_0 : i32, i32
  }
  func.func @transform_3(%arg0: i32) -> (i32, i32) {
    %c0_i32 = arith.constant 0 : i32
    %c0_i32_0 = arith.constant 0 : i32
    %c0_i32_1 = arith.constant 0 : i32
    return %c0_i32, %c0_i32_0 : i32, i32
  }
  func.func @transform_4(%arg0: i32) -> (i32, i32) {
    %c0_i32 = arith.constant 0 : i32
    %c0_i32_0 = arith.constant 0 : i32
    %c0_i32_1 = arith.constant 0 : i32
    return %c0_i32, %c0_i32_0 : i32, i32
  }
  func.func @transform_5(%arg0: i32) -> (i32, i32) {
    %c0_i32 = arith.constant 0 : i32
    %c0_i32_0 = arith.constant 0 : i32
    return %arg0, %c0_i32 : i32, i32
  }
}

</mosaic_0001>

<llo_original>
// kernel: tpu_custom_call.1
$region0: #{tpu_custom_call.1}
  #allocation0 [shape = 'u32[]', space=smem, size = 0x4, offset = 0x4, fixed_abs, tag = 'smem constant byte address 0x4 - core index']
  #allocation1 [shape = 'u32[72,128]{1,0:T(1,128)}', space=vmem, size = 0x9000, scoped, tag = 'internal scratch']
  %s0 = inlined_call_operand.hbm [shape: f32[16,384], index: 0, kind: input, shape index: {}]
  %s1 = inlined_call_operand.hbm [shape: f32[384,2048], index: 1, kind: input, shape index: {}]
  %s2 = inlined_call_operand.hbm [shape: f32[1,2048], index: 2, kind: input, shape index: {}]
  %s3 = inlined_call_operand.hbm [shape: f32[2048,384], index: 3, kind: input, shape index: {}]
  %s4 = inlined_call_operand.hbm [shape: f32[1,384], index: 4, kind: input, shape index: {}]
  %s5 = inlined_call_operand.hbm [shape: f32[16,384], index: 5, kind: output, shape index: {}]
  %s6 = sld [smem:[#allocation0]]
  $region50: #{tpu_custom_call.1} parent=0
    _
  %s8 = ssub.s32 1, %s6
  %s9 = scalar_select 0, %s8, %s6
  $region1: #{tpu_custom_call.1} parent=0
    #allocation2 [shape = 'u8[24576]{0}', space=vmem, size = 0x6000, scoped, tag = 'input window, operand 0, single buffered']
    #allocation3 [shape = 's32[1]{0}', space=sflag, size = 0x4, scoped, tag = 'scoped memory for tpu_custom_call.1']
    #allocation4 [shape = 's32[1]{0}', space=sflag, size = 0x4, scoped, tag = 'scoped memory for tpu_custom_call.1']
    #allocation5 [shape = 'u8[3145728]{0}', space=vmem, size = 0x300000, scoped, tag = 'input window, operand 1, single buffered']
    #allocation6 [shape = 's32[1]{0}', space=sflag, size = 0x4, scoped, tag = 'scoped memory for tpu_custom_call.1']
    #allocation7 [shape = 'u8[8192]{0}', space=vmem, size = 0x2000, scoped, tag = 'input window, operand 2, single buffered']
    #allocation8 [shape = 'u8[3145728]{0}', space=vmem, size = 0x300000, scoped, tag = 'input window, operand 3, single buffered']
    #allocation9 [shape = 's32[1]{0}', space=sflag, size = 0x4, scoped, tag = 'scoped memory for tpu_custom_call.1']
    #allocation10 [shape = 'u8[1536]{0}', space=vmem, size = 0x800, scoped, tag = 'input window, operand 4, single buffered']
    #allocation11 [shape = 'u8[24576]{0}', space=vmem, size = 0x6000, scoped, tag = 'output window, operand 0, single buffered']
    %10 = vsyncpa [#allocation3], 0
    %11 = vsyncpa [#allocation6], 0
    %12 = vsyncpa [#allocation9], 0
    %13 = vsyncpa [#allocation4], 0
    // Predicated region
    $region2: #{tpu_custom_call.1} parent=1 // pred_check
      _
    $region3: #{tpu_custom_call.1} parent=1 // pred_check_branch
      %15 = sbr.rel (0) target = $region5
    $region4: #{tpu_custom_call.1} parent=1 // pred_region
      %17 = vsyncadd [#allocation3], 0
      %s18 = sshll.u32 %s0, 4
      %s19 = int_to_ptr.hbm [resolvable:$true] %s18
      %s20 = sshll.u32 [#allocation2], 4
      %s21 = int_to_ptr.vmem [resolvable:$true] %s20
      %26 = dma.hbm_to_vmem [thread:$0]  %s19, 768, %s21, [#allocation3], 384, 384, 24
    $region5: #{tpu_custom_call.1} parent=1 // pred_fallthru
      _
    // Predicated region
    $region6: #{tpu_custom_call.1} parent=1 // pred_check
      _
    $region7: #{tpu_custom_call.1} parent=1 // pred_check_branch
      %28 = sbr.rel (0) target = $region9
    $region8: #{tpu_custom_call.1} parent=1 // pred_region
      %30 = vsyncadd [#allocation6], 0
      %s31 = sshll.u32 %s1, 4
      %s32 = int_to_ptr.hbm [resolvable:$true] %s31
      %s33 = sshll.u32 [#allocation5], 4
      %s34 = int_to_ptr.vmem [resolvable:$true] %s33
      %39 = dma.hbm_to_vmem [thread:$0]  %s32, 98304, %s34, [#allocation6], 2048, 2048, 128
    $region9: #{tpu_custom_call.1} parent=1 // pred_fallthru
      _
    // Predicated region
    $region10: #{tpu_custom_call.1} parent=1 // pred_check
      _
    $region11: #{tpu_custom_call.1} parent=1 // pred_check_branch
      %41 = sbr.rel (0) target = $region13
    $region12: #{tpu_custom_call.1} parent=1 // pred_region
      %43 = vsyncadd [#allocation6], 0
      %s45 = sshll.u32 %s2, 4
      %s46 = int_to_ptr.hbm [resolvable:$true] %s45
      %s47 = sshll.u32 [#allocation7], 4
      %s48 = int_to_ptr.vmem [resolvable:$true] %s47
      %50 = dma.hbm_to_vmem [thread:$0]  %s46, 256, %s48, [#allocation6]
    $region13: #{tpu_custom_call.1} parent=1 // pred_fallthru
      _
    // Predicated region
    $region14: #{tpu_custom_call.1} parent=1 // pred_check
      _
    $region15: #{tpu_custom_call.1} parent=1 // pred_check_branch
      %52 = sbr.rel (0) target = $region17
    $region16: #{tpu_custom_call.1} parent=1 // pred_region
      %54 = vsyncadd [#allocation9], 0
      %s55 = sshll.u32 %s3, 4
      %s56 = int_to_ptr.hbm [resolvable:$true] %s55
      %s57 = sshll.u32 [#allocation8], 4
      %s58 = int_to_ptr.vmem [resolvable:$true] %s57
      %63 = dma.hbm_to_vmem [thread:$0]  %s56, 98304, %s58, [#allocation9], 384, 384, 24
    $region17: #{tpu_custom_call.1} parent=1 // pred_fallthru
      _
    // Predicated region
    $region18: #{tpu_custom_call.1} parent=1 // pred_check
      _
    $region19: #{tpu_custom_call.1} parent=1 // pred_check_branch
      %65 = sbr.rel (0) target = $region21
    $region20: #{tpu_custom_call.1} parent=1 // pred_region
      %67 = vsyncadd [#allocation9], 0
      %s69 = sshll.u32 %s4, 4
      %s70 = int_to_ptr.hbm [resolvable:$true] %s69
      %s71 = sshll.u32 [#allocation10], 4
      %s72 = int_to_ptr.vmem [resolvable:$true] %s71
      %74 = dma.hbm_to_vmem [thread:$0]  %s70, 48, %s72, [#allocation9]
    $region21: #{tpu_custom_call.1} parent=1 // pred_fallthru
      _
    // Predicated region
    $region22: #{tpu_custom_call.1} parent=1 // pred_check
      _
    $region23: #{tpu_custom_call.1} parent=1 // pred_check_branch
      %76 = sbr.rel (0) target = $region25
    $region24: #{tpu_custom_call.1} parent=1 // pred_region
      %78 = dma.done [#allocation3], 768
    $region25: #{tpu_custom_call.1} parent=1 // pred_fallthru
      _
    // Predicated region
    $region26: #{tpu_custom_call.1} parent=1 // pred_check
      _
    $region27: #{tpu_custom_call.1} parent=1 // pred_check_branch
      %80 = sbr.rel (0) target = $region29
    $region28: #{tpu_custom_call.1} parent=1 // pred_region
      %82 = dma.done [#allocation6], 98304
    $region29: #{tpu_custom_call.1} parent=1 // pred_fallthru
      _
    // Predicated region
    $region30: #{tpu_custom_call.1} parent=1 // pred_check
      _
    $region31: #{tpu_custom_call.1} parent=1 // pred_check_branch
      %84 = sbr.rel (0) target = $region33
    $region32: #{tpu_custom_call.1} parent=1 // pred_region
      %86 = dma.done [#allocation6], 256
    $region33: #{tpu_custom_call.1} parent=1 // pred_fallthru
      _
    // Predicated region
    $region34: #{tpu_custom_call.1} parent=1 // pred_check
      _
    $region35: #{tpu_custom_call.1} parent=1 // pred_check_branch
      %88 = sbr.rel (0) target = $region37
    $region36: #{tpu_custom_call.1} parent=1 // pred_region
      %90 = dma.done [#allocation9], 98304
    $region37: #{tpu_custom_call.1} parent=1 // pred_fallthru
      _
    // Predicated region
    $region38: #{tpu_custom_call.1} parent=1 // pred_check
      _
    $region39: #{tpu_custom_call.1} parent=1 // pred_check_branch
      %92 = sbr.rel (0) target = $region41
    $region40: #{tpu_custom_call.1} parent=1 // pred_region
      %94 = dma.done [#allocation9], 48
    $region41: #{tpu_custom_call.1} parent=1 // pred_fallthru
      _
    %v95 = vld [vmem:[#allocation2] sm:$0xff]
    %v96 = vld [vmem:[#allocation2 + $0x8] sm:$0xff]
    %v97 = vld [vmem:[#allocation2 + $0x10] sm:$0xff]
    %v98 = vld [vmem:[#allocation2 + $0x18] sm:$0xff]
    %v99 = vld [vmem:[#allocation2 + $0x20] sm:$0xff]
    %v100 = vld [vmem:[#allocation2 + $0x28] sm:$0xff]
    %v101 = vld [vmem:[#allocation5] sm:$0xff]
    %v102 = vld [vmem:[#allocation5 + $0x8] sm:$0xff]
    %v103 = vld [vmem:[#allocation5 + $0x10] sm:$0xff]
    %v104 = vld [vmem:[#allocation5 + $0x18] sm:$0xff]
    %v105 = vld [vmem:[#allocation5 + $0x20] sm:$0xff]
    %v106 = vld [vmem:[#allocation5 + $0x28] sm:$0xff]
    %v107 = vld [vmem:[#allocation5 + $0x30] sm:$0xff]
    %v108 = vld [vmem:[#allocation5 + $0x38] sm:$0xff]
    %v109 = vld [vmem:[#allocation5 + $0x40] sm:$0xff]
    %v110 = vld [vmem:[#allocation5 + $0x48] sm:$0xff]
    %v111 = vld [vmem:[#allocation5 + $0x50] sm:$0xff]
    %v112 = vld [vmem:[#allocation5 + $0x58] sm:$0xff]
    %v113 = vld [vmem:[#allocation5 + $0x60] sm:$0xff]
    %v114 = vld [vmem:[#allocation5 + $0x68] sm:$0xff]
    %v115 = vld [vmem:[#allocation5 + $0x70] sm:$0xff]
    %v116 = vld [vmem:[#allocation5 + $0x78] sm:$0xff]
    %v117 = vld [vmem:[#allocation5 + $0x80] sm:$0xff]
    %v118 = vld [vmem:[#allocation5 + $0x88] sm:$0xff]
    %v119 = vld [vmem:[#allocation5 + $0x90] sm:$0xff]
    %v120 = vld [vmem:[#allocation5 + $0x98] sm:$0xff]
    %v121 = vld [vmem:[#allocation5 + $0xa0] sm:$0xff]
    %v122 = vld [vmem:[#allocation5 + $0xa8] sm:$0xff]
    %v123 = vld [vmem:[#allocation5 + $0xb0] sm:$0xff]
    %v124 = vld [vmem:[#allocation5 + $0xb8] sm:$0xff]
    %v125 = vld [vmem:[#allocation5 + $0xc0] sm:$0xff]
    %v126 = vld [vmem:[#allocation5 + $0xc8] sm:$0xff]
    %v127 = vld [vmem:[#allocation5 + $0xd0] sm:$0xff]
    %v128 = vld [vmem:[#allocation5 + $0xd8] sm:$0xff]
    %v129 = vld [vmem:[#allocation5 + $0xe0] sm:$0xff]
    %v130 = vld [vmem:[#allocation5 + $0xe8] sm:$0xff]
    %v131 = vld [vmem:[#allocation5 + $0xf0] sm:$0xff]
    %v132 = vld [vmem:[#allocation5 + $0xf8] sm:$0xff]
    %v133 = vld [vmem:[#allocation5 + $0x100] sm:$0xff]
    %v134 = vld [vmem:[#allocation5 + $0x108] sm:$0xff]
    %v135 = vld [vmem:[#allocation5 + $0x110] sm:$0xff]
    %v136 = vld [vmem:[#allocation5 + $0x118] sm:$0xff]
    %v137 = vld [vmem:[#allocation5 + $0x120] sm:$0xff]
    %v138 = vld [vmem:[#allocation5 + $0x128] sm:$0xff]
    %v139 = vld [vmem:[#allocation5 + $0x130] sm:$0xff]
    %v140 = vld [vmem:[#allocation5 + $0x138] sm:$0xff]
    %v141 = vld [vmem:[#allocation5 + $0x140] sm:$0xff]
    %v142 = vld [vmem:[#allocation5 + $0x148] sm:$0xff]
    %v143 = vld [vmem:[#allocation5 + $0x150] sm:$0xff]
    %v144 = vld [vmem:[#allocation5 + $0x158] sm:$0xff]
    %v145 = vld [vmem:[#allocation5 + $0x160] sm:$0xff]
    %v146 = vld [vmem:[#allocation5 + $0x168] sm:$0xff]
    %v147 = vld [vmem:[#allocation5 + $0x170] sm:$0xff]
    %v148 = vld [vmem:[#allocation5 + $0x178] sm:$0xff]
    %v149 = vld [vmem:[#allocation5 + $0x180] sm:$0xff]
    %v150 = vld [vmem:[#allocation5 + $0x188] sm:$0xff]
    %v151 = vld [vmem:[#allocation5 + $0x190] sm:$0xff]
    %v152 = vld [vmem:[#allocation5 + $0x198] sm:$0xff]
    %v153 = vld [vmem:[#allocation5 + $0x1a0] sm:$0xff]
    %v154 = vld [vmem:[#allocation5 + $0x1a8] sm:$0xff]
    %v155 = vld [vmem:[#allocation5 + $0x1b0] sm:$0xff]
    %v156 = vld [vmem:[#allocation5 + $0x1b8] sm:$0xff]
    %v157 = vld [vmem:[#allocation5 + $0x1c0] sm:$0xff]
    %v158 = vld [vmem:[#allocation5 + $0x1c8] sm:$0xff]
    %v159 = vld [vmem:[#allocation5 + $0x1d0] sm:$0xff]
    %v160 = vld [vmem:[#allocation5 + $0x1d8] sm:$0xff]
    %v161 = vld [vmem:[#allocation5 + $0x1e0] sm:$0xff]
    %v162 = vld [vmem:[#allocation5 + $0x1e8] sm:$0xff]
    %v163 = vld [vmem:[#allocation5 + $0x1f0] sm:$0xff]
    %v164 = vld [vmem:[#allocation5 + $0x1f8] sm:$0xff]
    %v165 = vld [vmem:[#allocation5 + $0x200] sm:$0xff]
    %v166 = vld [vmem:[#allocation5 + $0x208] sm:$0xff]
    %v167 = vld [vmem:[#allocation5 + $0x210] sm:$0xff]
    %v168 = vld [vmem:[#allocation5 + $0x218] sm:$0xff]
    %v169 = vld [vmem:[#allocation5 + $0x220] sm:$0xff]
    %v170 = vld [vmem:[#allocation5 + $0x228] sm:$0xff]
    %v171 = vld [vmem:[#allocation5 + $0x230] sm:$0xff]
    %v172 = vld [vmem:[#allocation5 + $0x238] sm:$0xff]
    %v173 = vld [vmem:[#allocation5 + $0x240] sm:$0xff]
    %v174 = vld [vmem:[#allocation5 + $0x248] sm:$0xff]
    %v175 = vld [vmem:[#allocation5 + $0x250] sm:$0xff]
    %v176 = vld [vmem:[#allocation5 + $0x258] sm:$0xff]
    %v177 = vld [vmem:[#allocation5 + $0x260] sm:$0xff]
    %v178 = vld [vmem:[#allocation5 + $0x268] sm:$0xff]
    %v179 = vld [vmem:[#allocation5 + $0x270] sm:$0xff]
    %v180 = vld [vmem:[#allocation5 + $0x278] sm:$0xff]
    %v181 = vld [vmem:[#allocation5 + $0x280] sm:$0xff]
    %v182 = vld [vmem:[#allocation5 + $0x288] sm:$0xff]
    %v183 = vld [vmem:[#allocation5 + $0x290] sm:$0xff]
    %v184 = vld [vmem:[#allocation5 + $0x298] sm:$0xff]
    %v185 = vld [vmem:[#allocation5 + $0x2a0] sm:$0xff]
    %v186 = vld [vmem:[#allocation5 + $0x2a8] sm:$0xff]
    %v187 = vld [vmem:[#allocation5 + $0x2b0] sm:$0xff]
    %v188 = vld [vmem:[#allocation5 + $0x2b8] sm:$0xff]
    %v189 = vld [vmem:[#allocation5 + $0x2c0] sm:$0xff]
    %v190 = vld [vmem:[#allocation5 + $0x2c8] sm:$0xff]
    %v191 = vld [vmem:[#allocation5 + $0x2d0] sm:$0xff]
    %v192 = vld [vmem:[#allocation5 + $0x2d8] sm:$0xff]
    %v193 = vld [vmem:[#allocation5 + $0x2e0] sm:$0xff]
    %v194 = vld [vmem:[#allocation5 + $0x2e8] sm:$0xff]
    %v195 = vld [vmem:[#allocation5 + $0x2f0] sm:$0xff]
    %v196 = vld [vmem:[#allocation5 + $0x2f8] sm:$0xff]
    %v197 = vld [vmem:[#allocation5 + $0x300] sm:$0xff]
    %v198 = vld [vmem:[#allocation5 + $0x308] sm:$0xff]
    %v199 = vld [vmem:[#allocation5 + $0x310] sm:$0xff]
    %v200 = vld [vmem:[#allocation5 + $0x318] sm:$0xff]
    %v201 = vld [vmem:[#allocation5 + $0x320] sm:$0xff]
    %v202 = vld [vmem:[#allocation5 + $0x328] sm:$0xff]
    %v203 = vld [vmem:[#allocation5 + $0x330] sm:$0xff]
    %v204 = vld [vmem:[#allocation5 + $0x338] sm:$0xff]
    %v205 = vld [vmem:[#allocation5 + $0x340] sm:$0xff]
    %v206 = vld [vmem:[#allocation5 + $0x348] sm:$0xff]
    %v207 = vld [vmem:[#allocation5 + $0x350] sm:$0xff]
    %v208 = vld [vmem:[#allocation5 + $0x358] sm:$0xff]
    %v209 = vld [vmem:[#allocation5 + $0x360] sm:$0xff]
    %v210 = vld [vmem:[#allocation5 + $0x368] sm:$0xff]
    %v211 = vld [vmem:[#allocation5 + $0x370] sm:$0xff]
    %v212 = vld [vmem:[#allocation5 + $0x378] sm:$0xff]
    %v213 = vld [vmem:[#allocation5 + $0x380] sm:$0xff]
    %v214 = vld [vmem:[#allocation5 + $0x388] sm:$0xff]
    %v215 = vld [vmem:[#allocation5 + $0x390] sm:$0xff]
    %v216 = vld [vmem:[#allocation5 + $0x398] sm:$0xff]
    %v217 = vld [vmem:[#allocation5 + $0x3a0] sm:$0xff]
    %v218 = vld [vmem:[#allocation5 + $0x3a8] sm:$0xff]
    %v219 = vld [vmem:[#allocation5 + $0x3b0] sm:$0xff]
    %v220 = vld [vmem:[#allocation5 + $0x3b8] sm:$0xff]
    %v221 = vld [vmem:[#allocation5 + $0x3c0] sm:$0xff]
    %v222 = vld [vmem:[#allocation5 + $0x3c8] sm:$0xff]
    %v223 = vld [vmem:[#allocation5 + $0x3d0] sm:$0xff]
    %v224 = vld [vmem:[#allocation5 + $0x3d8] sm:$0xff]
    %v225 = vld [vmem:[#allocation5 + $0x3e0] sm:$0xff]
    %v226 = vld [vmem:[#allocation5 + $0x3e8] sm:$0xff]
    %v227 = vld [vmem:[#allocation5 + $0x3f0] sm:$0xff]
    %v228 = vld [vmem:[#allocation5 + $0x3f8] sm:$0xff]
    %v229 = vld [vmem:[#allocation5 + $0x400] sm:$0xff]
    %v230 = vld [vmem:[#allocation5 + $0x408] sm:$0xff]
    %v231 = vld [vmem:[#allocation5 + $0x410] sm:$0xff]
    %v232 = vld [vmem:[#allocation5 + $0x418] sm:$0xff]
    %v233 = vld [vmem:[#allocation5 + $0x420] sm:$0xff]
    %v234 = vld [vmem:[#allocation5 + $0x428] sm:$0xff]
    %v235 = vld [vmem:[#allocation5 + $0x430] sm:$0xff]
    %v236 = vld [vmem:[#allocation5 + $0x438] sm:$0xff]
    %v237 = vld [vmem:[#allocation5 + $0x440] sm:$0xff]
    %v238 = vld [vmem:[#allocation5 + $0x448] sm:$0xff]
    %v239 = vld [vmem:[#allocation5 + $0x450] sm:$0xff]
    %v240 = vld [vmem:[#allocation5 + $0x458] sm:$0xff]
    %v241 = vld [vmem:[#allocation5 + $0x460] sm:$0xff]
    %v242 = vld [vmem:[#allocation5 + $0x468] sm:$0xff]
    %v243 = vld [vmem:[#allocation5 + $0x470] sm:$0xff]
    %v244 = vld [vmem:[#allocation5 + $0x478] sm:$0xff]
    %v245 = vld [vmem:[#allocation5 + $0x480] sm:$0xff]
    %v246 = vld [vmem:[#allocation5 + $0x488] sm:$0xff]
    %v247 = vld [vmem:[#allocation5 + $0x490] sm:$0xff]
    %v248 = vld [vmem:[#allocation5 + $0x498] sm:$0xff]
    %v249 = vld [vmem:[#allocation5 + $0x4a0] sm:$0xff]
    %v250 = vld [vmem:[#allocation5 + $0x4a8] sm:$0xff]
    %v251 = vld [vmem:[#allocation5 + $0x4b0] sm:$0xff]
    %v252 = vld [vmem:[#allocation5 + $0x4b8] sm:$0xff]
    %v253 = vld [vmem:[#allocation5 + $0x4c0] sm:$0xff]
    %v254 = vld [vmem:[#allocation5 + $0x4c8] sm:$0xff]
    %v255 = vld [vmem:[#allocation5 + $0x4d0] sm:$0xff]
    %v256 = vld [vmem:[#allocation5 + $0x4d8] sm:$0xff]
    %v257 = vld [vmem:[#allocation5 + $0x4e0] sm:$0xff]
    %v258 = vld [vmem:[#allocation5 + $0x4e8] sm:$0xff]
    %v259 = vld [vmem:[#allocation5 + $0x4f0] sm:$0xff]
    %v260 = vld [vmem:[#allocation5 + $0x4f8] sm:$0xff]
    %v261 = vld [vmem:[#allocation5 + $0x500] sm:$0xff]
    %v262 = vld [vmem:[#allocation5 + $0x508] sm:$0xff]
    %v263 = vld [vmem:[#allocation5 + $0x510] sm:$0xff]
    %v264 = vld [vmem:[#allocation5 + $0x518] sm:$0xff]
    %v265 = vld [vmem:[#allocation5 + $0x520] sm:$0xff]
    %v266 = vld [vmem:[#allocation5 + $0x528] sm:$0xff]
    %v267 = vld [vmem:[#allocation5 + $0x530] sm:$0xff]
    %v268 = vld [vmem:[#allocation5 + $0x538] sm:$0xff]
    %v269 = vld [vmem:[#allocation5 + $0x540] sm:$0xff]
    %v270 = vld [vmem:[#allocation5 + $0x548] sm:$0xff]
    %v271 = vld [vmem:[#allocation5 + $0x550] sm:$0xff]
    %v272 = vld [vmem:[#allocation5 + $0x558] sm:$0xff]
    %v273 = vld [vmem:[#allocation5 + $0x560] sm:$0xff]
    %v274 = vld [vmem:[#allocation5 + $0x568] sm:$0xff]
    %v275 = vld [vmem:[#allocation5 + $0x570] sm:$0xff]
    %v276 = vld [vmem:[#allocation5 + $0x578] sm:$0xff]
    %v277 = vld [vmem:[#allocation5 + $0x580] sm:$0xff]
    %v278 = vld [vmem:[#allocation5 + $0x588] sm:$0xff]
    %v279 = vld [vmem:[#allocation5 + $0x590] sm:$0xff]
    %v280 = vld [vmem:[#allocation5 + $0x598] sm:$0xff]
    %v281 = vld [vmem:[#allocation5 + $0x5a0] sm:$0xff]
    %v282 = vld [vmem:[#allocation5 + $0x5a8] sm:$0xff]
    %v283 = vld [vmem:[#allocation5 + $0x5b0] sm:$0xff]
    %v284 = vld [vmem:[#allocation5 + $0x5b8] sm:$0xff]
    %v285 = vld [vmem:[#allocation5 + $0x5c0] sm:$0xff]
    %v286 = vld [vmem:[#allocation5 + $0x5c8] sm:$0xff]
    %v287 = vld [vmem:[#allocation5 + $0x5d0] sm:$0xff]
    %v288 = vld [vmem:[#allocation5 + $0x5d8] sm:$0xff]
    %v289 = vld [vmem:[#allocation5 + $0x5e0] sm:$0xff]
    %v290 = vld [vmem:[#allocation5 + $0x5e8] sm:$0xff]
    %v291 = vld [vmem:[#allocation5 + $0x5f0] sm:$0xff]
    %v292 = vld [vmem:[#allocation5 + $0x5f8] sm:$0xff]
    %v293 = vld [vmem:[#allocation5 + $0x600] sm:$0xff]
    %v294 = vld [vmem:[#allocation5 + $0x608] sm:$0xff]
    %v295 = vld [vmem:[#allocation5 + $0x610] sm:$0xff]
    %v296 = vld [vmem:[#allocation5 + $0x618] sm:$0xff]
    %v297 = vld [vmem:[#allocation5 + $0x620] sm:$0xff]
    %v298 = vld [vmem:[#allocation5 + $0x628] sm:$0xff]
    %v299 = vld [vmem:[#allocation5 + $0x630] sm:$0xff]
    %v300 = vld [vmem:[#allocation5 + $0x638] sm:$0xff]
    %v301 = vld [vmem:[#allocation5 + $0x640] sm:$0xff]
    %v302 = vld [vmem:[#allocation5 + $0x648] sm:$0xff]
    %v303 = vld [vmem:[#allocation5 + $0x650] sm:$0xff]
    %v304 = vld [vmem:[#allocation5 + $0x658] sm:$0xff]
    %v305 = vld [vmem:[#allocation5 + $0x660] sm:$0xff]
    %v306 = vld [vmem:[#allocation5 + $0x668] sm:$0xff]
    %v307 = vld [vmem:[#allocation5 + $0x670] sm:$0xff]
    %v308 = vld [vmem:[#allocation5 + $0x678] sm:$0xff]
    %v309 = vld [vmem:[#allocation5 + $0x680] sm:$0xff]
    %v310 = vld [vmem:[#allocation5 + $0x688] sm:$0xff]
    %v311 = vld [vmem:[#allocation5 + $0x690] sm:$0xff]
    %v312 = vld [vmem:[#allocation5 + $0x698] sm:$0xff]
    %v313 = vld [vmem:[#allocation5 + $0x6a0] sm:$0xff]
    %v314 = vld [vmem:[#allocation5 + $0x6a8] sm:$0xff]
    %v315 = vld [vmem:[#allocation5 + $0x6b0] sm:$0xff]
    %v316 = vld [vmem:[#allocation5 + $0x6b8] sm:$0xff]
    %v317 = vld [vmem:[#allocation5 + $0x6c0] sm:$0xff]
    %v318 = vld [vmem:[#allocation5 + $0x6c8] sm:$0xff]
    %v319 = vld [vmem:[#allocation5 + $0x6d0] sm:$0xff]
    %v320 = vld [vmem:[#allocation5 + $0x6d8] sm:$0xff]
    %v321 = vld [vmem:[#allocation5 + $0x6e0] sm:$0xff]
    %v322 = vld [vmem:[#allocation5 + $0x6e8] sm:$0xff]
    %v323 = vld [vmem:[#allocation5 + $0x6f0] sm:$0xff]
    %v324 = vld [vmem:[#allocation5 + $0x6f8] sm:$0xff]
    %v325 = vld [vmem:[#allocation5 + $0x700] sm:$0xff]
    %v326 = vld [vmem:[#allocation5 + $0x708] sm:$0xff]
    %v327 = vld [vmem:[#allocation5 + $0x710] sm:$0xff]
    %v328 = vld [vmem:[#allocation5 + $0x718] sm:$0xff]
    %v329 = vld [vmem:[#allocation5 + $0x720] sm:$0xff]
    %v330 = vld [vmem:[#allocation5 + $0x728] sm:$0xff]
    %v331 = vld [vmem:[#allocation5 + $0x730] sm:$0xff]
    %v332 = vld [vmem:[#allocation5 + $0x738] sm:$0xff]
    %v333 = vld [vmem:[#allocation5 + $0x740] sm:$0xff]
    %v334 = vld [vmem:[#allocation5 + $0x748] sm:$0xff]
    %v335 = vld [vmem:[#allocation5 + $0x750] sm:$0xff]
    %v336 = vld [vmem:[#allocation5 + $0x758] sm:$0xff]
    %v337 = vld [vmem:[#allocation5 + $0x760] sm:$0xff]
    %v338 = vld [vmem:[#allocation5 + $0x768] sm:$0xff]
    %v339 = vld [vmem:[#allocation5 + $0x770] sm:$0xff]
    %v340 = vld [vmem:[#allocation5 + $0x778] sm:$0xff]
    %v341 = vld [vmem:[#allocation5 + $0x780] sm:$0xff]
    %v342 = vld [vmem:[#allocation5 + $0x788] sm:$0xff]
    %v343 = vld [vmem:[#allocation5 + $0x790] sm:$0xff]
    %v344 = vld [vmem:[#allocation5 + $0x798] sm:$0xff]
    %v345 = vld [vmem:[#allocation5 + $0x7a0] sm:$0xff]
    %v346 = vld [vmem:[#allocation5 + $0x7a8] sm:$0xff]
    %v347 = vld [vmem:[#allocation5 + $0x7b0] sm:$0xff]
    %v348 = vld [vmem:[#allocation5 + $0x7b8] sm:$0xff]
    %v349 = vld [vmem:[#allocation5 + $0x7c0] sm:$0xff]
    %v350 = vld [vmem:[#allocation5 + $0x7c8] sm:$0xff]
    %v351 = vld [vmem:[#allocation5 + $0x7d0] sm:$0xff]
    %v352 = vld [vmem:[#allocation5 + $0x7d8] sm:$0xff]
    %v353 = vld [vmem:[#allocation5 + $0x7e0] sm:$0xff]
    %v354 = vld [vmem:[#allocation5 + $0x7e8] sm:$0xff]
    %v355 = vld [vmem:[#allocation5 + $0x7f0] sm:$0xff]
    %v356 = vld [vmem:[#allocation5 + $0x7f8] sm:$0xff]
    %v357 = vld [vmem:[#allocation5 + $0x800] sm:$0xff]
    %v358 = vld [vmem:[#allocation5 + $0x808] sm:$0xff]
    %v359 = vld [vmem:[#allocation5 + $0x810] sm:$0xff]
    %v360 = vld [vmem:[#allocation5 + $0x818] sm:$0xff]
    %v361 = vld [vmem:[#allocation5 + $0x820] sm:$0xff]
    %v362 = vld [vmem:[#allocation5 + $0x828] sm:$0xff]
    %v363 = vld [vmem:[#allocation5 + $0x830] sm:$0xff]
    %v364 = vld [vmem:[#allocation5 + $0x838] sm:$0xff]
    %v365 = vld [vmem:[#allocation5 + $0x840] sm:$0xff]
    %v366 = vld [vmem:[#allocation5 + $0x848] sm:$0xff]
    %v367 = vld [vmem:[#allocation5 + $0x850] sm:$0xff]
    %v368 = vld [vmem:[#allocation5 + $0x858] sm:$0xff]
    %v369 = vld [vmem:[#allocation5 + $0x860] sm:$0xff]
    %v370 = vld [vmem:[#allocation5 + $0x868] sm:$0xff]
    %v371 = vld [vmem:[#allocation5 + $0x870] sm:$0xff]
    %v372 = vld [vmem:[#allocation5 + $0x878] sm:$0xff]
    %v373 = vld [vmem:[#allocation5 + $0x880] sm:$0xff]
    %v374 = vld [vmem:[#allocation5 + $0x888] sm:$0xff]
    %v375 = vld [vmem:[#allocation5 + $0x890] sm:$0xff]
    %v376 = vld [vmem:[#allocation5 + $0x898] sm:$0xff]
    %v377 = vld [vmem:[#allocation5 + $0x8a0] sm:$0xff]
    %v378 = vld [vmem:[#allocation5 + $0x8a8] sm:$0xff]
    %v379 = vld [vmem:[#allocation5 + $0x8b0] sm:$0xff]
    %v380 = vld [vmem:[#allocation5 + $0x8b8] sm:$0xff]
    %v381 = vld [vmem:[#allocation5 + $0x8c0] sm:$0xff]
    %v382 = vld [vmem:[#allocation5 + $0x8c8] sm:$0xff]
    %v383 = vld [vmem:[#allocation5 + $0x8d0] sm:$0xff]
    %v384 = vld [vmem:[#allocation5 + $0x8d8] sm:$0xff]
    %v385 = vld [vmem:[#allocation5 + $0x8e0] sm:$0xff]
    %v386 = vld [vmem:[#allocation5 + $0x8e8] sm:$0xff]
    %v387 = vld [vmem:[#allocation5 + $0x8f0] sm:$0xff]
    %v388 = vld [vmem:[#allocation5 + $0x8f8] sm:$0xff]
    %v389 = vld [vmem:[#allocation5 + $0x900] sm:$0xff]
    %v390 = vld [vmem:[#allocation5 + $0x908] sm:$0xff]
    %v391 = vld [vmem:[#allocation5 + $0x910] sm:$0xff]
    %v392 = vld [vmem:[#allocation5 + $0x918] sm:$0xff]
    %v393 = vld [vmem:[#allocation5 + $0x920] sm:$0xff]
    %v394 = vld [vmem:[#allocation5 + $0x928] sm:$0xff]
    %v395 = vld [vmem:[#allocation5 + $0x930] sm:$0xff]
    %v396 = vld [vmem:[#allocation5 + $0x938] sm:$0xff]
    %v397 = vld [vmem:[#allocation5 + $0x940] sm:$0xff]
    %v398 = vld [vmem:[#allocation5 + $0x948] sm:$0xff]
    %v399 = vld [vmem:[#allocation5 + $0x950] sm:$0xff]
    %v400 = vld [vmem:[#allocation5 + $0x958] sm:$0xff]
    %v401 = vld [vmem:[#allocation5 + $0x960] sm:$0xff]
    %v402 = vld [vmem:[#allocation5 + $0x968] sm:$0xff]
    %v403 = vld [vmem:[#allocation5 + $0x970] sm:$0xff]
    %v404 = vld [vmem:[#allocation5 + $0x978] sm:$0xff]
    %v405 = vld [vmem:[#allocation5 + $0x980] sm:$0xff]
    %v406 = vld [vmem:[#allocation5 + $0x988] sm:$0xff]
    %v407 = vld [vmem:[#allocation5 + $0x990] sm:$0xff]
    %v408 = vld [vmem:[#allocation5 + $0x998] sm:$0xff]
    %v409 = vld [vmem:[#allocation5 + $0x9a0] sm:$0xff]
    %v410 = vld [vmem:[#allocation5 + $0x9a8] sm:$0xff]
    %v411 = vld [vmem:[#allocation5 + $0x9b0] sm:$0xff]
    %v412 = vld [vmem:[#allocation5 + $0x9b8] sm:$0xff]
    %v413 = vld [vmem:[#allocation5 + $0x9c0] sm:$0xff]
    %v414 = vld [vmem:[#allocation5 + $0x9c8] sm:$0xff]
    %v415 = vld [vmem:[#allocation5 + $0x9d0] sm:$0xff]
    %v416 = vld [vmem:[#allocation5 + $0x9d8] sm:$0xff]
    %v417 = vld [vmem:[#allocation5 + $0x9e0] sm:$0xff]
    %v418 = vld [vmem:[#allocation5 + $0x9e8] sm:$0xff]
    %v419 = vld [vmem:[#allocation5 + $0x9f0] sm:$0xff]
    %v420 = vld [vmem:[#allocation5 + $0x9f8] sm:$0xff]
    %v421 = vld [vmem:[#allocation5 + $0xa00] sm:$0xff]
    %v422 = vld [vmem:[#allocation5 + $0xa08] sm:$0xff]
    %v423 = vld [vmem:[#allocation5 + $0xa10] sm:$0xff]
    %v424 = vld [vmem:[#allocation5 + $0xa18] sm:$0xff]
    %v425 = vld [vmem:[#allocation5 + $0xa20] sm:$0xff]
    %v426 = vld [vmem:[#allocation5 + $0xa28] sm:$0xff]
    %v427 = vld [vmem:[#allocation5 + $0xa30] sm:$0xff]
    %v428 = vld [vmem:[#allocation5 + $0xa38] sm:$0xff]
    %v429 = vld [vmem:[#allocation5 + $0xa40] sm:$0xff]
    %v430 = vld [vmem:[#allocation5 + $0xa48] sm:$0xff]
    %v431 = vld [vmem:[#allocation5 + $0xa50] sm:$0xff]
    %v432 = vld [vmem:[#allocation5 + $0xa58] sm:$0xff]
    %v433 = vld [vmem:[#allocation5 + $0xa60] sm:$0xff]
    %v434 = vld [vmem:[#allocation5 + $0xa68] sm:$0xff]
    %v435 = vld [vmem:[#allocation5 + $0xa70] sm:$0xff]
    %v436 = vld [vmem:[#allocation5 + $0xa78] sm:$0xff]
    %v437 = vld [vmem:[#allocation5 + $0xa80] sm:$0xff]
    %v438 = vld [vmem:[#allocation5 + $0xa88] sm:$0xff]
    %v439 = vld [vmem:[#allocation5 + $0xa90] sm:$0xff]
    %v440 = vld [vmem:[#allocation5 + $0xa98] sm:$0xff]
    %v441 = vld [vmem:[#allocation5 + $0xaa0] sm:$0xff]
    %v442 = vld [vmem:[#allocation5 + $0xaa8] sm:$0xff]
    %v443 = vld [vmem:[#allocation5 + $0xab0] sm:$0xff]
    %v444 = vld [vmem:[#allocation5 + $0xab8] sm:$0xff]
    %v445 = vld [vmem:[#allocation5 + $0xac0] sm:$0xff]
    %v446 = vld [vmem:[#allocation5 + $0xac8] sm:$0xff]
    %v447 = vld [vmem:[#allocation5 + $0xad0] sm:$0xff]
    %v448 = vld [vmem:[#allocation5 + $0xad8] sm:$0xff]
    %v449 = vld [vmem:[#allocation5 + $0xae0] sm:$0xff]
    %v450 = vld [vmem:[#allocation5 + $0xae8] sm:$0xff]
    %v451 = vld [vmem:[#allocation5 + $0xaf0] sm:$0xff]
    %v452 = vld [vmem:[#allocation5 + $0xaf8] sm:$0xff]
    %v453 = vld [vmem:[#allocation5 + $0xb00] sm:$0xff]
    %v454 = vld [vmem:[#allocation5 + $0xb08] sm:$0xff]
    %v455 = vld [vmem:[#allocation5 + $0xb10] sm:$0xff]
    %v456 = vld [vmem:[#allocation5 + $0xb18] sm:$0xff]
    %v457 = vld [vmem:[#allocation5 + $0xb20] sm:$0xff]
    %v458 = vld [vmem:[#allocation5 + $0xb28] sm:$0xff]
    %v459 = vld [vmem:[#allocation5 + $0xb30] sm:$0xff]
    %v460 = vld [vmem:[#allocation5 + $0xb38] sm:$0xff]
    %v461 = vld [vmem:[#allocation5 + $0xb40] sm:$0xff]
    %v462 = vld [vmem:[#allocation5 + $0xb48] sm:$0xff]
    %v463 = vld [vmem:[#allocation5 + $0xb50] sm:$0xff]
    %v464 = vld [vmem:[#allocation5 + $0xb58] sm:$0xff]
    %v465 = vld [vmem:[#allocation5 + $0xb60] sm:$0xff]
    %v466 = vld [vmem:[#allocation5 + $0xb68] sm:$0xff]
    %v467 = vld [vmem:[#allocation5 + $0xb70] sm:$0xff]
    %v468 = vld [vmem:[#allocation5 + $0xb78] sm:$0xff]
    %v469 = vld [vmem:[#allocation5 + $0xb80] sm:$0xff]
    %v470 = vld [vmem:[#allocation5 + $0xb88] sm:$0xff]
    %v471 = vld [vmem:[#allocation5 + $0xb90] sm:$0xff]
    %v472 = vld [vmem:[#allocation5 + $0xb98] sm:$0xff]
    %v473 = vld [vmem:[#allocation5 + $0xba0] sm:$0xff]
    %v474 = vld [vmem:[#allocation5 + $0xba8] sm:$0xff]
    %v475 = vld [vmem:[#allocation5 + $0xbb0] sm:$0xff]
    %v476 = vld [vmem:[#allocation5 + $0xbb8] sm:$0xff]
    %v477 = vld [vmem:[#allocation5 + $0xbc0] sm:$0xff]
    %v478 = vld [vmem:[#allocation5 + $0xbc8] sm:$0xff]
    %v479 = vld [vmem:[#allocation5 + $0xbd0] sm:$0xff]
    %v480 = vld [vmem:[#allocation5 + $0xbd8] sm:$0xff]
    %v481 = vld [vmem:[#allocation5 + $0xbe0] sm:$0xff]
    %v482 = vld [vmem:[#allocation5 + $0xbe8] sm:$0xff]
    %v483 = vld [vmem:[#allocation5 + $0xbf0] sm:$0xff]
    %v484 = vld [vmem:[#allocation5 + $0xbf8] sm:$0xff]
    %v485 = vld [vmem:[#allocation5 + $0xc00] sm:$0xff]
    %v486 = vld [vmem:[#allocation5 + $0xc08] sm:$0xff]
    %v487 = vld [vmem:[#allocation5 + $0xc10] sm:$0xff]
    %v488 = vld [vmem:[#allocation5 + $0xc18] sm:$0xff]
    %v489 = vld [vmem:[#allocation5 + $0xc20] sm:$0xff]
    %v490 = vld [vmem:[#allocation5 + $0xc28] sm:$0xff]
    %v491 = vld [vmem:[#allocation5 + $0xc30] sm:$0xff]
    %v492 = vld [vmem:[#allocation5 + $0xc38] sm:$0xff]
    %v493 = vld [vmem:[#allocation5 + $0xc40] sm:$0xff]
    %v494 = vld [vmem:[#allocation5 + $0xc48] sm:$0xff]
    %v495 = vld [vmem:[#allocation5 + $0xc50] sm:$0xff]
    %v496 = vld [vmem:[#allocation5 + $0xc58] sm:$0xff]
    %v497 = vld [vmem:[#allocation5 + $0xc60] sm:$0xff]
    %v498 = vld [vmem:[#allocation5 + $0xc68] sm:$0xff]
    %v499 = vld [vmem:[#allocation5 + $0xc70] sm:$0xff]
    %v500 = vld [vmem:[#allocation5 + $0xc78] sm:$0xff]
    %v501 = vld [vmem:[#allocation5 + $0xc80] sm:$0xff]
    %v502 = vld [vmem:[#allocation5 + $0xc88] sm:$0xff]
    %v503 = vld [vmem:[#allocation5 + $0xc90] sm:$0xff]
    %v504 = vld [vmem:[#allocation5 + $0xc98] sm:$0xff]
    %v505 = vld [vmem:[#allocation5 + $0xca0] sm:$0xff]
    %v506 = vld [vmem:[#allocation5 + $0xca8] sm:$0xff]
    %v507 = vld [vmem:[#allocation5 + $0xcb0] sm:$0xff]
    %v508 = vld [vmem:[#allocation5 + $0xcb8] sm:$0xff]
    %v509 = vld [vmem:[#allocation5 + $0xcc0] sm:$0xff]
    %v510 = vld [vmem:[#allocation5 + $0xcc8] sm:$0xff]
    %v511 = vld [vmem:[#allocation5 + $0xcd0] sm:$0xff]
    %v512 = vld [vmem:[#allocation5 + $0xcd8] sm:$0xff]
    %v513 = vld [vmem:[#allocation5 + $0xce0] sm:$0xff]
    %v514 = vld [vmem:[#allocation5 + $0xce8] sm:$0xff]
    %v515 = vld [vmem:[#allocation5 + $0xcf0] sm:$0xff]
    %v516 = vld [vmem:[#allocation5 + $0xcf8] sm:$0xff]
    %v517 = vld [vmem:[#allocation5 + $0xd00] sm:$0xff]
    %v518 = vld [vmem:[#allocation5 + $0xd08] sm:$0xff]
    %v519 = vld [vmem:[#allocation5 + $0xd10] sm:$0xff]
    %v520 = vld [vmem:[#allocation5 + $0xd18] sm:$0xff]
    %v521 = vld [vmem:[#allocation5 + $0xd20] sm:$0xff]
    %v522 = vld [vmem:[#allocation5 + $0xd28] sm:$0xff]
    %v523 = vld [vmem:[#allocation5 + $0xd30] sm:$0xff]
    %v524 = vld [vmem:[#allocation5 + $0xd38] sm:$0xff]
    %v525 = vld [vmem:[#allocation5 + $0xd40] sm:$0xff]
    %v526 = vld [vmem:[#allocation5 + $0xd48] sm:$0xff]
    %v527 = vld [vmem:[#allocation5 + $0xd50] sm:$0xff]
    %v528 = vld [vmem:[#allocation5 + $0xd58] sm:$0xff]
    %v529 = vld [vmem:[#allocation5 + $0xd60] sm:$0xff]
    %v530 = vld [vmem:[#allocation5 + $0xd68] sm:$0xff]
    %v531 = vld [vmem:[#allocation5 + $0xd70] sm:$0xff]
    %v532 = vld [vmem:[#allocation5 + $0xd78] sm:$0xff]
    %v533 = vld [vmem:[#allocation5 + $0xd80] sm:$0xff]
    %v534 = vld [vmem:[#allocation5 + $0xd88] sm:$0xff]
    %v535 = vld [vmem:[#allocation5 + $0xd90] sm:$0xff]
    %v536 = vld [vmem:[#allocation5 + $0xd98] sm:$0xff]
    %v537 = vld [vmem:[#allocation5 + $0xda0] sm:$0xff]
    %v538 = vld [vmem:[#allocation5 + $0xda8] sm:$0xff]
    %v539 = vld [vmem:[#allocation5 + $0xdb0] sm:$0xff]
    %v540 = vld [vmem:[#allocation5 + $0xdb8] sm:$0xff]
    %v541 = vld [vmem:[#allocation5 + $0xdc0] sm:$0xff]
    %v542 = vld [vmem:[#allocation5 + $0xdc8] sm:$0xff]
    %v543 = vld [vmem:[#allocation5 + $0xdd0] sm:$0xff]
    %v544 = vld [vmem:[#allocation5 + $0xdd8] sm:$0xff]
    %v545 = vld [vmem:[#allocation5 + $0xde0] sm:$0xff]
    %v546 = vld [vmem:[#allocation5 + $0xde8] sm:$0xff]
    %v547 = vld [vmem:[#allocation5 + $0xdf0] sm:$0xff]
    %v548 = vld [vmem:[#allocation5 + $0xdf8] sm:$0xff]
    %v549 = vld [vmem:[#allocation5 + $0xe00] sm:$0xff]
    %v550 = vld [vmem:[#allocation5 + $0xe08] sm:$0xff]
    %v551 = vld [vmem:[#allocation5 + $0xe10] sm:$0xff]
    %v552 = vld [vmem:[#allocation5 + $0xe18] sm:$0xff]
    %v553 = vld [vmem:[#allocation5 + $0xe20] sm:$0xff]
    %v554 = vld [vmem:[#allocation5 + $0xe28] sm:$0xff]
    %v555 = vld [vmem:[#allocation5 + $0xe30] sm:$0xff]
    %v556 = vld [vmem:[#allocation5 + $0xe38] sm:$0xff]
    %v557 = vld [vmem:[#allocation5 + $0xe40] sm:$0xff]
    %v558 = vld [vmem:[#allocation5 + $0xe48] sm:$0xff]
    %v559 = vld [vmem:[#allocation5 + $0xe50] sm:$0xff]
    %v560 = vld [vmem:[#allocation5 + $0xe58] sm:$0xff]
    %v561 = vld [vmem:[#allocation5 + $0xe60] sm:$0xff]
    %v562 = vld [vmem:[#allocation5 + $0xe68] sm:$0xff]
    %v563 = vld [vmem:[#allocation5 + $0xe70] sm:$0xff]
    %v564 = vld [vmem:[#allocation5 + $0xe78] sm:$0xff]
    %v565 = vld [vmem:[#allocation5 + $0xe80] sm:$0xff]
    %v566 = vld [vmem:[#allocation5 + $0xe88] sm:$0xff]
    %v567 = vld [vmem:[#allocation5 + $0xe90] sm:$0xff]
    %v568 = vld [vmem:[#allocation5 + $0xe98] sm:$0xff]
    %v569 = vld [vmem:[#allocation5 + $0xea0] sm:$0xff]
    %v570 = vld [vmem:[#allocation5 + $0xea8] sm:$0xff]
    %v571 = vld [vmem:[#allocation5 + $0xeb0] sm:$0xff]
    %v572 = vld [vmem:[#allocation5 + $0xeb8] sm:$0xff]
    %v573 = vld [vmem:[#allocation5 + $0xec0] sm:$0xff]
    %v574 = vld [vmem:[#allocation5 + $0xec8] sm:$0xff]
    %v575 = vld [vmem:[#allocation5 + $0xed0] sm:$0xff]
    %v576 = vld [vmem:[#allocation5 + $0xed8] sm:$0xff]
    %v577 = vld [vmem:[#allocation5 + $0xee0] sm:$0xff]
    %v578 = vld [vmem:[#allocation5 + $0xee8] sm:$0xff]
    %v579 = vld [vmem:[#allocation5 + $0xef0] sm:$0xff]
    %v580 = vld [vmem:[#allocation5 + $0xef8] sm:$0xff]
    %v581 = vld [vmem:[#allocation5 + $0xf00] sm:$0xff]
    %v582 = vld [vmem:[#allocation5 + $0xf08] sm:$0xff]
    %v583 = vld [vmem:[#allocation5 + $0xf10] sm:$0xff]
    %v584 = vld [vmem:[#allocation5 + $0xf18] sm:$0xff]
    %v585 = vld [vmem:[#allocation5 + $0xf20] sm:$0xff]
    %v586 = vld [vmem:[#allocation5 + $0xf28] sm:$0xff]
    %v587 = vld [vmem:[#allocation5 + $0xf30] sm:$0xff]
    %v588 = vld [vmem:[#allocation5 + $0xf38] sm:$0xff]
    %v589 = vld [vmem:[#allocation5 + $0xf40] sm:$0xff]
    %v590 = vld [vmem:[#allocation5 + $0xf48] sm:$0xff]
    %v591 = vld [vmem:[#allocation5 + $0xf50] sm:$0xff]
    %v592 = vld [vmem:[#allocation5 + $0xf58] sm:$0xff]
    %v593 = vld [vmem:[#allocation5 + $0xf60] sm:$0xff]
    %v594 = vld [vmem:[#allocation5 + $0xf68] sm:$0xff]
    %v595 = vld [vmem:[#allocation5 + $0xf70] sm:$0xff]
    %v596 = vld [vmem:[#allocation5 + $0xf78] sm:$0xff]
    %v597 = vld [vmem:[#allocation5 + $0xf80] sm:$0xff]
    %v598 = vld [vmem:[#allocation5 + $0xf88] sm:$0xff]
    %v599 = vld [vmem:[#allocation5 + $0xf90] sm:$0xff]
    %v600 = vld [vmem:[#allocation5 + $0xf98] sm:$0xff]
    %v601 = vld [vmem:[#allocation5 + $0xfa0] sm:$0xff]
    %v602 = vld [vmem:[#allocation5 + $0xfa8] sm:$0xff]
    %v603 = vld [vmem:[#allocation5 + $0xfb0] sm:$0xff]
    %v604 = vld [vmem:[#allocation5 + $0xfb8] sm:$0xff]
    %v605 = vld [vmem:[#allocation5 + $0xfc0] sm:$0xff]
    %v606 = vld [vmem:[#allocation5 + $0xfc8] sm:$0xff]
    %v607 = vld [vmem:[#allocation5 + $0xfd0] sm:$0xff]
    %v608 = vld [vmem:[#allocation5 + $0xfd8] sm:$0xff]
    %v609 = vld [vmem:[#allocation5 + $0xfe0] sm:$0xff]
    %v610 = vld [vmem:[#allocation5 + $0xfe8] sm:$0xff]
    %v611 = vld [vmem:[#allocation5 + $0xff0] sm:$0xff]
    %v612 = vld [vmem:[#allocation5 + $0xff8] sm:$0xff]
    %v613 = vld [vmem:[#allocation5 + $0x1000] sm:$0xff]
    %v614 = vld [vmem:[#allocation5 + $0x1008] sm:$0xff]
    %v615 = vld [vmem:[#allocation5 + $0x1010] sm:$0xff]
    %v616 = vld [vmem:[#allocation5 + $0x1018] sm:$0xff]
    %v617 = vld [vmem:[#allocation5 + $0x1020] sm:$0xff]
    %v618 = vld [vmem:[#allocation5 + $0x1028] sm:$0xff]
    %v619 = vld [vmem:[#allocation5 + $0x1030] sm:$0xff]
    %v620 = vld [vmem:[#allocation5 + $0x1038] sm:$0xff]
    %v621 = vld [vmem:[#allocation5 + $0x1040] sm:$0xff]
    %v622 = vld [vmem:[#allocation5 + $0x1048] sm:$0xff]
    %v623 = vld [vmem:[#allocation5 + $0x1050] sm:$0xff]
    %v624 = vld [vmem:[#allocation5 + $0x1058] sm:$0xff]
    %v625 = vld [vmem:[#allocation5 + $0x1060] sm:$0xff]
    %v626 = vld [vmem:[#allocation5 + $0x1068] sm:$0xff]
    %v627 = vld [vmem:[#allocation5 + $0x1070] sm:$0xff]
    %v628 = vld [vmem:[#allocation5 + $0x1078] sm:$0xff]
    %v629 = vld [vmem:[#allocation5 + $0x1080] sm:$0xff]
    %v630 = vld [vmem:[#allocation5 + $0x1088] sm:$0xff]
    %v631 = vld [vmem:[#allocation5 + $0x1090] sm:$0xff]
    %v632 = vld [vmem:[#allocation5 + $0x1098] sm:$0xff]
    %v633 = vld [vmem:[#allocation5 + $0x10a0] sm:$0xff]
    %v634 = vld [vmem:[#allocation5 + $0x10a8] sm:$0xff]
    %v635 = vld [vmem:[#allocation5 + $0x10b0] sm:$0xff]
    %v636 = vld [vmem:[#allocation5 + $0x10b8] sm:$0xff]
    %v637 = vld [vmem:[#allocation5 + $0x10c0] sm:$0xff]
    %v638 = vld [vmem:[#allocation5 + $0x10c8] sm:$0xff]
    %v639 = vld [vmem:[#allocation5 + $0x10d0] sm:$0xff]
    %v640 = vld [vmem:[#allocation5 + $0x10d8] sm:$0xff]
    %v641 = vld [vmem:[#allocation5 + $0x10e0] sm:$0xff]
    %v642 = vld [vmem:[#allocation5 + $0x10e8] sm:$0xff]
    %v643 = vld [vmem:[#allocation5 + $0x10f0] sm:$0xff]
    %v644 = vld [vmem:[#allocation5 + $0x10f8] sm:$0xff]
    %v645 = vld [vmem:[#allocation5 + $0x1100] sm:$0xff]
    %v646 = vld [vmem:[#allocation5 + $0x1108] sm:$0xff]
    %v647 = vld [vmem:[#allocation5 + $0x1110] sm:$0xff]
    %v648 = vld [vmem:[#allocation5 + $0x1118] sm:$0xff]
    %v649 = vld [vmem:[#allocation5 + $0x1120] sm:$0xff]
    %v650 = vld [vmem:[#allocation5 + $0x1128] sm:$0xff]
    %v651 = vld [vmem:[#allocation5 + $0x1130] sm:$0xff]
    %v652 = vld [vmem:[#allocation5 + $0x1138] sm:$0xff]
    %v653 = vld [vmem:[#allocation5 + $0x1140] sm:$0xff]
    %v654 = vld [vmem:[#allocation5 + $0x1148] sm:$0xff]
    %v655 = vld [vmem:[#allocation5 + $0x1150] sm:$0xff]
    %v656 = vld [vmem:[#allocation5 + $0x1158] sm:$0xff]
    %v657 = vld [vmem:[#allocation5 + $0x1160] sm:$0xff]
    %v658 = vld [vmem:[#allocation5 + $0x1168] sm:$0xff]
    %v659 = vld [vmem:[#allocation5 + $0x1170] sm:$0xff]
    %v660 = vld [vmem:[#allocation5 + $0x1178] sm:$0xff]
    %v661 = vld [vmem:[#allocation5 + $0x1180] sm:$0xff]
    %v662 = vld [vmem:[#allocation5 + $0x1188] sm:$0xff]
    %v663 = vld [vmem:[#allocation5 + $0x1190] sm:$0xff]
    %v664 = vld [vmem:[#allocation5 + $0x1198] sm:$0xff]
    %v665 = vld [vmem:[#allocation5 + $0x11a0] sm:$0xff]
    %v666 = vld [vmem:[#allocation5 + $0x11a8] sm:$0xff]
    %v667 = vld [vmem:[#allocation5 + $0x11b0] sm:$0xff]
    %v668 = vld [vmem:[#allocation5 + $0x11b8] sm:$0xff]
    %v669 = vld [vmem:[#allocation5 + $0x11c0] sm:$0xff]
    %v670 = vld [vmem:[#allocation5 + $0x11c8] sm:$0xff]
    %v671 = vld [vmem:[#allocation5 + $0x11d0] sm:$0xff]
    %v672 = vld [vmem:[#allocation5 + $0x11d8] sm:$0xff]
    %v673 = vld [vmem:[#allocation5 + $0x11e0] sm:$0xff]
    %v674 = vld [vmem:[#allocation5 + $0x11e8] sm:$0xff]
    %v675 = vld [vmem:[#allocation5 + $0x11f0] sm:$0xff]
    %v676 = vld [vmem:[#allocation5 + $0x11f8] sm:$0xff]
    %v677 = vld [vmem:[#allocation5 + $0x1200] sm:$0xff]
    %v678 = vld [vmem:[#allocation5 + $0x1208] sm:$0xff]
    %v679 = vld [vmem:[#allocation5 + $0x1210] sm:$0xff]
    %v680 = vld [vmem:[#allocation5 + $0x1218] sm:$0xff]
    %v681 = vld [vmem:[#allocation5 + $0x1220] sm:$0xff]
    %v682 = vld [vmem:[#allocation5 + $0x1228] sm:$0xff]
    %v683 = vld [vmem:[#allocation5 + $0x1230] sm:$0xff]
    %v684 = vld [vmem:[#allocation5 + $0x1238] sm:$0xff]
    %v685 = vld [vmem:[#allocation5 + $0x1240] sm:$0xff]
    %v686 = vld [vmem:[#allocation5 + $0x1248] sm:$0xff]
    %v687 = vld [vmem:[#allocation5 + $0x1250] sm:$0xff]
    %v688 = vld [vmem:[#allocation5 + $0x1258] sm:$0xff]
    %v689 = vld [vmem:[#allocation5 + $0x1260] sm:$0xff]
    %v690 = vld [vmem:[#allocation5 + $0x1268] sm:$0xff]
    %v691 = vld [vmem:[#allocation5 + $0x1270] sm:$0xff]
    %v692 = vld [vmem:[#allocation5 + $0x1278] sm:$0xff]
    %v693 = vld [vmem:[#allocation5 + $0x1280] sm:$0xff]
    %v694 = vld [vmem:[#allocation5 + $0x1288] sm:$0xff]
    %v695 = vld [vmem:[#allocation5 + $0x1290] sm:$0xff]
    %v696 = vld [vmem:[#allocation5 + $0x1298] sm:$0xff]
    %v697 = vld [vmem:[#allocation5 + $0x12a0] sm:$0xff]
    %v698 = vld [vmem:[#allocation5 + $0x12a8] sm:$0xff]
    %v699 = vld [vmem:[#allocation5 + $0x12b0] sm:$0xff]
    %v700 = vld [vmem:[#allocation5 + $0x12b8] sm:$0xff]
    %v701 = vld [vmem:[#allocation5 + $0x12c0] sm:$0xff]
    %v702 = vld [vmem:[#allocation5 + $0x12c8] sm:$0xff]
    %v703 = vld [vmem:[#allocation5 + $0x12d0] sm:$0xff]
    %v704 = vld [vmem:[#allocation5 + $0x12d8] sm:$0xff]
    %v705 = vld [vmem:[#allocation5 + $0x12e0] sm:$0xff]
    %v706 = vld [vmem:[#allocation5 + $0x12e8] sm:$0xff]
    %v707 = vld [vmem:[#allocation5 + $0x12f0] sm:$0xff]
    %v708 = vld [vmem:[#allocation5 + $0x12f8] sm:$0xff]
    %v709 = vld [vmem:[#allocation5 + $0x1300] sm:$0xff]
    %v710 = vld [vmem:[#allocation5 + $0x1308] sm:$0xff]
    %v711 = vld [vmem:[#allocation5 + $0x1310] sm:$0xff]
    %v712 = vld [vmem:[#allocation5 + $0x1318] sm:$0xff]
    %v713 = vld [vmem:[#allocation5 + $0x1320] sm:$0xff]
    %v714 = vld [vmem:[#allocation5 + $0x1328] sm:$0xff]
    %v715 = vld [vmem:[#allocation5 + $0x1330] sm:$0xff]
    %v716 = vld [vmem:[#allocation5 + $0x1338] sm:$0xff]
    %v717 = vld [vmem:[#allocation5 + $0x1340] sm:$0xff]
    %v718 = vld [vmem:[#allocation5 + $0x1348] sm:$0xff]
    %v719 = vld [vmem:[#allocation5 + $0x1350] sm:$0xff]
    %v720 = vld [vmem:[#allocation5 + $0x1358] sm:$0xff]
    %v721 = vld [vmem:[#allocation5 + $0x1360] sm:$0xff]
    %v722 = vld [vmem:[#allocation5 + $0x1368] sm:$0xff]
    %v723 = vld [vmem:[#allocation5 + $0x1370] sm:$0xff]
    %v724 = vld [vmem:[#allocation5 + $0x1378] sm:$0xff]
    %v725 = vld [vmem:[#allocation5 + $0x1380] sm:$0xff]
    %v726 = vld [vmem:[#allocation5 + $0x1388] sm:$0xff]
    %v727 = vld [vmem:[#allocation5 + $0x1390] sm:$0xff]
    %v728 = vld [vmem:[#allocation5 + $0x1398] sm:$0xff]
    %v729 = vld [vmem:[#allocation5 + $0x13a0] sm:$0xff]
    %v730 = vld [vmem:[#allocation5 + $0x13a8] sm:$0xff]
    %v731 = vld [vmem:[#allocation5 + $0x13b0] sm:$0xff]
    %v732 = vld [vmem:[#allocation5 + $0x13b8] sm:$0xff]
    %v733 = vld [vmem:[#allocation5 + $0x13c0] sm:$0xff]
    %v734 = vld [vmem:[#allocation5 + $0x13c8] sm:$0xff]
    %v735 = vld [vmem:[#allocation5 + $0x13d0] sm:$0xff]
    %v736 = vld [vmem:[#allocation5 + $0x13d8] sm:$0xff]
    %v737 = vld [vmem:[#allocation5 + $0x13e0] sm:$0xff]
    %v738 = vld [vmem:[#allocation5 + $0x13e8] sm:$0xff]
    %v739 = vld [vmem:[#allocation5 + $0x13f0] sm:$0xff]
    %v740 = vld [vmem:[#allocation5 + $0x13f8] sm:$0xff]
    %v741 = vld [vmem:[#allocation5 + $0x1400] sm:$0xff]
    %v742 = vld [vmem:[#allocation5 + $0x1408] sm:$0xff]
    %v743 = vld [vmem:[#allocation5 + $0x1410] sm:$0xff]
    %v744 = vld [vmem:[#allocation5 + $0x1418] sm:$0xff]
    %v745 = vld [vmem:[#allocation5 + $0x1420] sm:$0xff]
    %v746 = vld [vmem:[#allocation5 + $0x1428] sm:$0xff]
    %v747 = vld [vmem:[#allocation5 + $0x1430] sm:$0xff]
    %v748 = vld [vmem:[#allocation5 + $0x1438] sm:$0xff]
    %v749 = vld [vmem:[#allocation5 + $0x1440] sm:$0xff]
    %v750 = vld [vmem:[#allocation5 + $0x1448] sm:$0xff]
    %v751 = vld [vmem:[#allocation5 + $0x1450] sm:$0xff]
    %v752 = vld [vmem:[#allocation5 + $0x1458] sm:$0xff]
    %v753 = vld [vmem:[#allocation5 + $0x1460] sm:$0xff]
    %v754 = vld [vmem:[#allocation5 + $0x1468] sm:$0xff]
    %v755 = vld [vmem:[#allocation5 + $0x1470] sm:$0xff]
    %v756 = vld [vmem:[#allocation5 + $0x1478] sm:$0xff]
    %v757 = vld [vmem:[#allocation5 + $0x1480] sm:$0xff]
    %v758 = vld [vmem:[#allocation5 + $0x1488] sm:$0xff]
    %v759 = vld [vmem:[#allocation5 + $0x1490] sm:$0xff]
    %v760 = vld [vmem:[#allocation5 + $0x1498] sm:$0xff]
    %v761 = vld [vmem:[#allocation5 + $0x14a0] sm:$0xff]
    %v762 = vld [vmem:[#allocation5 + $0x14a8] sm:$0xff]
    %v763 = vld [vmem:[#allocation5 + $0x14b0] sm:$0xff]
    %v764 = vld [vmem:[#allocation5 + $0x14b8] sm:$0xff]
    %v765 = vld [vmem:[#allocation5 + $0x14c0] sm:$0xff]
    %v766 = vld [vmem:[#allocation5 + $0x14c8] sm:$0xff]
    %v767 = vld [vmem:[#allocation5 + $0x14d0] sm:$0xff]
    %v768 = vld [vmem:[#allocation5 + $0x14d8] sm:$0xff]
    %v769 = vld [vmem:[#allocation5 + $0x14e0] sm:$0xff]
    %v770 = vld [vmem:[#allocation5 + $0x14e8] sm:$0xff]
    %v771 = vld [vmem:[#allocation5 + $0x14f0] sm:$0xff]
    %v772 = vld [vmem:[#allocation5 + $0x14f8] sm:$0xff]
    %v773 = vld [vmem:[#allocation5 + $0x1500] sm:$0xff]
    %v774 = vld [vmem:[#allocation5 + $0x1508] sm:$0xff]
    %v775 = vld [vmem:[#allocation5 + $0x1510] sm:$0xff]
    %v776 = vld [vmem:[#allocation5 + $0x1518] sm:$0xff]
    %v777 = vld [vmem:[#allocation5 + $0x1520] sm:$0xff]
    %v778 = vld [vmem:[#allocation5 + $0x1528] sm:$0xff]
    %v779 = vld [vmem:[#allocation5 + $0x1530] sm:$0xff]
    %v780 = vld [vmem:[#allocation5 + $0x1538] sm:$0xff]
    %v781 = vld [vmem:[#allocation5 + $0x1540] sm:$0xff]
    %v782 = vld [vmem:[#allocation5 + $0x1548] sm:$0xff]
    %v783 = vld [vmem:[#allocation5 + $0x1550] sm:$0xff]
    %v784 = vld [vmem:[#allocation5 + $0x1558] sm:$0xff]
    %v785 = vld [vmem:[#allocation5 + $0x1560] sm:$0xff]
    %v786 = vld [vmem:[#allocation5 + $0x1568] sm:$0xff]
    %v787 = vld [vmem:[#allocation5 + $0x1570] sm:$0xff]
    %v788 = vld [vmem:[#allocation5 + $0x1578] sm:$0xff]
    %v789 = vld [vmem:[#allocation5 + $0x1580] sm:$0xff]
    %v790 = vld [vmem:[#allocation5 + $0x1588] sm:$0xff]
    %v791 = vld [vmem:[#allocation5 + $0x1590] sm:$0xff]
    %v792 = vld [vmem:[#allocation5 + $0x1598] sm:$0xff]
    %v793 = vld [vmem:[#allocation5 + $0x15a0] sm:$0xff]
    %v794 = vld [vmem:[#allocation5 + $0x15a8] sm:$0xff]
    %v795 = vld [vmem:[#allocation5 + $0x15b0] sm:$0xff]
    %v796 = vld [vmem:[#allocation5 + $0x15b8] sm:$0xff]
    %v797 = vld [vmem:[#allocation5 + $0x15c0] sm:$0xff]
    %v798 = vld [vmem:[#allocation5 + $0x15c8] sm:$0xff]
    %v799 = vld [vmem:[#allocation5 + $0x15d0] sm:$0xff]
    %v800 = vld [vmem:[#allocation5 + $0x15d8] sm:$0xff]
    %v801 = vld [vmem:[#allocation5 + $0x15e0] sm:$0xff]
    %v802 = vld [vmem:[#allocation5 + $0x15e8] sm:$0xff]
    %v803 = vld [vmem:[#allocation5 + $0x15f0] sm:$0xff]
    %v804 = vld [vmem:[#allocation5 + $0x15f8] sm:$0xff]
    %v805 = vld [vmem:[#allocation5 + $0x1600] sm:$0xff]
    %v806 = vld [vmem:[#allocation5 + $0x1608] sm:$0xff]
    %v807 = vld [vmem:[#allocation5 + $0x1610] sm:$0xff]
    %v808 = vld [vmem:[#allocation5 + $0x1618] sm:$0xff]
    %v809 = vld [vmem:[#allocation5 + $0x1620] sm:$0xff]
    %v810 = vld [vmem:[#allocation5 + $0x1628] sm:$0xff]
    %v811 = vld [vmem:[#allocation5 + $0x1630] sm:$0xff]
    %v812 = vld [vmem:[#allocation5 + $0x1638] sm:$0xff]
    %v813 = vld [vmem:[#allocation5 + $0x1640] sm:$0xff]
    %v814 = vld [vmem:[#allocation5 + $0x1648] sm:$0xff]
    %v815 = vld [vmem:[#allocation5 + $0x1650] sm:$0xff]
    %v816 = vld [vmem:[#allocation5 + $0x1658] sm:$0xff]
    %v817 = vld [vmem:[#allocation5 + $0x1660] sm:$0xff]
    %v818 = vld [vmem:[#allocation5 + $0x1668] sm:$0xff]
    %v819 = vld [vmem:[#allocation5 + $0x1670] sm:$0xff]
    %v820 = vld [vmem:[#allocation5 + $0x1678] sm:$0xff]
    %v821 = vld [vmem:[#allocation5 + $0x1680] sm:$0xff]
    %v822 = vld [vmem:[#allocation5 + $0x1688] sm:$0xff]
    %v823 = vld [vmem:[#allocation5 + $0x1690] sm:$0xff]
    %v824 = vld [vmem:[#allocation5 + $0x1698] sm:$0xff]
    %v825 = vld [vmem:[#allocation5 + $0x16a0] sm:$0xff]
    %v826 = vld [vmem:[#allocation5 + $0x16a8] sm:$0xff]
    %v827 = vld [vmem:[#allocation5 + $0x16b0] sm:$0xff]
    %v828 = vld [vmem:[#allocation5 + $0x16b8] sm:$0xff]
    %v829 = vld [vmem:[#allocation5 + $0x16c0] sm:$0xff]
    %v830 = vld [vmem:[#allocation5 + $0x16c8] sm:$0xff]
    %v831 = vld [vmem:[#allocation5 + $0x16d0] sm:$0xff]
    %v832 = vld [vmem:[#allocation5 + $0x16d8] sm:$0xff]
    %v833 = vld [vmem:[#allocation5 + $0x16e0] sm:$0xff]
    %v834 = vld [vmem:[#allocation5 + $0x16e8] sm:$0xff]
    %v835 = vld [vmem:[#allocation5 + $0x16f0] sm:$0xff]
    %v836 = vld [vmem:[#allocation5 + $0x16f8] sm:$0xff]
    %v837 = vld [vmem:[#allocation5 + $0x1700] sm:$0xff]
    %v838 = vld [vmem:[#allocation5 + $0x1708] sm:$0xff]
    %v839 = vld [vmem:[#allocation5 + $0x1710] sm:$0xff]
    %v840 = vld [vmem:[#allocation5 + $0x1718] sm:$0xff]
    %v841 = vld [vmem:[#allocation5 + $0x1720] sm:$0xff]
    %v842 = vld [vmem:[#allocation5 + $0x1728] sm:$0xff]
    %v843 = vld [vmem:[#allocation5 + $0x1730] sm:$0xff]
    %v844 = vld [vmem:[#allocation5 + $0x1738] sm:$0xff]
    %v845 = vld [vmem:[#allocation5 + $0x1740] sm:$0xff]
    %v846 = vld [vmem:[#allocation5 + $0x1748] sm:$0xff]
    %v847 = vld [vmem:[#allocation5 + $0x1750] sm:$0xff]
    %v848 = vld [vmem:[#allocation5 + $0x1758] sm:$0xff]
    %v849 = vld [vmem:[#allocation5 + $0x1760] sm:$0xff]
    %v850 = vld [vmem:[#allocation5 + $0x1768] sm:$0xff]
    %v851 = vld [vmem:[#allocation5 + $0x1770] sm:$0xff]
    %v852 = vld [vmem:[#allocation5 + $0x1778] sm:$0xff]
    %v853 = vld [vmem:[#allocation5 + $0x1780] sm:$0xff]
    %v854 = vld [vmem:[#allocation5 + $0x1788] sm:$0xff]
    %v855 = vld [vmem:[#allocation5 + $0x1790] sm:$0xff]
    %v856 = vld [vmem:[#allocation5 + $0x1798] sm:$0xff]
    %v857 = vld [vmem:[#allocation5 + $0x17a0] sm:$0xff]
    %v858 = vld [vmem:[#allocation5 + $0x17a8] sm:$0xff]
    %v859 = vld [vmem:[#allocation5 + $0x17b0] sm:$0xff]
    %v860 = vld [vmem:[#allocation5 + $0x17b8] sm:$0xff]
    %v861 = vld [vmem:[#allocation5 + $0x17c0] sm:$0xff]
    %v862 = vld [vmem:[#allocation5 + $0x17c8] sm:$0xff]
    %v863 = vld [vmem:[#allocation5 + $0x17d0] sm:$0xff]
    %v864 = vld [vmem:[#allocation5 + $0x17d8] sm:$0xff]
    %v865 = vld [vmem:[#allocation5 + $0x17e0] sm:$0xff]
    %v866 = vld [vmem:[#allocation5 + $0x17e8] sm:$0xff]
    %v867 = vld [vmem:[#allocation5 + $0x17f0] sm:$0xff]
    %v868 = vld [vmem:[#allocation5 + $0x17f8] sm:$0xff]
    %v869 = vld [vmem:[#allocation7] sm:$0xff]
    %v870 = vld [vmem:[#allocation7 + $0x8] sm:$0xff]
    %v873 = vperm.slane %v869, 0
    %v874 = vperm.slane %v869, 1
    %v875 = vperm.slane %v869, 2
    %v876 = vperm.slane %v869, 3
    %v877 = vperm.slane %v869, 4
    %v878 = vperm.slane %v869, 5
    %v879 = vperm.slane %v869, 6
    %v880 = vperm.slane %v869, 7
    %v881 = vperm.slane %v870, 0
    %v882 = vperm.slane %v870, 1
    %v883 = vperm.slane %v870, 2
    %v884 = vperm.slane %v870, 3
    %v885 = vperm.slane %v870, 4
    %v886 = vperm.slane %v870, 5
    %v887 = vperm.slane %v870, 6
    %v888 = vperm.slane %v870, 7
    %905 = vmatpush.msra.mxu0 %v341
    %906 = vmatpush.msra.mxu0 %v325
    %907 = vmatpush.msra.mxu0 %v309
    %908 = vmatpush.msra.mxu0 %v293
    %909 = vmatpush.msra.mxu0 %v277
    %910 = vmatpush.msra.mxu0 %v261
    %911 = vmatpush.msra.mxu0 %v245
    %912 = vmatpush.msra.mxu0 %v229
    %913 = vmatpush.msra.mxu0 %v213
    %914 = vmatpush.msra.mxu0 %v197
    %915 = vmatpush.msra.mxu0 %v181
    %916 = vmatpush.msra.mxu0 %v165
    %917 = vmatpush.msra.mxu0 %v149
    %918 = vmatpush.msra.mxu0 %v133
    %919 = vmatpush.msra.mxu0 %v117
    %920 = vmatpush.msra.mxu0 %v101
    %921 = vmatmul.f32.gmra.mxu0 %v95
    %v922 = vpop.f32.mrf.mxu0
    %v923 = vadd.f32 %v873, %v922
    %924 = vmatmul.f32.gmra.mxu0 %v98
    %v925 = vpop.f32.mrf.mxu0
    %v926 = vadd.f32 %v873, %v925
    %927 = vdwg.mxu0
    %928 = vmatpush.msra.mxu0 %v597
    %929 = vmatpush.msra.mxu0 %v581
    %930 = vmatpush.msra.mxu0 %v565
    %931 = vmatpush.msra.mxu0 %v549
    %932 = vmatpush.msra.mxu0 %v533
    %933 = vmatpush.msra.mxu0 %v517
    %934 = vmatpush.msra.mxu0 %v501
    %935 = vmatpush.msra.mxu0 %v485
    %936 = vmatpush.msra.mxu0 %v469
    %937 = vmatpush.msra.mxu0 %v453
    %938 = vmatpush.msra.mxu0 %v437
    %939 = vmatpush.msra.mxu0 %v421
    %940 = vmatpush.msra.mxu0 %v405
    %941 = vmatpush.msra.mxu0 %v389
    %942 = vmatpush.msra.mxu0 %v373
    %943 = vmatpush.msra.mxu0 %v357
    %944 = vmatmul.f32.gmra.mxu0 %v96
    %v945 = vpop.f32.mrf.mxu0
    %v946 = vadd.f32 %v923, %v945
    %947 = vmatmul.f32.gmra.mxu0 %v99
    %v948 = vpop.f32.mrf.mxu0
    %v949 = vadd.f32 %v926, %v948
    %950 = vdwg.mxu0
    %951 = vmatpush.msra.mxu0 %v853
    %952 = vmatpush.msra.mxu0 %v837
    %953 = vmatpush.msra.mxu0 %v821
    %954 = vmatpush.msra.mxu0 %v805
    %955 = vmatpush.msra.mxu0 %v789
    %956 = vmatpush.msra.mxu0 %v773
    %957 = vmatpush.msra.mxu0 %v757
    %958 = vmatpush.msra.mxu0 %v741
    %959 = vmatpush.msra.mxu0 %v725
    %960 = vmatpush.msra.mxu0 %v709
    %961 = vmatpush.msra.mxu0 %v693
    %962 = vmatpush.msra.mxu0 %v677
    %963 = vmatpush.msra.mxu0 %v661
    %964 = vmatpush.msra.mxu0 %v645
    %965 = vmatpush.msra.mxu0 %v629
    %966 = vmatpush.msra.mxu0 %v613
    %967 = vmatmul.f32.gmra.mxu0 %v97
    %v968 = vpop.f32.mrf.mxu0
    %v969 = vadd.f32 %v946, %v968
    %970 = vmatmul.f32.gmra.mxu0 %v100
    %v971 = vpop.f32.mrf.mxu0
    %v972 = vadd.f32 %v949, %v971
    %973 = vdwg.mxu0
    %974 = vmatpush.msra.mxu0 %v342
    %975 = vmatpush.msra.mxu0 %v326
    %976 = vmatpush.msra.mxu0 %v310
    %977 = vmatpush.msra.mxu0 %v294
    %978 = vmatpush.msra.mxu0 %v278
    %979 = vmatpush.msra.mxu0 %v262
    %980 = vmatpush.msra.mxu0 %v246
    %981 = vmatpush.msra.mxu0 %v230
    %982 = vmatpush.msra.mxu0 %v214
    %983 = vmatpush.msra.mxu0 %v198
    %984 = vmatpush.msra.mxu0 %v182
    %985 = vmatpush.msra.mxu0 %v166
    %986 = vmatpush.msra.mxu0 %v150
    %987 = vmatpush.msra.mxu0 %v134
    %988 = vmatpush.msra.mxu0 %v118
    %989 = vmatpush.msra.mxu0 %v102
    %990 = vmatmul.f32.gmra.mxu0 %v95
    %v991 = vpop.f32.mrf.mxu0
    %v992 = vadd.f32 %v874, %v991
    %993 = vmatmul.f32.gmra.mxu0 %v98
    %v994 = vpop.f32.mrf.mxu0
    %v995 = vadd.f32 %v874, %v994
    %996 = vdwg.mxu0
    %997 = vmatpush.msra.mxu0 %v598
    %998 = vmatpush.msra.mxu0 %v582
    %999 = vmatpush.msra.mxu0 %v566
    %1000 = vmatpush.msra.mxu0 %v550
    %1001 = vmatpush.msra.mxu0 %v534
    %1002 = vmatpush.msra.mxu0 %v518
    %1003 = vmatpush.msra.mxu0 %v502
    %1004 = vmatpush.msra.mxu0 %v486
    %1005 = vmatpush.msra.mxu0 %v470
    %1006 = vmatpush.msra.mxu0 %v454
    %1007 = vmatpush.msra.mxu0 %v438
    %1008 = vmatpush.msra.mxu0 %v422
    %1009 = vmatpush.msra.mxu0 %v406
    %1010 = vmatpush.msra.mxu0 %v390
    %1011 = vmatpush.msra.mxu0 %v374
    %1012 = vmatpush.msra.mxu0 %v358
    %1013 = vmatmul.f32.gmra.mxu0 %v96
    %v1014 = vpop.f32.mrf.mxu0
    %v1015 = vadd.f32 %v992, %v1014
    %1016 = vmatmul.f32.gmra.mxu0 %v99
    %v1017 = vpop.f32.mrf.mxu0
    %v1018 = vadd.f32 %v995, %v1017
    %1019 = vdwg.mxu0
    %1020 = vmatpush.msra.mxu0 %v854
    %1021 = vmatpush.msra.mxu0 %v838
    %1022 = vmatpush.msra.mxu0 %v822
    %1023 = vmatpush.msra.mxu0 %v806
    %1024 = vmatpush.msra.mxu0 %v790
    %1025 = vmatpush.msra.mxu0 %v774
    %1026 = vmatpush.msra.mxu0 %v758
    %1027 = vmatpush.msra.mxu0 %v742
    %1028 = vmatpush.msra.mxu0 %v726
    %1029 = vmatpush.msra.mxu0 %v710
    %1030 = vmatpush.msra.mxu0 %v694
    %1031 = vmatpush.msra.mxu0 %v678
    %1032 = vmatpush.msra.mxu0 %v662
    %1033 = vmatpush.msra.mxu0 %v646
    %1034 = vmatpush.msra.mxu0 %v630
    %1035 = vmatpush.msra.mxu0 %v614
    %1036 = vmatmul.f32.gmra.mxu0 %v97
    %v1037 = vpop.f32.mrf.mxu0
    %v1038 = vadd.f32 %v1015, %v1037
    %1039 = vmatmul.f32.gmra.mxu0 %v100
    %v1040 = vpop.f32.mrf.mxu0
    %v1041 = vadd.f32 %v1018, %v1040
    %1042 = vdwg.mxu0
    %1043 = vmatpush.msra.mxu0 %v343
    %1044 = vmatpush.msra.mxu0 %v327
    %1045 = vmatpush.msra.mxu0 %v311
    %1046 = vmatpush.msra.mxu0 %v295
    %1047 = vmatpush.msra.mxu0 %v279
    %1048 = vmatpush.msra.mxu0 %v263
    %1049 = vmatpush.msra.mxu0 %v247
    %1050 = vmatpush.msra.mxu0 %v231
    %1051 = vmatpush.msra.mxu0 %v215
    %1052 = vmatpush.msra.mxu0 %v199
    %1053 = vmatpush.msra.mxu0 %v183
    %1054 = vmatpush.msra.mxu0 %v167
    %1055 = vmatpush.msra.mxu0 %v151
    %1056 = vmatpush.msra.mxu0 %v135
    %1057 = vmatpush.msra.mxu0 %v119
    %1058 = vmatpush.msra.mxu0 %v103
    %1059 = vmatmul.f32.gmra.mxu0 %v95
    %v1060 = vpop.f32.mrf.mxu0
    %v1061 = vadd.f32 %v875, %v1060
    %1062 = vmatmul.f32.gmra.mxu0 %v98
    %v1063 = vpop.f32.mrf.mxu0
    %v1064 = vadd.f32 %v875, %v1063
    %1065 = vdwg.mxu0
    %1066 = vmatpush.msra.mxu0 %v599
    %1067 = vmatpush.msra.mxu0 %v583
    %1068 = vmatpush.msra.mxu0 %v567
    %1069 = vmatpush.msra.mxu0 %v551
    %1070 = vmatpush.msra.mxu0 %v535
    %1071 = vmatpush.msra.mxu0 %v519
    %1072 = vmatpush.msra.mxu0 %v503
    %1073 = vmatpush.msra.mxu0 %v487
    %1074 = vmatpush.msra.mxu0 %v471
    %1075 = vmatpush.msra.mxu0 %v455
    %1076 = vmatpush.msra.mxu0 %v439
    %1077 = vmatpush.msra.mxu0 %v423
    %1078 = vmatpush.msra.mxu0 %v407
    %1079 = vmatpush.msra.mxu0 %v391
    %1080 = vmatpush.msra.mxu0 %v375
    %1081 = vmatpush.msra.mxu0 %v359
    %1082 = vmatmul.f32.gmra.mxu0 %v96
    %v1083 = vpop.f32.mrf.mxu0
    %v1084 = vadd.f32 %v1061, %v1083
    %1085 = vmatmul.f32.gmra.mxu0 %v99
    %v1086 = vpop.f32.mrf.mxu0
    %v1087 = vadd.f32 %v1064, %v1086
    %1088 = vdwg.mxu0
    %1089 = vmatpush.msra.mxu0 %v855
    %1090 = vmatpush.msra.mxu0 %v839
    %1091 = vmatpush.msra.mxu0 %v823
    %1092 = vmatpush.msra.mxu0 %v807
    %1093 = vmatpush.msra.mxu0 %v791
    %1094 = vmatpush.msra.mxu0 %v775
    %1095 = vmatpush.msra.mxu0 %v759
    %1096 = vmatpush.msra.mxu0 %v743
    %1097 = vmatpush.msra.mxu0 %v727
    %1098 = vmatpush.msra.mxu0 %v711
    %1099 = vmatpush.msra.mxu0 %v695
    %1100 = vmatpush.msra.mxu0 %v679
    %1101 = vmatpush.msra.mxu0 %v663
    %1102 = vmatpush.msra.mxu0 %v647
    %1103 = vmatpush.msra.mxu0 %v631
    %1104 = vmatpush.msra.mxu0 %v615
    %1105 = vmatmul.f32.gmra.mxu0 %v97
    %v1106 = vpop.f32.mrf.mxu0
    %v1107 = vadd.f32 %v1084, %v1106
    %1108 = vmatmul.f32.gmra.mxu0 %v100
    %v1109 = vpop.f32.mrf.mxu0
    %v1110 = vadd.f32 %v1087, %v1109
    %1111 = vdwg.mxu0
    %1112 = vmatpush.msra.mxu0 %v344
    %1113 = vmatpush.msra.mxu0 %v328
    %1114 = vmatpush.msra.mxu0 %v312
    %1115 = vmatpush.msra.mxu0 %v296
    %1116 = vmatpush.msra.mxu0 %v280
    %1117 = vmatpush.msra.mxu0 %v264
    %1118 = vmatpush.msra.mxu0 %v248
    %1119 = vmatpush.msra.mxu0 %v232
    %1120 = vmatpush.msra.mxu0 %v216
    %1121 = vmatpush.msra.mxu0 %v200
    %1122 = vmatpush.msra.mxu0 %v184
    %1123 = vmatpush.msra.mxu0 %v168
    %1124 = vmatpush.msra.mxu0 %v152
    %1125 = vmatpush.msra.mxu0 %v136
    %1126 = vmatpush.msra.mxu0 %v120
    %1127 = vmatpush.msra.mxu0 %v104
    %1128 = vmatmul.f32.gmra.mxu0 %v95
    %v1129 = vpop.f32.mrf.mxu0
    %v1130 = vadd.f32 %v876, %v1129
    %1131 = vmatmul.f32.gmra.mxu0 %v98
    %v1132 = vpop.f32.mrf.mxu0
    %v1133 = vadd.f32 %v876, %v1132
    %1134 = vdwg.mxu0
    %1135 = vmatpush.msra.mxu0 %v600
    %1136 = vmatpush.msra.mxu0 %v584
    %1137 = vmatpush.msra.mxu0 %v568
    %1138 = vmatpush.msra.mxu0 %v552
    %1139 = vmatpush.msra.mxu0 %v536
    %1140 = vmatpush.msra.mxu0 %v520
    %1141 = vmatpush.msra.mxu0 %v504
    %1142 = vmatpush.msra.mxu0 %v488
    %1143 = vmatpush.msra.mxu0 %v472
    %1144 = vmatpush.msra.mxu0 %v456
    %1145 = vmatpush.msra.mxu0 %v440
    %1146 = vmatpush.msra.mxu0 %v424
    %1147 = vmatpush.msra.mxu0 %v408
    %1148 = vmatpush.msra.mxu0 %v392
    %1149 = vmatpush.msra.mxu0 %v376
    %1150 = vmatpush.msra.mxu0 %v360
    %1151 = vmatmul.f32.gmra.mxu0 %v96
    %v1152 = vpop.f32.mrf.mxu0
    %v1153 = vadd.f32 %v1130, %v1152
    %1154 = vmatmul.f32.gmra.mxu0 %v99
    %v1155 = vpop.f32.mrf.mxu0
    %v1156 = vadd.f32 %v1133, %v1155
    %1157 = vdwg.mxu0
    %1158 = vmatpush.msra.mxu0 %v856
    %1159 = vmatpush.msra.mxu0 %v840
    %1160 = vmatpush.msra.mxu0 %v824
    %1161 = vmatpush.msra.mxu0 %v808
    %1162 = vmatpush.msra.mxu0 %v792
    %1163 = vmatpush.msra.mxu0 %v776
    %1164 = vmatpush.msra.mxu0 %v760
    %1165 = vmatpush.msra.mxu0 %v744
    %1166 = vmatpush.msra.mxu0 %v728
    %1167 = vmatpush.msra.mxu0 %v712
    %1168 = vmatpush.msra.mxu0 %v696
    %1169 = vmatpush.msra.mxu0 %v680
    %1170 = vmatpush.msra.mxu0 %v664
    %1171 = vmatpush.msra.mxu0 %v648
    %1172 = vmatpush.msra.mxu0 %v632
    %1173 = vmatpush.msra.mxu0 %v616
    %1174 = vmatmul.f32.gmra.mxu0 %v97
    %v1175 = vpop.f32.mrf.mxu0
    %v1176 = vadd.f32 %v1153, %v1175
    %1177 = vmatmul.f32.gmra.mxu0 %v100
    %v1178 = vpop.f32.mrf.mxu0
    %v1179 = vadd.f32 %v1156, %v1178
    %1180 = vdwg.mxu0
    %1181 = vmatpush.msra.mxu0 %v345
    %1182 = vmatpush.msra.mxu0 %v329
    %1183 = vmatpush.msra.mxu0 %v313
    %1184 = vmatpush.msra.mxu0 %v297
    %1185 = vmatpush.msra.mxu0 %v281
    %1186 = vmatpush.msra.mxu0 %v265
    %1187 = vmatpush.msra.mxu0 %v249
    %1188 = vmatpush.msra.mxu0 %v233
    %1189 = vmatpush.msra.mxu0 %v217
    %1190 = vmatpush.msra.mxu0 %v201
    %1191 = vmatpush.msra.mxu0 %v185
    %1192 = vmatpush.msra.mxu0 %v169
    %1193 = vmatpush.msra.mxu0 %v153
    %1194 = vmatpush.msra.mxu0 %v137
    %1195 = vmatpush.msra.mxu0 %v121
    %1196 = vmatpush.msra.mxu0 %v105
    %1197 = vmatmul.f32.gmra.mxu0 %v95
    %v1198 = vpop.f32.mrf.mxu0
    %v1199 = vadd.f32 %v877, %v1198
    %1200 = vmatmul.f32.gmra.mxu0 %v98
    %v1201 = vpop.f32.mrf.mxu0
    %v1202 = vadd.f32 %v877, %v1201
    %1203 = vdwg.mxu0
    %1204 = vmatpush.msra.mxu0 %v601
    %1205 = vmatpush.msra.mxu0 %v585
    %1206 = vmatpush.msra.mxu0 %v569
    %1207 = vmatpush.msra.mxu0 %v553
    %1208 = vmatpush.msra.mxu0 %v537
    %1209 = vmatpush.msra.mxu0 %v521
    %1210 = vmatpush.msra.mxu0 %v505
    %1211 = vmatpush.msra.mxu0 %v489
    %1212 = vmatpush.msra.mxu0 %v473
    %1213 = vmatpush.msra.mxu0 %v457
    %1214 = vmatpush.msra.mxu0 %v441
    %1215 = vmatpush.msra.mxu0 %v425
    %1216 = vmatpush.msra.mxu0 %v409
    %1217 = vmatpush.msra.mxu0 %v393
    %1218 = vmatpush.msra.mxu0 %v377
    %1219 = vmatpush.msra.mxu0 %v361
    %1220 = vmatmul.f32.gmra.mxu0 %v96
    %v1221 = vpop.f32.mrf.mxu0
    %v1222 = vadd.f32 %v1199, %v1221
    %1223 = vmatmul.f32.gmra.mxu0 %v99
    %v1224 = vpop.f32.mrf.mxu0
    %v1225 = vadd.f32 %v1202, %v1224
    %1226 = vdwg.mxu0
    %1227 = vmatpush.msra.mxu0 %v857
    %1228 = vmatpush.msra.mxu0 %v841
    %1229 = vmatpush.msra.mxu0 %v825
    %1230 = vmatpush.msra.mxu0 %v809
    %1231 = vmatpush.msra.mxu0 %v793
    %1232 = vmatpush.msra.mxu0 %v777
    %1233 = vmatpush.msra.mxu0 %v761
    %1234 = vmatpush.msra.mxu0 %v745
    %1235 = vmatpush.msra.mxu0 %v729
    %1236 = vmatpush.msra.mxu0 %v713
    %1237 = vmatpush.msra.mxu0 %v697
    %1238 = vmatpush.msra.mxu0 %v681
    %1239 = vmatpush.msra.mxu0 %v665
    %1240 = vmatpush.msra.mxu0 %v649
    %1241 = vmatpush.msra.mxu0 %v633
    %1242 = vmatpush.msra.mxu0 %v617
    %1243 = vmatmul.f32.gmra.mxu0 %v97
    %v1244 = vpop.f32.mrf.mxu0
    %v1245 = vadd.f32 %v1222, %v1244
    %1246 = vmatmul.f32.gmra.mxu0 %v100
    %v1247 = vpop.f32.mrf.mxu0
    %v1248 = vadd.f32 %v1225, %v1247
    %1249 = vdwg.mxu0
    %1250 = vmatpush.msra.mxu0 %v346
    %1251 = vmatpush.msra.mxu0 %v330
    %1252 = vmatpush.msra.mxu0 %v314
    %1253 = vmatpush.msra.mxu0 %v298
    %1254 = vmatpush.msra.mxu0 %v282
    %1255 = vmatpush.msra.mxu0 %v266
    %1256 = vmatpush.msra.mxu0 %v250
    %1257 = vmatpush.msra.mxu0 %v234
    %1258 = vmatpush.msra.mxu0 %v218
    %1259 = vmatpush.msra.mxu0 %v202
    %1260 = vmatpush.msra.mxu0 %v186
    %1261 = vmatpush.msra.mxu0 %v170
    %1262 = vmatpush.msra.mxu0 %v154
    %1263 = vmatpush.msra.mxu0 %v138
    %1264 = vmatpush.msra.mxu0 %v122
    %1265 = vmatpush.msra.mxu0 %v106
    %1266 = vmatmul.f32.gmra.mxu0 %v95
    %v1267 = vpop.f32.mrf.mxu0
    %v1268 = vadd.f32 %v878, %v1267
    %1269 = vmatmul.f32.gmra.mxu0 %v98
    %v1270 = vpop.f32.mrf.mxu0
    %v1271 = vadd.f32 %v878, %v1270
    %1272 = vdwg.mxu0
    %1273 = vmatpush.msra.mxu0 %v602
    %1274 = vmatpush.msra.mxu0 %v586
    %1275 = vmatpush.msra.mxu0 %v570
    %1276 = vmatpush.msra.mxu0 %v554
    %1277 = vmatpush.msra.mxu0 %v538
    %1278 = vmatpush.msra.mxu0 %v522
    %1279 = vmatpush.msra.mxu0 %v506
    %1280 = vmatpush.msra.mxu0 %v490
    %1281 = vmatpush.msra.mxu0 %v474
    %1282 = vmatpush.msra.mxu0 %v458
    %1283 = vmatpush.msra.mxu0 %v442
    %1284 = vmatpush.msra.mxu0 %v426
    %1285 = vmatpush.msra.mxu0 %v410
    %1286 = vmatpush.msra.mxu0 %v394
    %1287 = vmatpush.msra.mxu0 %v378
    %1288 = vmatpush.msra.mxu0 %v362
    %1289 = vmatmul.f32.gmra.mxu0 %v96
    %v1290 = vpop.f32.mrf.mxu0
    %v1291 = vadd.f32 %v1268, %v1290
    %1292 = vmatmul.f32.gmra.mxu0 %v99
    %v1293 = vpop.f32.mrf.mxu0
    %v1294 = vadd.f32 %v1271, %v1293
    %1295 = vdwg.mxu0
    %1296 = vmatpush.msra.mxu0 %v858
    %1297 = vmatpush.msra.mxu0 %v842
    %1298 = vmatpush.msra.mxu0 %v826
    %1299 = vmatpush.msra.mxu0 %v810
    %1300 = vmatpush.msra.mxu0 %v794
    %1301 = vmatpush.msra.mxu0 %v778
    %1302 = vmatpush.msra.mxu0 %v762
    %1303 = vmatpush.msra.mxu0 %v746
    %1304 = vmatpush.msra.mxu0 %v730
    %1305 = vmatpush.msra.mxu0 %v714
    %1306 = vmatpush.msra.mxu0 %v698
    %1307 = vmatpush.msra.mxu0 %v682
    %1308 = vmatpush.msra.mxu0 %v666
    %1309 = vmatpush.msra.mxu0 %v650
    %1310 = vmatpush.msra.mxu0 %v634
    %1311 = vmatpush.msra.mxu0 %v618
    %1312 = vmatmul.f32.gmra.mxu0 %v97
    %v1313 = vpop.f32.mrf.mxu0
    %v1314 = vadd.f32 %v1291, %v1313
    %1315 = vmatmul.f32.gmra.mxu0 %v100
    %v1316 = vpop.f32.mrf.mxu0
    %v1317 = vadd.f32 %v1294, %v1316
    %1318 = vdwg.mxu0
    %1319 = vmatpush.msra.mxu0 %v347
    %1320 = vmatpush.msra.mxu0 %v331
    %1321 = vmatpush.msra.mxu0 %v315
    %1322 = vmatpush.msra.mxu0 %v299
    %1323 = vmatpush.msra.mxu0 %v283
    %1324 = vmatpush.msra.mxu0 %v267
    %1325 = vmatpush.msra.mxu0 %v251
    %1326 = vmatpush.msra.mxu0 %v235
    %1327 = vmatpush.msra.mxu0 %v219
    %1328 = vmatpush.msra.mxu0 %v203
    %1329 = vmatpush.msra.mxu0 %v187
    %1330 = vmatpush.msra.mxu0 %v171
    %1331 = vmatpush.msra.mxu0 %v155
    %1332 = vmatpush.msra.mxu0 %v139
    %1333 = vmatpush.msra.mxu0 %v123
    %1334 = vmatpush.msra.mxu0 %v107
    %1335 = vmatmul.f32.gmra.mxu0 %v95
    %v1336 = vpop.f32.mrf.mxu0
    %v1337 = vadd.f32 %v879, %v1336
    %1338 = vmatmul.f32.gmra.mxu0 %v98
    %v1339 = vpop.f32.mrf.mxu0
    %v1340 = vadd.f32 %v879, %v1339
    %1341 = vdwg.mxu0
    %1342 = vmatpush.msra.mxu0 %v603
    %1343 = vmatpush.msra.mxu0 %v587
    %1344 = vmatpush.msra.mxu0 %v571
    %1345 = vmatpush.msra.mxu0 %v555
    %1346 = vmatpush.msra.mxu0 %v539
    %1347 = vmatpush.msra.mxu0 %v523
    %1348 = vmatpush.msra.mxu0 %v507
    %1349 = vmatpush.msra.mxu0 %v491
    %1350 = vmatpush.msra.mxu0 %v475
    %1351 = vmatpush.msra.mxu0 %v459
    %1352 = vmatpush.msra.mxu0 %v443
    %1353 = vmatpush.msra.mxu0 %v427
    %1354 = vmatpush.msra.mxu0 %v411
    %1355 = vmatpush.msra.mxu0 %v395
    %1356 = vmatpush.msra.mxu0 %v379
    %1357 = vmatpush.msra.mxu0 %v363
    %1358 = vmatmul.f32.gmra.mxu0 %v96
    %v1359 = vpop.f32.mrf.mxu0
    %v1360 = vadd.f32 %v1337, %v1359
    %1361 = vmatmul.f32.gmra.mxu0 %v99
    %v1362 = vpop.f32.mrf.mxu0
    %v1363 = vadd.f32 %v1340, %v1362
    %1364 = vdwg.mxu0
    %1365 = vmatpush.msra.mxu0 %v859
    %1366 = vmatpush.msra.mxu0 %v843
    %1367 = vmatpush.msra.mxu0 %v827
    %1368 = vmatpush.msra.mxu0 %v811
    %1369 = vmatpush.msra.mxu0 %v795
    %1370 = vmatpush.msra.mxu0 %v779
    %1371 = vmatpush.msra.mxu0 %v763
    %1372 = vmatpush.msra.mxu0 %v747
    %1373 = vmatpush.msra.mxu0 %v731
    %1374 = vmatpush.msra.mxu0 %v715
    %1375 = vmatpush.msra.mxu0 %v699
    %1376 = vmatpush.msra.mxu0 %v683
    %1377 = vmatpush.msra.mxu0 %v667
    %1378 = vmatpush.msra.mxu0 %v651
    %1379 = vmatpush.msra.mxu0 %v635
    %1380 = vmatpush.msra.mxu0 %v619
    %1381 = vmatmul.f32.gmra.mxu0 %v97
    %v1382 = vpop.f32.mrf.mxu0
    %v1383 = vadd.f32 %v1360, %v1382
    %1384 = vmatmul.f32.gmra.mxu0 %v100
    %v1385 = vpop.f32.mrf.mxu0
    %v1386 = vadd.f32 %v1363, %v1385
    %1387 = vdwg.mxu0
    %1388 = vmatpush.msra.mxu0 %v348
    %1389 = vmatpush.msra.mxu0 %v332
    %1390 = vmatpush.msra.mxu0 %v316
    %1391 = vmatpush.msra.mxu0 %v300
    %1392 = vmatpush.msra.mxu0 %v284
    %1393 = vmatpush.msra.mxu0 %v268
    %1394 = vmatpush.msra.mxu0 %v252
    %1395 = vmatpush.msra.mxu0 %v236
    %1396 = vmatpush.msra.mxu0 %v220
    %1397 = vmatpush.msra.mxu0 %v204
    %1398 = vmatpush.msra.mxu0 %v188
    %1399 = vmatpush.msra.mxu0 %v172
    %1400 = vmatpush.msra.mxu0 %v156
    %1401 = vmatpush.msra.mxu0 %v140
    %1402 = vmatpush.msra.mxu0 %v124
    %1403 = vmatpush.msra.mxu0 %v108
    %1404 = vmatmul.f32.gmra.mxu0 %v95
    %v1405 = vpop.f32.mrf.mxu0
    %v1406 = vadd.f32 %v880, %v1405
    %1407 = vmatmul.f32.gmra.mxu0 %v98
    %v1408 = vpop.f32.mrf.mxu0
    %v1409 = vadd.f32 %v880, %v1408
    %1410 = vdwg.mxu0
    %1411 = vmatpush.msra.mxu0 %v604
    %1412 = vmatpush.msra.mxu0 %v588
    %1413 = vmatpush.msra.mxu0 %v572
    %1414 = vmatpush.msra.mxu0 %v556
    %1415 = vmatpush.msra.mxu0 %v540
    %1416 = vmatpush.msra.mxu0 %v524
    %1417 = vmatpush.msra.mxu0 %v508
    %1418 = vmatpush.msra.mxu0 %v492
    %1419 = vmatpush.msra.mxu0 %v476
    %1420 = vmatpush.msra.mxu0 %v460
    %1421 = vmatpush.msra.mxu0 %v444
    %1422 = vmatpush.msra.mxu0 %v428
    %1423 = vmatpush.msra.mxu0 %v412
    %1424 = vmatpush.msra.mxu0 %v396
    %1425 = vmatpush.msra.mxu0 %v380
    %1426 = vmatpush.msra.mxu0 %v364
    %1427 = vmatmul.f32.gmra.mxu0 %v96
    %v1428 = vpop.f32.mrf.mxu0
    %v1429 = vadd.f32 %v1406, %v1428
    %1430 = vmatmul.f32.gmra.mxu0 %v99
    %v1431 = vpop.f32.mrf.mxu0
    %v1432 = vadd.f32 %v1409, %v1431
    %1433 = vdwg.mxu0
    %1434 = vmatpush.msra.mxu0 %v860
    %1435 = vmatpush.msra.mxu0 %v844
    %1436 = vmatpush.msra.mxu0 %v828
    %1437 = vmatpush.msra.mxu0 %v812
    %1438 = vmatpush.msra.mxu0 %v796
    %1439 = vmatpush.msra.mxu0 %v780
    %1440 = vmatpush.msra.mxu0 %v764
    %1441 = vmatpush.msra.mxu0 %v748
    %1442 = vmatpush.msra.mxu0 %v732
    %1443 = vmatpush.msra.mxu0 %v716
    %1444 = vmatpush.msra.mxu0 %v700
    %1445 = vmatpush.msra.mxu0 %v684
    %1446 = vmatpush.msra.mxu0 %v668
    %1447 = vmatpush.msra.mxu0 %v652
    %1448 = vmatpush.msra.mxu0 %v636
    %1449 = vmatpush.msra.mxu0 %v620
    %1450 = vmatmul.f32.gmra.mxu0 %v97
    %v1451 = vpop.f32.mrf.mxu0
    %v1452 = vadd.f32 %v1429, %v1451
    %1453 = vmatmul.f32.gmra.mxu0 %v100
    %v1454 = vpop.f32.mrf.mxu0
    %v1455 = vadd.f32 %v1432, %v1454
    %1456 = vdwg.mxu0
    %1457 = vmatpush.msra.mxu0 %v349
    %1458 = vmatpush.msra.mxu0 %v333
    %1459 = vmatpush.msra.mxu0 %v317
    %1460 = vmatpush.msra.mxu0 %v301
    %1461 = vmatpush.msra.mxu0 %v285
    %1462 = vmatpush.msra.mxu0 %v269
    %1463 = vmatpush.msra.mxu0 %v253
    %1464 = vmatpush.msra.mxu0 %v237
    %1465 = vmatpush.msra.mxu0 %v221
    %1466 = vmatpush.msra.mxu0 %v205
    %1467 = vmatpush.msra.mxu0 %v189
    %1468 = vmatpush.msra.mxu0 %v173
    %1469 = vmatpush.msra.mxu0 %v157
    %1470 = vmatpush.msra.mxu0 %v141
    %1471 = vmatpush.msra.mxu0 %v125
    %1472 = vmatpush.msra.mxu0 %v109
    %1473 = vmatmul.f32.gmra.mxu0 %v95
    %v1474 = vpop.f32.mrf.mxu0
    %v1475 = vadd.f32 %v881, %v1474
    %1476 = vmatmul.f32.gmra.mxu0 %v98
    %v1477 = vpop.f32.mrf.mxu0
    %v1478 = vadd.f32 %v881, %v1477
    %1479 = vdwg.mxu0
    %1480 = vmatpush.msra.mxu0 %v605
    %1481 = vmatpush.msra.mxu0 %v589
    %1482 = vmatpush.msra.mxu0 %v573
    %1483 = vmatpush.msra.mxu0 %v557
    %1484 = vmatpush.msra.mxu0 %v541
    %1485 = vmatpush.msra.mxu0 %v525
    %1486 = vmatpush.msra.mxu0 %v509
    %1487 = vmatpush.msra.mxu0 %v493
    %1488 = vmatpush.msra.mxu0 %v477
    %1489 = vmatpush.msra.mxu0 %v461
    %1490 = vmatpush.msra.mxu0 %v445
    %1491 = vmatpush.msra.mxu0 %v429
    %1492 = vmatpush.msra.mxu0 %v413
    %1493 = vmatpush.msra.mxu0 %v397
    %1494 = vmatpush.msra.mxu0 %v381
    %1495 = vmatpush.msra.mxu0 %v365
    %1496 = vmatmul.f32.gmra.mxu0 %v96
    %v1497 = vpop.f32.mrf.mxu0
    %v1498 = vadd.f32 %v1475, %v1497
    %1499 = vmatmul.f32.gmra.mxu0 %v99
    %v1500 = vpop.f32.mrf.mxu0
    %v1501 = vadd.f32 %v1478, %v1500
    %1502 = vdwg.mxu0
    %1503 = vmatpush.msra.mxu0 %v861
    %1504 = vmatpush.msra.mxu0 %v845
    %1505 = vmatpush.msra.mxu0 %v829
    %1506 = vmatpush.msra.mxu0 %v813
    %1507 = vmatpush.msra.mxu0 %v797
    %1508 = vmatpush.msra.mxu0 %v781
    %1509 = vmatpush.msra.mxu0 %v765
    %1510 = vmatpush.msra.mxu0 %v749
    %1511 = vmatpush.msra.mxu0 %v733
    %1512 = vmatpush.msra.mxu0 %v717
    %1513 = vmatpush.msra.mxu0 %v701
    %1514 = vmatpush.msra.mxu0 %v685
    %1515 = vmatpush.msra.mxu0 %v669
    %1516 = vmatpush.msra.mxu0 %v653
    %1517 = vmatpush.msra.mxu0 %v637
    %1518 = vmatpush.msra.mxu0 %v621
    %1519 = vmatmul.f32.gmra.mxu0 %v97
    %v1520 = vpop.f32.mrf.mxu0
    %v1521 = vadd.f32 %v1498, %v1520
    %1522 = vmatmul.f32.gmra.mxu0 %v100
    %v1523 = vpop.f32.mrf.mxu0
    %v1524 = vadd.f32 %v1501, %v1523
    %1525 = vdwg.mxu0
    %1526 = vmatpush.msra.mxu0 %v350
    %1527 = vmatpush.msra.mxu0 %v334
    %1528 = vmatpush.msra.mxu0 %v318
    %1529 = vmatpush.msra.mxu0 %v302
    %1530 = vmatpush.msra.mxu0 %v286
    %1531 = vmatpush.msra.mxu0 %v270
    %1532 = vmatpush.msra.mxu0 %v254
    %1533 = vmatpush.msra.mxu0 %v238
    %1534 = vmatpush.msra.mxu0 %v222
    %1535 = vmatpush.msra.mxu0 %v206
    %1536 = vmatpush.msra.mxu0 %v190
    %1537 = vmatpush.msra.mxu0 %v174
    %1538 = vmatpush.msra.mxu0 %v158
    %1539 = vmatpush.msra.mxu0 %v142
    %1540 = vmatpush.msra.mxu0 %v126
    %1541 = vmatpush.msra.mxu0 %v110
    %1542 = vmatmul.f32.gmra.mxu0 %v95
    %v1543 = vpop.f32.mrf.mxu0
    %v1544 = vadd.f32 %v882, %v1543
    %1545 = vmatmul.f32.gmra.mxu0 %v98
    %v1546 = vpop.f32.mrf.mxu0
    %v1547 = vadd.f32 %v882, %v1546
    %1548 = vdwg.mxu0
    %1549 = vmatpush.msra.mxu0 %v606
    %1550 = vmatpush.msra.mxu0 %v590
    %1551 = vmatpush.msra.mxu0 %v574
    %1552 = vmatpush.msra.mxu0 %v558
    %1553 = vmatpush.msra.mxu0 %v542
    %1554 = vmatpush.msra.mxu0 %v526
    %1555 = vmatpush.msra.mxu0 %v510
    %1556 = vmatpush.msra.mxu0 %v494
    %1557 = vmatpush.msra.mxu0 %v478
    %1558 = vmatpush.msra.mxu0 %v462
    %1559 = vmatpush.msra.mxu0 %v446
    %1560 = vmatpush.msra.mxu0 %v430
    %1561 = vmatpush.msra.mxu0 %v414
    %1562 = vmatpush.msra.mxu0 %v398
    %1563 = vmatpush.msra.mxu0 %v382
    %1564 = vmatpush.msra.mxu0 %v366
    %1565 = vmatmul.f32.gmra.mxu0 %v96
    %v1566 = vpop.f32.mrf.mxu0
    %v1567 = vadd.f32 %v1544, %v1566
    %1568 = vmatmul.f32.gmra.mxu0 %v99
    %v1569 = vpop.f32.mrf.mxu0
    %v1570 = vadd.f32 %v1547, %v1569
    %1571 = vdwg.mxu0
    %1572 = vmatpush.msra.mxu0 %v862
    %1573 = vmatpush.msra.mxu0 %v846
    %1574 = vmatpush.msra.mxu0 %v830
    %1575 = vmatpush.msra.mxu0 %v814
    %1576 = vmatpush.msra.mxu0 %v798
    %1577 = vmatpush.msra.mxu0 %v782
    %1578 = vmatpush.msra.mxu0 %v766
    %1579 = vmatpush.msra.mxu0 %v750
    %1580 = vmatpush.msra.mxu0 %v734
    %1581 = vmatpush.msra.mxu0 %v718
    %1582 = vmatpush.msra.mxu0 %v702
    %1583 = vmatpush.msra.mxu0 %v686
    %1584 = vmatpush.msra.mxu0 %v670
    %1585 = vmatpush.msra.mxu0 %v654
    %1586 = vmatpush.msra.mxu0 %v638
    %1587 = vmatpush.msra.mxu0 %v622
    %1588 = vmatmul.f32.gmra.mxu0 %v97
    %v1589 = vpop.f32.mrf.mxu0
    %v1590 = vadd.f32 %v1567, %v1589
    %1591 = vmatmul.f32.gmra.mxu0 %v100
    %v1592 = vpop.f32.mrf.mxu0
    %v1593 = vadd.f32 %v1570, %v1592
    %1594 = vdwg.mxu0
    %1595 = vmatpush.msra.mxu0 %v351
    %1596 = vmatpush.msra.mxu0 %v335
    %1597 = vmatpush.msra.mxu0 %v319
    %1598 = vmatpush.msra.mxu0 %v303
    %1599 = vmatpush.msra.mxu0 %v287
    %1600 = vmatpush.msra.mxu0 %v271
    %1601 = vmatpush.msra.mxu0 %v255
    %1602 = vmatpush.msra.mxu0 %v239
    %1603 = vmatpush.msra.mxu0 %v223
    %1604 = vmatpush.msra.mxu0 %v207
    %1605 = vmatpush.msra.mxu0 %v191
    %1606 = vmatpush.msra.mxu0 %v175
    %1607 = vmatpush.msra.mxu0 %v159
    %1608 = vmatpush.msra.mxu0 %v143
    %1609 = vmatpush.msra.mxu0 %v127
    %1610 = vmatpush.msra.mxu0 %v111
    %1611 = vmatmul.f32.gmra.mxu0 %v95
    %v1612 = vpop.f32.mrf.mxu0
    %v1613 = vadd.f32 %v883, %v1612
    %1614 = vmatmul.f32.gmra.mxu0 %v98
    %v1615 = vpop.f32.mrf.mxu0
    %v1616 = vadd.f32 %v883, %v1615
    %1617 = vdwg.mxu0
    %1618 = vmatpush.msra.mxu0 %v607
    %1619 = vmatpush.msra.mxu0 %v591
    %1620 = vmatpush.msra.mxu0 %v575
    %1621 = vmatpush.msra.mxu0 %v559
    %1622 = vmatpush.msra.mxu0 %v543
    %1623 = vmatpush.msra.mxu0 %v527
    %1624 = vmatpush.msra.mxu0 %v511
    %1625 = vmatpush.msra.mxu0 %v495
    %1626 = vmatpush.msra.mxu0 %v479
    %1627 = vmatpush.msra.mxu0 %v463
    %1628 = vmatpush.msra.mxu0 %v447
    %1629 = vmatpush.msra.mxu0 %v431
    %1630 = vmatpush.msra.mxu0 %v415
    %1631 = vmatpush.msra.mxu0 %v399
    %1632 = vmatpush.msra.mxu0 %v383
    %1633 = vmatpush.msra.mxu0 %v367
    %1634 = vmatmul.f32.gmra.mxu0 %v96
    %v1635 = vpop.f32.mrf.mxu0
    %v1636 = vadd.f32 %v1613, %v1635
    %1637 = vmatmul.f32.gmra.mxu0 %v99
    %v1638 = vpop.f32.mrf.mxu0
    %v1639 = vadd.f32 %v1616, %v1638
    %1640 = vdwg.mxu0
    %1641 = vmatpush.msra.mxu0 %v863
    %1642 = vmatpush.msra.mxu0 %v847
    %1643 = vmatpush.msra.mxu0 %v831
    %1644 = vmatpush.msra.mxu0 %v815
    %1645 = vmatpush.msra.mxu0 %v799
    %1646 = vmatpush.msra.mxu0 %v783
    %1647 = vmatpush.msra.mxu0 %v767
    %1648 = vmatpush.msra.mxu0 %v751
    %1649 = vmatpush.msra.mxu0 %v735
    %1650 = vmatpush.msra.mxu0 %v719
    %1651 = vmatpush.msra.mxu0 %v703
    %1652 = vmatpush.msra.mxu0 %v687
    %1653 = vmatpush.msra.mxu0 %v671
    %1654 = vmatpush.msra.mxu0 %v655
    %1655 = vmatpush.msra.mxu0 %v639
    %1656 = vmatpush.msra.mxu0 %v623
    %1657 = vmatmul.f32.gmra.mxu0 %v97
    %v1658 = vpop.f32.mrf.mxu0
    %v1659 = vadd.f32 %v1636, %v1658
    %1660 = vmatmul.f32.gmra.mxu0 %v100
    %v1661 = vpop.f32.mrf.mxu0
    %v1662 = vadd.f32 %v1639, %v1661
    %1663 = vdwg.mxu0
    %1664 = vmatpush.msra.mxu0 %v352
    %1665 = vmatpush.msra.mxu0 %v336
    %1666 = vmatpush.msra.mxu0 %v320
    %1667 = vmatpush.msra.mxu0 %v304
    %1668 = vmatpush.msra.mxu0 %v288
    %1669 = vmatpush.msra.mxu0 %v272
    %1670 = vmatpush.msra.mxu0 %v256
    %1671 = vmatpush.msra.mxu0 %v240
    %1672 = vmatpush.msra.mxu0 %v224
    %1673 = vmatpush.msra.mxu0 %v208
    %1674 = vmatpush.msra.mxu0 %v192
    %1675 = vmatpush.msra.mxu0 %v176
    %1676 = vmatpush.msra.mxu0 %v160
    %1677 = vmatpush.msra.mxu0 %v144
    %1678 = vmatpush.msra.mxu0 %v128
    %1679 = vmatpush.msra.mxu0 %v112
    %1680 = vmatmul.f32.gmra.mxu0 %v95
    %v1681 = vpop.f32.mrf.mxu0
    %v1682 = vadd.f32 %v884, %v1681
    %1683 = vmatmul.f32.gmra.mxu0 %v98
    %v1684 = vpop.f32.mrf.mxu0
    %v1685 = vadd.f32 %v884, %v1684
    %1686 = vdwg.mxu0
    %1687 = vmatpush.msra.mxu0 %v608
    %1688 = vmatpush.msra.mxu0 %v592
    %1689 = vmatpush.msra.mxu0 %v576
    %1690 = vmatpush.msra.mxu0 %v560
    %1691 = vmatpush.msra.mxu0 %v544
    %1692 = vmatpush.msra.mxu0 %v528
    %1693 = vmatpush.msra.mxu0 %v512
    %1694 = vmatpush.msra.mxu0 %v496
    %1695 = vmatpush.msra.mxu0 %v480
    %1696 = vmatpush.msra.mxu0 %v464
    %1697 = vmatpush.msra.mxu0 %v448
    %1698 = vmatpush.msra.mxu0 %v432
    %1699 = vmatpush.msra.mxu0 %v416
    %1700 = vmatpush.msra.mxu0 %v400
    %1701 = vmatpush.msra.mxu0 %v384
    %1702 = vmatpush.msra.mxu0 %v368
    %1703 = vmatmul.f32.gmra.mxu0 %v96
    %v1704 = vpop.f32.mrf.mxu0
    %v1705 = vadd.f32 %v1682, %v1704
    %1706 = vmatmul.f32.gmra.mxu0 %v99
    %v1707 = vpop.f32.mrf.mxu0
    %v1708 = vadd.f32 %v1685, %v1707
    %1709 = vdwg.mxu0
    %1710 = vmatpush.msra.mxu0 %v864
    %1711 = vmatpush.msra.mxu0 %v848
    %1712 = vmatpush.msra.mxu0 %v832
    %1713 = vmatpush.msra.mxu0 %v816
    %1714 = vmatpush.msra.mxu0 %v800
    %1715 = vmatpush.msra.mxu0 %v784
    %1716 = vmatpush.msra.mxu0 %v768
    %1717 = vmatpush.msra.mxu0 %v752
    %1718 = vmatpush.msra.mxu0 %v736
    %1719 = vmatpush.msra.mxu0 %v720
    %1720 = vmatpush.msra.mxu0 %v704
    %1721 = vmatpush.msra.mxu0 %v688
    %1722 = vmatpush.msra.mxu0 %v672
    %1723 = vmatpush.msra.mxu0 %v656
    %1724 = vmatpush.msra.mxu0 %v640
    %1725 = vmatpush.msra.mxu0 %v624
    %1726 = vmatmul.f32.gmra.mxu0 %v97
    %v1727 = vpop.f32.mrf.mxu0
    %v1728 = vadd.f32 %v1705, %v1727
    %1729 = vmatmul.f32.gmra.mxu0 %v100
    %v1730 = vpop.f32.mrf.mxu0
    %v1731 = vadd.f32 %v1708, %v1730
    %1732 = vdwg.mxu0
    %1733 = vmatpush.msra.mxu0 %v353
    %1734 = vmatpush.msra.mxu0 %v337
    %1735 = vmatpush.msra.mxu0 %v321
    %1736 = vmatpush.msra.mxu0 %v305
    %1737 = vmatpush.msra.mxu0 %v289
    %1738 = vmatpush.msra.mxu0 %v273
    %1739 = vmatpush.msra.mxu0 %v257
    %1740 = vmatpush.msra.mxu0 %v241
    %1741 = vmatpush.msra.mxu0 %v225
    %1742 = vmatpush.msra.mxu0 %v209
    %1743 = vmatpush.msra.mxu0 %v193
    %1744 = vmatpush.msra.mxu0 %v177
    %1745 = vmatpush.msra.mxu0 %v161
    %1746 = vmatpush.msra.mxu0 %v145
    %1747 = vmatpush.msra.mxu0 %v129
    %1748 = vmatpush.msra.mxu0 %v113
    %1749 = vmatmul.f32.gmra.mxu0 %v95
    %v1750 = vpop.f32.mrf.mxu0
    %v1751 = vadd.f32 %v885, %v1750
    %1752 = vmatmul.f32.gmra.mxu0 %v98
    %v1753 = vpop.f32.mrf.mxu0
    %v1754 = vadd.f32 %v885, %v1753
    %1755 = vdwg.mxu0
    %1756 = vmatpush.msra.mxu0 %v609
    %1757 = vmatpush.msra.mxu0 %v593
    %1758 = vmatpush.msra.mxu0 %v577
    %1759 = vmatpush.msra.mxu0 %v561
    %1760 = vmatpush.msra.mxu0 %v545
    %1761 = vmatpush.msra.mxu0 %v529
    %1762 = vmatpush.msra.mxu0 %v513
    %1763 = vmatpush.msra.mxu0 %v497
    %1764 = vmatpush.msra.mxu0 %v481
    %1765 = vmatpush.msra.mxu0 %v465
    %1766 = vmatpush.msra.mxu0 %v449
    %1767 = vmatpush.msra.mxu0 %v433
    %1768 = vmatpush.msra.mxu0 %v417
    %1769 = vmatpush.msra.mxu0 %v401
    %1770 = vmatpush.msra.mxu0 %v385
    %1771 = vmatpush.msra.mxu0 %v369
    %1772 = vmatmul.f32.gmra.mxu0 %v96
    %v1773 = vpop.f32.mrf.mxu0
    %v1774 = vadd.f32 %v1751, %v1773
    %1775 = vmatmul.f32.gmra.mxu0 %v99
    %v1776 = vpop.f32.mrf.mxu0
    %v1777 = vadd.f32 %v1754, %v1776
    %1778 = vdwg.mxu0
    %1779 = vmatpush.msra.mxu0 %v865
    %1780 = vmatpush.msra.mxu0 %v849
    %1781 = vmatpush.msra.mxu0 %v833
    %1782 = vmatpush.msra.mxu0 %v817
    %1783 = vmatpush.msra.mxu0 %v801
    %1784 = vmatpush.msra.mxu0 %v785
    %1785 = vmatpush.msra.mxu0 %v769
    %1786 = vmatpush.msra.mxu0 %v753
    %1787 = vmatpush.msra.mxu0 %v737
    %1788 = vmatpush.msra.mxu0 %v721
    %1789 = vmatpush.msra.mxu0 %v705
    %1790 = vmatpush.msra.mxu0 %v689
    %1791 = vmatpush.msra.mxu0 %v673
    %1792 = vmatpush.msra.mxu0 %v657
    %1793 = vmatpush.msra.mxu0 %v641
    %1794 = vmatpush.msra.mxu0 %v625
    %1795 = vmatmul.f32.gmra.mxu0 %v97
    %v1796 = vpop.f32.mrf.mxu0
    %v1797 = vadd.f32 %v1774, %v1796
    %1798 = vmatmul.f32.gmra.mxu0 %v100
    %v1799 = vpop.f32.mrf.mxu0
    %v1800 = vadd.f32 %v1777, %v1799
    %1801 = vdwg.mxu0
    %1802 = vmatpush.msra.mxu0 %v354
    %1803 = vmatpush.msra.mxu0 %v338
    %1804 = vmatpush.msra.mxu0 %v322
    %1805 = vmatpush.msra.mxu0 %v306
    %1806 = vmatpush.msra.mxu0 %v290
    %1807 = vmatpush.msra.mxu0 %v274
    %1808 = vmatpush.msra.mxu0 %v258
    %1809 = vmatpush.msra.mxu0 %v242
    %1810 = vmatpush.msra.mxu0 %v226
    %1811 = vmatpush.msra.mxu0 %v210
    %1812 = vmatpush.msra.mxu0 %v194
    %1813 = vmatpush.msra.mxu0 %v178
    %1814 = vmatpush.msra.mxu0 %v162
    %1815 = vmatpush.msra.mxu0 %v146
    %1816 = vmatpush.msra.mxu0 %v130
    %1817 = vmatpush.msra.mxu0 %v114
    %1818 = vmatmul.f32.gmra.mxu0 %v95
    %v1819 = vpop.f32.mrf.mxu0
    %v1820 = vadd.f32 %v886, %v1819
    %1821 = vmatmul.f32.gmra.mxu0 %v98
    %v1822 = vpop.f32.mrf.mxu0
    %v1823 = vadd.f32 %v886, %v1822
    %1824 = vdwg.mxu0
    %1825 = vmatpush.msra.mxu0 %v610
    %1826 = vmatpush.msra.mxu0 %v594
    %1827 = vmatpush.msra.mxu0 %v578
    %1828 = vmatpush.msra.mxu0 %v562
    %1829 = vmatpush.msra.mxu0 %v546
    %1830 = vmatpush.msra.mxu0 %v530
    %1831 = vmatpush.msra.mxu0 %v514
    %1832 = vmatpush.msra.mxu0 %v498
    %1833 = vmatpush.msra.mxu0 %v482
    %1834 = vmatpush.msra.mxu0 %v466
    %1835 = vmatpush.msra.mxu0 %v450
    %1836 = vmatpush.msra.mxu0 %v434
    %1837 = vmatpush.msra.mxu0 %v418
    %1838 = vmatpush.msra.mxu0 %v402
    %1839 = vmatpush.msra.mxu0 %v386
    %1840 = vmatpush.msra.mxu0 %v370
    %1841 = vmatmul.f32.gmra.mxu0 %v96
    %v1842 = vpop.f32.mrf.mxu0
    %v1843 = vadd.f32 %v1820, %v1842
    %1844 = vmatmul.f32.gmra.mxu0 %v99
    %v1845 = vpop.f32.mrf.mxu0
    %v1846 = vadd.f32 %v1823, %v1845
    %1847 = vdwg.mxu0
    %1848 = vmatpush.msra.mxu0 %v866
    %1849 = vmatpush.msra.mxu0 %v850
    %1850 = vmatpush.msra.mxu0 %v834
    %1851 = vmatpush.msra.mxu0 %v818
    %1852 = vmatpush.msra.mxu0 %v802
    %1853 = vmatpush.msra.mxu0 %v786
    %1854 = vmatpush.msra.mxu0 %v770
    %1855 = vmatpush.msra.mxu0 %v754
    %1856 = vmatpush.msra.mxu0 %v738
    %1857 = vmatpush.msra.mxu0 %v722
    %1858 = vmatpush.msra.mxu0 %v706
    %1859 = vmatpush.msra.mxu0 %v690
    %1860 = vmatpush.msra.mxu0 %v674
    %1861 = vmatpush.msra.mxu0 %v658
    %1862 = vmatpush.msra.mxu0 %v642
    %1863 = vmatpush.msra.mxu0 %v626
    %1864 = vmatmul.f32.gmra.mxu0 %v97
    %v1865 = vpop.f32.mrf.mxu0
    %v1866 = vadd.f32 %v1843, %v1865
    %1867 = vmatmul.f32.gmra.mxu0 %v100
    %v1868 = vpop.f32.mrf.mxu0
    %v1869 = vadd.f32 %v1846, %v1868
    %1870 = vdwg.mxu0
    %1871 = vmatpush.msra.mxu0 %v355
    %1872 = vmatpush.msra.mxu0 %v339
    %1873 = vmatpush.msra.mxu0 %v323
    %1874 = vmatpush.msra.mxu0 %v307
    %1875 = vmatpush.msra.mxu0 %v291
    %1876 = vmatpush.msra.mxu0 %v275
    %1877 = vmatpush.msra.mxu0 %v259
    %1878 = vmatpush.msra.mxu0 %v243
    %1879 = vmatpush.msra.mxu0 %v227
    %1880 = vmatpush.msra.mxu0 %v211
    %1881 = vmatpush.msra.mxu0 %v195
    %1882 = vmatpush.msra.mxu0 %v179
    %1883 = vmatpush.msra.mxu0 %v163
    %1884 = vmatpush.msra.mxu0 %v147
    %1885 = vmatpush.msra.mxu0 %v131
    %1886 = vmatpush.msra.mxu0 %v115
    %1887 = vmatmul.f32.gmra.mxu0 %v95
    %v1888 = vpop.f32.mrf.mxu0
    %v1889 = vadd.f32 %v887, %v1888
    %1890 = vmatmul.f32.gmra.mxu0 %v98
    %v1891 = vpop.f32.mrf.mxu0
    %v1892 = vadd.f32 %v887, %v1891
    %1893 = vdwg.mxu0
    %1894 = vmatpush.msra.mxu0 %v611
    %1895 = vmatpush.msra.mxu0 %v595
    %1896 = vmatpush.msra.mxu0 %v579
    %1897 = vmatpush.msra.mxu0 %v563
    %1898 = vmatpush.msra.mxu0 %v547
    %1899 = vmatpush.msra.mxu0 %v531
    %1900 = vmatpush.msra.mxu0 %v515
    %1901 = vmatpush.msra.mxu0 %v499
    %1902 = vmatpush.msra.mxu0 %v483
    %1903 = vmatpush.msra.mxu0 %v467
    %1904 = vmatpush.msra.mxu0 %v451
    %1905 = vmatpush.msra.mxu0 %v435
    %1906 = vmatpush.msra.mxu0 %v419
    %1907 = vmatpush.msra.mxu0 %v403
    %1908 = vmatpush.msra.mxu0 %v387
    %1909 = vmatpush.msra.mxu0 %v371
    %1910 = vmatmul.f32.gmra.mxu0 %v96
    %v1911 = vpop.f32.mrf.mxu0
    %v1912 = vadd.f32 %v1889, %v1911
    %1913 = vmatmul.f32.gmra.mxu0 %v99
    %v1914 = vpop.f32.mrf.mxu0
    %v1915 = vadd.f32 %v1892, %v1914
    %1916 = vdwg.mxu0
    %1917 = vmatpush.msra.mxu0 %v867
    %1918 = vmatpush.msra.mxu0 %v851
    %1919 = vmatpush.msra.mxu0 %v835
    %1920 = vmatpush.msra.mxu0 %v819
    %1921 = vmatpush.msra.mxu0 %v803
    %1922 = vmatpush.msra.mxu0 %v787
    %1923 = vmatpush.msra.mxu0 %v771
    %1924 = vmatpush.msra.mxu0 %v755
    %1925 = vmatpush.msra.mxu0 %v739
    %1926 = vmatpush.msra.mxu0 %v723
    %1927 = vmatpush.msra.mxu0 %v707
    %1928 = vmatpush.msra.mxu0 %v691
    %1929 = vmatpush.msra.mxu0 %v675
    %1930 = vmatpush.msra.mxu0 %v659
    %1931 = vmatpush.msra.mxu0 %v643
    %1932 = vmatpush.msra.mxu0 %v627
    %1933 = vmatmul.f32.gmra.mxu0 %v97
    %v1934 = vpop.f32.mrf.mxu0
    %v1935 = vadd.f32 %v1912, %v1934
    %1936 = vmatmul.f32.gmra.mxu0 %v100
    %v1937 = vpop.f32.mrf.mxu0
    %v1938 = vadd.f32 %v1915, %v1937
    %1939 = vdwg.mxu0
    %1940 = vmatpush.msra.mxu0 %v356
    %1941 = vmatpush.msra.mxu0 %v340
    %1942 = vmatpush.msra.mxu0 %v324
    %1943 = vmatpush.msra.mxu0 %v308
    %1944 = vmatpush.msra.mxu0 %v292
    %1945 = vmatpush.msra.mxu0 %v276
    %1946 = vmatpush.msra.mxu0 %v260
    %1947 = vmatpush.msra.mxu0 %v244
    %1948 = vmatpush.msra.mxu0 %v228
    %1949 = vmatpush.msra.mxu0 %v212
    %1950 = vmatpush.msra.mxu0 %v196
    %1951 = vmatpush.msra.mxu0 %v180
    %1952 = vmatpush.msra.mxu0 %v164
    %1953 = vmatpush.msra.mxu0 %v148
    %1954 = vmatpush.msra.mxu0 %v132
    %1955 = vmatpush.msra.mxu0 %v116
    %1956 = vmatmul.f32.gmra.mxu0 %v95
    %v1957 = vpop.f32.mrf.mxu0
    %v1958 = vadd.f32 %v888, %v1957
    %1959 = vmatmul.f32.gmra.mxu0 %v98
    %v1960 = vpop.f32.mrf.mxu0
    %v1961 = vadd.f32 %v888, %v1960
    %1962 = vdwg.mxu0
    %1963 = vmatpush.msra.mxu0 %v612
    %1964 = vmatpush.msra.mxu0 %v596
    %1965 = vmatpush.msra.mxu0 %v580
    %1966 = vmatpush.msra.mxu0 %v564
    %1967 = vmatpush.msra.mxu0 %v548
    %1968 = vmatpush.msra.mxu0 %v532
    %1969 = vmatpush.msra.mxu0 %v516
    %1970 = vmatpush.msra.mxu0 %v500
    %1971 = vmatpush.msra.mxu0 %v484
    %1972 = vmatpush.msra.mxu0 %v468
    %1973 = vmatpush.msra.mxu0 %v452
    %1974 = vmatpush.msra.mxu0 %v436
    %1975 = vmatpush.msra.mxu0 %v420
    %1976 = vmatpush.msra.mxu0 %v404
    %1977 = vmatpush.msra.mxu0 %v388
    %1978 = vmatpush.msra.mxu0 %v372
    %1979 = vmatmul.f32.gmra.mxu0 %v96
    %v1980 = vpop.f32.mrf.mxu0
    %v1981 = vadd.f32 %v1958, %v1980
    %1982 = vmatmul.f32.gmra.mxu0 %v99
    %v1983 = vpop.f32.mrf.mxu0
    %v1984 = vadd.f32 %v1961, %v1983
    %1985 = vdwg.mxu0
    %1986 = vmatpush.msra.mxu0 %v868
    %1987 = vmatpush.msra.mxu0 %v852
    %1988 = vmatpush.msra.mxu0 %v836
    %1989 = vmatpush.msra.mxu0 %v820
    %1990 = vmatpush.msra.mxu0 %v804
    %1991 = vmatpush.msra.mxu0 %v788
    %1992 = vmatpush.msra.mxu0 %v772
    %1993 = vmatpush.msra.mxu0 %v756
    %1994 = vmatpush.msra.mxu0 %v740
    %1995 = vmatpush.msra.mxu0 %v724
    %1996 = vmatpush.msra.mxu0 %v708
    %1997 = vmatpush.msra.mxu0 %v692
    %1998 = vmatpush.msra.mxu0 %v676
    %1999 = vmatpush.msra.mxu0 %v660
    %2000 = vmatpush.msra.mxu0 %v644
    %2001 = vmatpush.msra.mxu0 %v628
    %2002 = vmatmul.f32.gmra.mxu0 %v97
    %v2003 = vpop.f32.mrf.mxu0
    %v2004 = vadd.f32 %v1981, %v2003
    %2005 = vmatmul.f32.gmra.mxu0 %v100
    %v2006 = vpop.f32.mrf.mxu0
    %v2007 = vadd.f32 %v1984, %v2006
    %2008 = vdwg.mxu0
    %v2009 = vmax.f32 %v969, 0.0
    %v2010 = vmax.f32 %v1038, 0.0
    %v2011 = vmax.f32 %v1107, 0.0
    %v2012 = vmax.f32 %v1176, 0.0
    %v2013 = vmax.f32 %v1245, 0.0
    %v2014 = vmax.f32 %v1314, 0.0
    %v2015 = vmax.f32 %v1383, 0.0
    %v2016 = vmax.f32 %v1452, 0.0
    %v2017 = vmax.f32 %v1521, 0.0
    %v2018 = vmax.f32 %v1590, 0.0
    %v2019 = vmax.f32 %v1659, 0.0
    %v2020 = vmax.f32 %v1728, 0.0
    %v2021 = vmax.f32 %v1797, 0.0
    %v2022 = vmax.f32 %v1866, 0.0
    %v2023 = vmax.f32 %v1935, 0.0
    %v2024 = vmax.f32 %v2004, 0.0
    %v2025 = vmax.f32 %v972, 0.0
    %v2026 = vmax.f32 %v1041, 0.0
    %v2027 = vmax.f32 %v1110, 0.0
    %v2028 = vmax.f32 %v1179, 0.0
    %v2029 = vmax.f32 %v1248, 0.0
    %v2030 = vmax.f32 %v1317, 0.0
    %v2031 = vmax.f32 %v1386, 0.0
    %v2032 = vmax.f32 %v1455, 0.0
    %v2033 = vmax.f32 %v1524, 0.0
    %v2034 = vmax.f32 %v1593, 0.0
    %v2035 = vmax.f32 %v1662, 0.0
    %v2036 = vmax.f32 %v1731, 0.0
    %v2037 = vmax.f32 %v1800, 0.0
    %v2038 = vmax.f32 %v1869, 0.0
    %v2039 = vmax.f32 %v1938, 0.0
    %v2040 = vmax.f32 %v2007, 0.0
    %v2041 = vld [vmem:[#allocation8] sm:$0xff]
    %v2042 = vld [vmem:[#allocation8 + $0x8] sm:$0xff]
    %v2043 = vld [vmem:[#allocation8 + $0x10] sm:$0xff]
    %v2044 = vld [vmem:[#allocation8 + $0x18] sm:$0xff]
    %v2045 = vld [vmem:[#allocation8 + $0x20] sm:$0xff]
    %v2046 = vld [vmem:[#allocation8 + $0x28] sm:$0xff]
    %v2047 = vld [vmem:[#allocation8 + $0x30] sm:$0xff]
    %v2048 = vld [vmem:[#allocation8 + $0x38] sm:$0xff]
    %v2049 = vld [vmem:[#allocation8 + $0x40] sm:$0xff]
    %v2050 = vld [vmem:[#allocation8 + $0x48] sm:$0xff]
    %v2051 = vld [vmem:[#allocation8 + $0x50] sm:$0xff]
    %v2052 = vld [vmem:[#allocation8 + $0x58] sm:$0xff]
    %v2053 = vld [vmem:[#allocation8 + $0x60] sm:$0xff]
    %v2054 = vld [vmem:[#allocation8 + $0x68] sm:$0xff]
    %v2055 = vld [vmem:[#allocation8 + $0x70] sm:$0xff]
    %v2056 = vld [vmem:[#allocation8 + $0x78] sm:$0xff]
    %v2057 = vld [vmem:[#allocation8 + $0x80] sm:$0xff]
    %v2058 = vld [vmem:[#allocation8 + $0x88] sm:$0xff]
    %v2059 = vld [vmem:[#allocation8 + $0x90] sm:$0xff]
    %v2060 = vld [vmem:[#allocation8 + $0x98] sm:$0xff]
    %v2061 = vld [vmem:[#allocation8 + $0xa0] sm:$0xff]
    %v2062 = vld [vmem:[#allocation8 + $0xa8] sm:$0xff]
    %v2063 = vld [vmem:[#allocation8 + $0xb0] sm:$0xff]
    %v2064 = vld [vmem:[#allocation8 + $0xb8] sm:$0xff]
    %v2065 = vld [vmem:[#allocation8 + $0xc0] sm:$0xff]
    %v2066 = vld [vmem:[#allocation8 + $0xc8] sm:$0xff]
    %v2067 = vld [vmem:[#allocation8 + $0xd0] sm:$0xff]
    %v2068 = vld [vmem:[#allocation8 + $0xd8] sm:$0xff]
    %v2069 = vld [vmem:[#allocation8 + $0xe0] sm:$0xff]
    %v2070 = vld [vmem:[#allocation8 + $0xe8] sm:$0xff]
    %v2071 = vld [vmem:[#allocation8 + $0xf0] sm:$0xff]
    %v2072 = vld [vmem:[#allocation8 + $0xf8] sm:$0xff]
    %v2073 = vld [vmem:[#allocation8 + $0x100] sm:$0xff]
    %v2074 = vld [vmem:[#allocation8 + $0x108] sm:$0xff]
    %v2075 = vld [vmem:[#allocation8 + $0x110] sm:$0xff]
    %v2076 = vld [vmem:[#allocation8 + $0x118] sm:$0xff]
    %v2077 = vld [vmem:[#allocation8 + $0x120] sm:$0xff]
    %v2078 = vld [vmem:[#allocation8 + $0x128] sm:$0xff]
    %v2079 = vld [vmem:[#allocation8 + $0x130] sm:$0xff]
    %v2080 = vld [vmem:[#allocation8 + $0x138] sm:$0xff]
    %v2081 = vld [vmem:[#allocation8 + $0x140] sm:$0xff]
    %v2082 = vld [vmem:[#allocation8 + $0x148] sm:$0xff]
    %v2083 = vld [vmem:[#allocation8 + $0x150] sm:$0xff]
    %v2084 = vld [vmem:[#allocation8 + $0x158] sm:$0xff]
    %v2085 = vld [vmem:[#allocation8 + $0x160] sm:$0xff]
    %v2086 = vld [vmem:[#allocation8 + $0x168] sm:$0xff]
    %v2087 = vld [vmem:[#allocation8 + $0x170] sm:$0xff]
    %v2088 = vld [vmem:[#allocation8 + $0x178] sm:$0xff]
    %v2089 = vld [vmem:[#allocation8 + $0x180] sm:$0xff]
    %v2090 = vld [vmem:[#allocation8 + $0x188] sm:$0xff]
    %v2091 = vld [vmem:[#allocation8 + $0x190] sm:$0xff]
    %v2092 = vld [vmem:[#allocation8 + $0x198] sm:$0xff]
    %v2093 = vld [vmem:[#allocation8 + $0x1a0] sm:$0xff]
    %v2094 = vld [vmem:[#allocation8 + $0x1a8] sm:$0xff]
    %v2095 = vld [vmem:[#allocation8 + $0x1b0] sm:$0xff]
    %v2096 = vld [vmem:[#allocation8 + $0x1b8] sm:$0xff]
    %v2097 = vld [vmem:[#allocation8 + $0x1c0] sm:$0xff]
    %v2098 = vld [vmem:[#allocation8 + $0x1c8] sm:$0xff]
    %v2099 = vld [vmem:[#allocation8 + $0x1d0] sm:$0xff]
    %v2100 = vld [vmem:[#allocation8 + $0x1d8] sm:$0xff]
    %v2101 = vld [vmem:[#allocation8 + $0x1e0] sm:$0xff]
    %v2102 = vld [vmem:[#allocation8 + $0x1e8] sm:$0xff]
    %v2103 = vld [vmem:[#allocation8 + $0x1f0] sm:$0xff]
    %v2104 = vld [vmem:[#allocation8 + $0x1f8] sm:$0xff]
    %v2105 = vld [vmem:[#allocation8 + $0x200] sm:$0xff]
    %v2106 = vld [vmem:[#allocation8 + $0x208] sm:$0xff]
    %v2107 = vld [vmem:[#allocation8 + $0x210] sm:$0xff]
    %v2108 = vld [vmem:[#allocation8 + $0x218] sm:$0xff]
    %v2109 = vld [vmem:[#allocation8 + $0x220] sm:$0xff]
    %v2110 = vld [vmem:[#allocation8 + $0x228] sm:$0xff]
    %v2111 = vld [vmem:[#allocation8 + $0x230] sm:$0xff]
    %v2112 = vld [vmem:[#allocation8 + $0x238] sm:$0xff]
    %v2113 = vld [vmem:[#allocation8 + $0x240] sm:$0xff]
    %v2114 = vld [vmem:[#allocation8 + $0x248] sm:$0xff]
    %v2115 = vld [vmem:[#allocation8 + $0x250] sm:$0xff]
    %v2116 = vld [vmem:[#allocation8 + $0x258] sm:$0xff]
    %v2117 = vld [vmem:[#allocation8 + $0x260] sm:$0xff]
    %v2118 = vld [vmem:[#allocation8 + $0x268] sm:$0xff]
    %v2119 = vld [vmem:[#allocation8 + $0x270] sm:$0xff]
    %v2120 = vld [vmem:[#allocation8 + $0x278] sm:$0xff]
    %v2121 = vld [vmem:[#allocation8 + $0x280] sm:$0xff]
    %v2122 = vld [vmem:[#allocation8 + $0x288] sm:$0xff]
    %v2123 = vld [vmem:[#allocation8 + $0x290] sm:$0xff]
    %v2124 = vld [vmem:[#allocation8 + $0x298] sm:$0xff]
    %v2125 = vld [vmem:[#allocation8 + $0x2a0] sm:$0xff]
    %v2126 = vld [vmem:[#allocation8 + $0x2a8] sm:$0xff]
    %v2127 = vld [vmem:[#allocation8 + $0x2b0] sm:$0xff]
    %v2128 = vld [vmem:[#allocation8 + $0x2b8] sm:$0xff]
    %v2129 = vld [vmem:[#allocation8 + $0x2c0] sm:$0xff]
    %v2130 = vld [vmem:[#allocation8 + $0x2c8] sm:$0xff]
    %v2131 = vld [vmem:[#allocation8 + $0x2d0] sm:$0xff]
    %v2132 = vld [vmem:[#allocation8 + $0x2d8] sm:$0xff]
    %v2133 = vld [vmem:[#allocation8 + $0x2e0] sm:$0xff]
    %v2134 = vld [vmem:[#allocation8 + $0x2e8] sm:$0xff]
    %v2135 = vld [vmem:[#allocation8 + $0x2f0] sm:$0xff]
    %v2136 = vld [vmem:[#allocation8 + $0x2f8] sm:$0xff]
    %v2137 = vld [vmem:[#allocation8 + $0x300] sm:$0xff]
    %v2138 = vld [vmem:[#allocation8 + $0x308] sm:$0xff]
    %v2139 = vld [vmem:[#allocation8 + $0x310] sm:$0xff]
    %v2140 = vld [vmem:[#allocation8 + $0x318] sm:$0xff]
    %v2141 = vld [vmem:[#allocation8 + $0x320] sm:$0xff]
    %v2142 = vld [vmem:[#allocation8 + $0x328] sm:$0xff]
    %v2143 = vld [vmem:[#allocation8 + $0x330] sm:$0xff]
    %v2144 = vld [vmem:[#allocation8 + $0x338] sm:$0xff]
    %v2145 = vld [vmem:[#allocation8 + $0x340] sm:$0xff]
    %v2146 = vld [vmem:[#allocation8 + $0x348] sm:$0xff]
    %v2147 = vld [vmem:[#allocation8 + $0x350] sm:$0xff]
    %v2148 = vld [vmem:[#allocation8 + $0x358] sm:$0xff]
    %v2149 = vld [vmem:[#allocation8 + $0x360] sm:$0xff]
    %v2150 = vld [vmem:[#allocation8 + $0x368] sm:$0xff]
    %v2151 = vld [vmem:[#allocation8 + $0x370] sm:$0xff]
    %v2152 = vld [vmem:[#allocation8 + $0x378] sm:$0xff]
    %v2153 = vld [vmem:[#allocation8 + $0x380] sm:$0xff]
    %v2154 = vld [vmem:[#allocation8 + $0x388] sm:$0xff]
    %v2155 = vld [vmem:[#allocation8 + $0x390] sm:$0xff]
    %v2156 = vld [vmem:[#allocation8 + $0x398] sm:$0xff]
    %v2157 = vld [vmem:[#allocation8 + $0x3a0] sm:$0xff]
    %v2158 = vld [vmem:[#allocation8 + $0x3a8] sm:$0xff]
    %v2159 = vld [vmem:[#allocation8 + $0x3b0] sm:$0xff]
    %v2160 = vld [vmem:[#allocation8 + $0x3b8] sm:$0xff]
    %v2161 = vld [vmem:[#allocation8 + $0x3c0] sm:$0xff]
    %v2162 = vld [vmem:[#allocation8 + $0x3c8] sm:$0xff]
    %v2163 = vld [vmem:[#allocation8 + $0x3d0] sm:$0xff]
    %v2164 = vld [vmem:[#allocation8 + $0x3d8] sm:$0xff]
    %v2165 = vld [vmem:[#allocation8 + $0x3e0] sm:$0xff]
    %v2166 = vld [vmem:[#allocation8 + $0x3e8] sm:$0xff]
    %v2167 = vld [vmem:[#allocation8 + $0x3f0] sm:$0xff]
    %v2168 = vld [vmem:[#allocation8 + $0x3f8] sm:$0xff]
    %v2169 = vld [vmem:[#allocation8 + $0x400] sm:$0xff]
    %v2170 = vld [vmem:[#allocation8 + $0x408] sm:$0xff]
    %v2171 = vld [vmem:[#allocation8 + $0x410] sm:$0xff]
    %v2172 = vld [vmem:[#allocation8 + $0x418] sm:$0xff]
    %v2173 = vld [vmem:[#allocation8 + $0x420] sm:$0xff]
    %v2174 = vld [vmem:[#allocation8 + $0x428] sm:$0xff]
    %v2175 = vld [vmem:[#allocation8 + $0x430] sm:$0xff]
    %v2176 = vld [vmem:[#allocation8 + $0x438] sm:$0xff]
    %v2177 = vld [vmem:[#allocation8 + $0x440] sm:$0xff]
    %v2178 = vld [vmem:[#allocation8 + $0x448] sm:$0xff]
    %v2179 = vld [vmem:[#allocation8 + $0x450] sm:$0xff]
    %v2180 = vld [vmem:[#allocation8 + $0x458] sm:$0xff]
    %v2181 = vld [vmem:[#allocation8 + $0x460] sm:$0xff]
    %v2182 = vld [vmem:[#allocation8 + $0x468] sm:$0xff]
    %v2183 = vld [vmem:[#allocation8 + $0x470] sm:$0xff]
    %v2184 = vld [vmem:[#allocation8 + $0x478] sm:$0xff]
    %v2185 = vld [vmem:[#allocation8 + $0x480] sm:$0xff]
    %v2186 = vld [vmem:[#allocation8 + $0x488] sm:$0xff]
    %v2187 = vld [vmem:[#allocation8 + $0x490] sm:$0xff]
    %v2188 = vld [vmem:[#allocation8 + $0x498] sm:$0xff]
    %v2189 = vld [vmem:[#allocation8 + $0x4a0] sm:$0xff]
    %v2190 = vld [vmem:[#allocation8 + $0x4a8] sm:$0xff]
    %v2191 = vld [vmem:[#allocation8 + $0x4b0] sm:$0xff]
    %v2192 = vld [vmem:[#allocation8 + $0x4b8] sm:$0xff]
    %v2193 = vld [vmem:[#allocation8 + $0x4c0] sm:$0xff]
    %v2194 = vld [vmem:[#allocation8 + $0x4c8] sm:$0xff]
    %v2195 = vld [vmem:[#allocation8 + $0x4d0] sm:$0xff]
    %v2196 = vld [vmem:[#allocation8 + $0x4d8] sm:$0xff]
    %v2197 = vld [vmem:[#allocation8 + $0x4e0] sm:$0xff]
    %v2198 = vld [vmem:[#allocation8 + $0x4e8] sm:$0xff]
    %v2199 = vld [vmem:[#allocation8 + $0x4f0] sm:$0xff]
    %v2200 = vld [vmem:[#allocation8 + $0x4f8] sm:$0xff]
    %v2201 = vld [vmem:[#allocation8 + $0x500] sm:$0xff]
    %v2202 = vld [vmem:[#allocation8 + $0x508] sm:$0xff]
    %v2203 = vld [vmem:[#allocation8 + $0x510] sm:$0xff]
    %v2204 = vld [vmem:[#allocation8 + $0x518] sm:$0xff]
    %v2205 = vld [vmem:[#allocation8 + $0x520] sm:$0xff]
    %v2206 = vld [vmem:[#allocation8 + $0x528] sm:$0xff]
    %v2207 = vld [vmem:[#allocation8 + $0x530] sm:$0xff]
    %v2208 = vld [vmem:[#allocation8 + $0x538] sm:$0xff]
    %v2209 = vld [vmem:[#allocation8 + $0x540] sm:$0xff]
    %v2210 = vld [vmem:[#allocation8 + $0x548] sm:$0xff]
    %v2211 = vld [vmem:[#allocation8 + $0x550] sm:$0xff]
    %v2212 = vld [vmem:[#allocation8 + $0x558] sm:$0xff]
    %v2213 = vld [vmem:[#allocation8 + $0x560] sm:$0xff]
    %v2214 = vld [vmem:[#allocation8 + $0x568] sm:$0xff]
    %v2215 = vld [vmem:[#allocation8 + $0x570] sm:$0xff]
    %v2216 = vld [vmem:[#allocation8 + $0x578] sm:$0xff]
    %v2217 = vld [vmem:[#allocation8 + $0x580] sm:$0xff]
    %v2218 = vld [vmem:[#allocation8 + $0x588] sm:$0xff]
    %v2219 = vld [vmem:[#allocation8 + $0x590] sm:$0xff]
    %v2220 = vld [vmem:[#allocation8 + $0x598] sm:$0xff]
    %v2221 = vld [vmem:[#allocation8 + $0x5a0] sm:$0xff]
    %v2222 = vld [vmem:[#allocation8 + $0x5a8] sm:$0xff]
    %v2223 = vld [vmem:[#allocation8 + $0x5b0] sm:$0xff]
    %v2224 = vld [vmem:[#allocation8 + $0x5b8] sm:$0xff]
    %v2225 = vld [vmem:[#allocation8 + $0x5c0] sm:$0xff]
    %v2226 = vld [vmem:[#allocation8 + $0x5c8] sm:$0xff]
    %v2227 = vld [vmem:[#allocation8 + $0x5d0] sm:$0xff]
    %v2228 = vld [vmem:[#allocation8 + $0x5d8] sm:$0xff]
    %v2229 = vld [vmem:[#allocation8 + $0x5e0] sm:$0xff]
    %v2230 = vld [vmem:[#allocation8 + $0x5e8] sm:$0xff]
    %v2231 = vld [vmem:[#allocation8 + $0x5f0] sm:$0xff]
    %v2232 = vld [vmem:[#allocation8 + $0x5f8] sm:$0xff]
    %v2233 = vld [vmem:[#allocation8 + $0x600] sm:$0xff]
    %v2234 = vld [vmem:[#allocation8 + $0x608] sm:$0xff]
    %v2235 = vld [vmem:[#allocation8 + $0x610] sm:$0xff]
    %v2236 = vld [vmem:[#allocation8 + $0x618] sm:$0xff]
    %v2237 = vld [vmem:[#allocation8 + $0x620] sm:$0xff]
    %v2238 = vld [vmem:[#allocation8 + $0x628] sm:$0xff]
    %v2239 = vld [vmem:[#allocation8 + $0x630] sm:$0xff]
    %v2240 = vld [vmem:[#allocation8 + $0x638] sm:$0xff]
    %v2241 = vld [vmem:[#allocation8 + $0x640] sm:$0xff]
    %v2242 = vld [vmem:[#allocation8 + $0x648] sm:$0xff]
    %v2243 = vld [vmem:[#allocation8 + $0x650] sm:$0xff]
    %v2244 = vld [vmem:[#allocation8 + $0x658] sm:$0xff]
    %v2245 = vld [vmem:[#allocation8 + $0x660] sm:$0xff]
    %v2246 = vld [vmem:[#allocation8 + $0x668] sm:$0xff]
    %v2247 = vld [vmem:[#allocation8 + $0x670] sm:$0xff]
    %v2248 = vld [vmem:[#allocation8 + $0x678] sm:$0xff]
    %v2249 = vld [vmem:[#allocation8 + $0x680] sm:$0xff]
    %v2250 = vld [vmem:[#allocation8 + $0x688] sm:$0xff]
    %v2251 = vld [vmem:[#allocation8 + $0x690] sm:$0xff]
    %v2252 = vld [vmem:[#allocation8 + $0x698] sm:$0xff]
    %v2253 = vld [vmem:[#allocation8 + $0x6a0] sm:$0xff]
    %v2254 = vld [vmem:[#allocation8 + $0x6a8] sm:$0xff]
    %v2255 = vld [vmem:[#allocation8 + $0x6b0] sm:$0xff]
    %v2256 = vld [vmem:[#allocation8 + $0x6b8] sm:$0xff]
    %v2257 = vld [vmem:[#allocation8 + $0x6c0] sm:$0xff]
    %v2258 = vld [vmem:[#allocation8 + $0x6c8] sm:$0xff]
    %v2259 = vld [vmem:[#allocation8 + $0x6d0] sm:$0xff]
    %v2260 = vld [vmem:[#allocation8 + $0x6d8] sm:$0xff]
    %v2261 = vld [vmem:[#allocation8 + $0x6e0] sm:$0xff]
    %v2262 = vld [vmem:[#allocation8 + $0x6e8] sm:$0xff]
    %v2263 = vld [vmem:[#allocation8 + $0x6f0] sm:$0xff]
    %v2264 = vld [vmem:[#allocation8 + $0x6f8] sm:$0xff]
    %v2265 = vld [vmem:[#allocation8 + $0x700] sm:$0xff]
    %v2266 = vld [vmem:[#allocation8 + $0x708] sm:$0xff]
    %v2267 = vld [vmem:[#allocation8 + $0x710] sm:$0xff]
    %v2268 = vld [vmem:[#allocation8 + $0x718] sm:$0xff]
    %v2269 = vld [vmem:[#allocation8 + $0x720] sm:$0xff]
    %v2270 = vld [vmem:[#allocation8 + $0x728] sm:$0xff]
    %v2271 = vld [vmem:[#allocation8 + $0x730] sm:$0xff]
    %v2272 = vld [vmem:[#allocation8 + $0x738] sm:$0xff]
    %v2273 = vld [vmem:[#allocation8 + $0x740] sm:$0xff]
    %v2274 = vld [vmem:[#allocation8 + $0x748] sm:$0xff]
    %v2275 = vld [vmem:[#allocation8 + $0x750] sm:$0xff]
    %v2276 = vld [vmem:[#allocation8 + $0x758] sm:$0xff]
    %v2277 = vld [vmem:[#allocation8 + $0x760] sm:$0xff]
    %v2278 = vld [vmem:[#allocation8 + $0x768] sm:$0xff]
    %v2279 = vld [vmem:[#allocation8 + $0x770] sm:$0xff]
    %v2280 = vld [vmem:[#allocation8 + $0x778] sm:$0xff]
    %v2281 = vld [vmem:[#allocation8 + $0x780] sm:$0xff]
    %v2282 = vld [vmem:[#allocation8 + $0x788] sm:$0xff]
    %v2283 = vld [vmem:[#allocation8 + $0x790] sm:$0xff]
    %v2284 = vld [vmem:[#allocation8 + $0x798] sm:$0xff]
    %v2285 = vld [vmem:[#allocation8 + $0x7a0] sm:$0xff]
    %v2286 = vld [vmem:[#allocation8 + $0x7a8] sm:$0xff]
    %v2287 = vld [vmem:[#allocation8 + $0x7b0] sm:$0xff]
    %v2288 = vld [vmem:[#allocation8 + $0x7b8] sm:$0xff]
    %v2289 = vld [vmem:[#allocation8 + $0x7c0] sm:$0xff]
    %v2290 = vld [vmem:[#allocation8 + $0x7c8] sm:$0xff]
    %v2291 = vld [vmem:[#allocation8 + $0x7d0] sm:$0xff]
    %v2292 = vld [vmem:[#allocation8 + $0x7d8] sm:$0xff]
    %v2293 = vld [vmem:[#allocation8 + $0x7e0] sm:$0xff]
    %v2294 = vld [vmem:[#allocation8 + $0x7e8] sm:$0xff]
    %v2295 = vld [vmem:[#allocation8 + $0x7f0] sm:$0xff]
    %v2296 = vld [vmem:[#allocation8 + $0x7f8] sm:$0xff]
    %v2297 = vld [vmem:[#allocation8 + $0x800] sm:$0xff]
    %v2298 = vld [vmem:[#allocation8 + $0x808] sm:$0xff]
    %v2299 = vld [vmem:[#allocation8 + $0x810] sm:$0xff]
    %v2300 = vld [vmem:[#allocation8 + $0x818] sm:$0xff]
    %v2301 = vld [vmem:[#allocation8 + $0x820] sm:$0xff]
    %v2302 = vld [vmem:[#allocation8 + $0x828] sm:$0xff]
    %v2303 = vld [vmem:[#allocation8 + $0x830] sm:$0xff]
    %v2304 = vld [vmem:[#allocation8 + $0x838] sm:$0xff]
    %v2305 = vld [vmem:[#allocation8 + $0x840] sm:$0xff]
    %v2306 = vld [vmem:[#allocation8 + $0x848] sm:$0xff]
    %v2307 = vld [vmem:[#allocation8 + $0x850] sm:$0xff]
    %v2308 = vld [vmem:[#allocation8 + $0x858] sm:$0xff]
    %v2309 = vld [vmem:[#allocation8 + $0x860] sm:$0xff]
    %v2310 = vld [vmem:[#allocation8 + $0x868] sm:$0xff]
    %v2311 = vld [vmem:[#allocation8 + $0x870] sm:$0xff]
    %v2312 = vld [vmem:[#allocation8 + $0x878] sm:$0xff]
    %v2313 = vld [vmem:[#allocation8 + $0x880] sm:$0xff]
    %v2314 = vld [vmem:[#allocation8 + $0x888] sm:$0xff]
    %v2315 = vld [vmem:[#allocation8 + $0x890] sm:$0xff]
    %v2316 = vld [vmem:[#allocation8 + $0x898] sm:$0xff]
    %v2317 = vld [vmem:[#allocation8 + $0x8a0] sm:$0xff]
    %v2318 = vld [vmem:[#allocation8 + $0x8a8] sm:$0xff]
    %v2319 = vld [vmem:[#allocation8 + $0x8b0] sm:$0xff]
    %v2320 = vld [vmem:[#allocation8 + $0x8b8] sm:$0xff]
    %v2321 = vld [vmem:[#allocation8 + $0x8c0] sm:$0xff]
    %v2322 = vld [vmem:[#allocation8 + $0x8c8] sm:$0xff]
    %v2323 = vld [vmem:[#allocation8 + $0x8d0] sm:$0xff]
    %v2324 = vld [vmem:[#allocation8 + $0x8d8] sm:$0xff]
    %v2325 = vld [vmem:[#allocation8 + $0x8e0] sm:$0xff]
    %v2326 = vld [vmem:[#allocation8 + $0x8e8] sm:$0xff]
    %v2327 = vld [vmem:[#allocation8 + $0x8f0] sm:$0xff]
    %v2328 = vld [vmem:[#allocation8 + $0x8f8] sm:$0xff]
    %v2329 = vld [vmem:[#allocation8 + $0x900] sm:$0xff]
    %v2330 = vld [vmem:[#allocation8 + $0x908] sm:$0xff]
    %v2331 = vld [vmem:[#allocation8 + $0x910] sm:$0xff]
    %v2332 = vld [vmem:[#allocation8 + $0x918] sm:$0xff]
    %v2333 = vld [vmem:[#allocation8 + $0x920] sm:$0xff]
    %v2334 = vld [vmem:[#allocation8 + $0x928] sm:$0xff]
    %v2335 = vld [vmem:[#allocation8 + $0x930] sm:$0xff]
    %v2336 = vld [vmem:[#allocation8 + $0x938] sm:$0xff]
    %v2337 = vld [vmem:[#allocation8 + $0x940] sm:$0xff]
    %v2338 = vld [vmem:[#allocation8 + $0x948] sm:$0xff]
    %v2339 = vld [vmem:[#allocation8 + $0x950] sm:$0xff]
    %v2340 = vld [vmem:[#allocation8 + $0x958] sm:$0xff]
    %v2341 = vld [vmem:[#allocation8 + $0x960] sm:$0xff]
    %v2342 = vld [vmem:[#allocation8 + $0x968] sm:$0xff]
    %v2343 = vld [vmem:[#allocation8 + $0x970] sm:$0xff]
    %v2344 = vld [vmem:[#allocation8 + $0x978] sm:$0xff]
    %v2345 = vld [vmem:[#allocation8 + $0x980] sm:$0xff]
    %v2346 = vld [vmem:[#allocation8 + $0x988] sm:$0xff]
    %v2347 = vld [vmem:[#allocation8 + $0x990] sm:$0xff]
    %v2348 = vld [vmem:[#allocation8 + $0x998] sm:$0xff]
    %v2349 = vld [vmem:[#allocation8 + $0x9a0] sm:$0xff]
    %v2350 = vld [vmem:[#allocation8 + $0x9a8] sm:$0xff]
    %v2351 = vld [vmem:[#allocation8 + $0x9b0] sm:$0xff]
    %v2352 = vld [vmem:[#allocation8 + $0x9b8] sm:$0xff]
    %v2353 = vld [vmem:[#allocation8 + $0x9c0] sm:$0xff]
    %v2354 = vld [vmem:[#allocation8 + $0x9c8] sm:$0xff]
    %v2355 = vld [vmem:[#allocation8 + $0x9d0] sm:$0xff]
    %v2356 = vld [vmem:[#allocation8 + $0x9d8] sm:$0xff]
    %v2357 = vld [vmem:[#allocation8 + $0x9e0] sm:$0xff]
    %v2358 = vld [vmem:[#allocation8 + $0x9e8] sm:$0xff]
    %v2359 = vld [vmem:[#allocation8 + $0x9f0] sm:$0xff]
    %v2360 = vld [vmem:[#allocation8 + $0x9f8] sm:$0xff]
    %v2361 = vld [vmem:[#allocation8 + $0xa00] sm:$0xff]
    %v2362 = vld [vmem:[#allocation8 + $0xa08] sm:$0xff]
    %v2363 = vld [vmem:[#allocation8 + $0xa10] sm:$0xff]
    %v2364 = vld [vmem:[#allocation8 + $0xa18] sm:$0xff]
    %v2365 = vld [vmem:[#allocation8 + $0xa20] sm:$0xff]
    %v2366 = vld [vmem:[#allocation8 + $0xa28] sm:$0xff]
    %v2367 = vld [vmem:[#allocation8 + $0xa30] sm:$0xff]
    %v2368 = vld [vmem:[#allocation8 + $0xa38] sm:$0xff]
    %v2369 = vld [vmem:[#allocation8 + $0xa40] sm:$0xff]
    %v2370 = vld [vmem:[#allocation8 + $0xa48] sm:$0xff]
    %v2371 = vld [vmem:[#allocation8 + $0xa50] sm:$0xff]
    %v2372 = vld [vmem:[#allocation8 + $0xa58] sm:$0xff]
    %v2373 = vld [vmem:[#allocation8 + $0xa60] sm:$0xff]
    %v2374 = vld [vmem:[#allocation8 + $0xa68] sm:$0xff]
    %v2375 = vld [vmem:[#allocation8 + $0xa70] sm:$0xff]
    %v2376 = vld [vmem:[#allocation8 + $0xa78] sm:$0xff]
    %v2377 = vld [vmem:[#allocation8 + $0xa80] sm:$0xff]
    %v2378 = vld [vmem:[#allocation8 + $0xa88] sm:$0xff]
    %v2379 = vld [vmem:[#allocation8 + $0xa90] sm:$0xff]
    %v2380 = vld [vmem:[#allocation8 + $0xa98] sm:$0xff]
    %v2381 = vld [vmem:[#allocation8 + $0xaa0] sm:$0xff]
    %v2382 = vld [vmem:[#allocation8 + $0xaa8] sm:$0xff]
    %v2383 = vld [vmem:[#allocation8 + $0xab0] sm:$0xff]
    %v2384 = vld [vmem:[#allocation8 + $0xab8] sm:$0xff]
    %v2385 = vld [vmem:[#allocation8 + $0xac0] sm:$0xff]
    %v2386 = vld [vmem:[#allocation8 + $0xac8] sm:$0xff]
    %v2387 = vld [vmem:[#allocation8 + $0xad0] sm:$0xff]
    %v2388 = vld [vmem:[#allocation8 + $0xad8] sm:$0xff]
    %v2389 = vld [vmem:[#allocation8 + $0xae0] sm:$0xff]
    %v2390 = vld [vmem:[#allocation8 + $0xae8] sm:$0xff]
    %v2391 = vld [vmem:[#allocation8 + $0xaf0] sm:$0xff]
    %v2392 = vld [vmem:[#allocation8 + $0xaf8] sm:$0xff]
    %v2393 = vld [vmem:[#allocation8 + $0xb00] sm:$0xff]
    %v2394 = vld [vmem:[#allocation8 + $0xb08] sm:$0xff]
    %v2395 = vld [vmem:[#allocation8 + $0xb10] sm:$0xff]
    %v2396 = vld [vmem:[#allocation8 + $0xb18] sm:$0xff]
    %v2397 = vld [vmem:[#allocation8 + $0xb20] sm:$0xff]
    %v2398 = vld [vmem:[#allocation8 + $0xb28] sm:$0xff]
    %v2399 = vld [vmem:[#allocation8 + $0xb30] sm:$0xff]
    %v2400 = vld [vmem:[#allocation8 + $0xb38] sm:$0xff]
    %v2401 = vld [vmem:[#allocation8 + $0xb40] sm:$0xff]
    %v2402 = vld [vmem:[#allocation8 + $0xb48] sm:$0xff]
    %v2403 = vld [vmem:[#allocation8 + $0xb50] sm:$0xff]
    %v2404 = vld [vmem:[#allocation8 + $0xb58] sm:$0xff]
    %v2405 = vld [vmem:[#allocation8 + $0xb60] sm:$0xff]
    %v2406 = vld [vmem:[#allocation8 + $0xb68] sm:$0xff]
    %v2407 = vld [vmem:[#allocation8 + $0xb70] sm:$0xff]
    %v2408 = vld [vmem:[#allocation8 + $0xb78] sm:$0xff]
    %v2409 = vld [vmem:[#allocation8 + $0xb80] sm:$0xff]
    %v2410 = vld [vmem:[#allocation8 + $0xb88] sm:$0xff]
    %v2411 = vld [vmem:[#allocation8 + $0xb90] sm:$0xff]
    %v2412 = vld [vmem:[#allocation8 + $0xb98] sm:$0xff]
    %v2413 = vld [vmem:[#allocation8 + $0xba0] sm:$0xff]
    %v2414 = vld [vmem:[#allocation8 + $0xba8] sm:$0xff]
    %v2415 = vld [vmem:[#allocation8 + $0xbb0] sm:$0xff]
    %v2416 = vld [vmem:[#allocation8 + $0xbb8] sm:$0xff]
    %v2417 = vld [vmem:[#allocation8 + $0xbc0] sm:$0xff]
    %v2418 = vld [vmem:[#allocation8 + $0xbc8] sm:$0xff]
    %v2419 = vld [vmem:[#allocation8 + $0xbd0] sm:$0xff]
    %v2420 = vld [vmem:[#allocation8 + $0xbd8] sm:$0xff]
    %v2421 = vld [vmem:[#allocation8 + $0xbe0] sm:$0xff]
    %v2422 = vld [vmem:[#allocation8 + $0xbe8] sm:$0xff]
    %v2423 = vld [vmem:[#allocation8 + $0xbf0] sm:$0xff]
    %v2424 = vld [vmem:[#allocation8 + $0xbf8] sm:$0xff]
    %v2425 = vld [vmem:[#allocation8 + $0xc00] sm:$0xff]
    %v2426 = vld [vmem:[#allocation8 + $0xc08] sm:$0xff]
    %v2427 = vld [vmem:[#allocation8 + $0xc10] sm:$0xff]
    %v2428 = vld [vmem:[#allocation8 + $0xc18] sm:$0xff]
    %v2429 = vld [vmem:[#allocation8 + $0xc20] sm:$0xff]
    %v2430 = vld [vmem:[#allocation8 + $0xc28] sm:$0xff]
    %v2431 = vld [vmem:[#allocation8 + $0xc30] sm:$0xff]
    %v2432 = vld [vmem:[#allocation8 + $0xc38] sm:$0xff]
    %v2433 = vld [vmem:[#allocation8 + $0xc40] sm:$0xff]
    %v2434 = vld [vmem:[#allocation8 + $0xc48] sm:$0xff]
    %v2435 = vld [vmem:[#allocation8 + $0xc50] sm:$0xff]
    %v2436 = vld [vmem:[#allocation8 + $0xc58] sm:$0xff]
    %v2437 = vld [vmem:[#allocation8 + $0xc60] sm:$0xff]
    %v2438 = vld [vmem:[#allocation8 + $0xc68] sm:$0xff]
    %v2439 = vld [vmem:[#allocation8 + $0xc70] sm:$0xff]
    %v2440 = vld [vmem:[#allocation8 + $0xc78] sm:$0xff]
    %v2441 = vld [vmem:[#allocation8 + $0xc80] sm:$0xff]
    %v2442 = vld [vmem:[#allocation8 + $0xc88] sm:$0xff]
    %v2443 = vld [vmem:[#allocation8 + $0xc90] sm:$0xff]
    %v2444 = vld [vmem:[#allocation8 + $0xc98] sm:$0xff]
    %v2445 = vld [vmem:[#allocation8 + $0xca0] sm:$0xff]
    %v2446 = vld [vmem:[#allocation8 + $0xca8] sm:$0xff]
    %v2447 = vld [vmem:[#allocation8 + $0xcb0] sm:$0xff]
    %v2448 = vld [vmem:[#allocation8 + $0xcb8] sm:$0xff]
    %v2449 = vld [vmem:[#allocation8 + $0xcc0] sm:$0xff]
    %v2450 = vld [vmem:[#allocation8 + $0xcc8] sm:$0xff]
    %v2451 = vld [vmem:[#allocation8 + $0xcd0] sm:$0xff]
    %v2452 = vld [vmem:[#allocation8 + $0xcd8] sm:$0xff]
    %v2453 = vld [vmem:[#allocation8 + $0xce0] sm:$0xff]
    %v2454 = vld [vmem:[#allocation8 + $0xce8] sm:$0xff]
    %v2455 = vld [vmem:[#allocation8 + $0xcf0] sm:$0xff]
    %v2456 = vld [vmem:[#allocation8 + $0xcf8] sm:$0xff]
    %v2457 = vld [vmem:[#allocation8 + $0xd00] sm:$0xff]
    %v2458 = vld [vmem:[#allocation8 + $0xd08] sm:$0xff]
    %v2459 = vld [vmem:[#allocation8 + $0xd10] sm:$0xff]
    %v2460 = vld [vmem:[#allocation8 + $0xd18] sm:$0xff]
    %v2461 = vld [vmem:[#allocation8 + $0xd20] sm:$0xff]
    %v2462 = vld [vmem:[#allocation8 + $0xd28] sm:$0xff]
    %v2463 = vld [vmem:[#allocation8 + $0xd30] sm:$0xff]
    %v2464 = vld [vmem:[#allocation8 + $0xd38] sm:$0xff]
    %v2465 = vld [vmem:[#allocation8 + $0xd40] sm:$0xff]
    %v2466 = vld [vmem:[#allocation8 + $0xd48] sm:$0xff]
    %v2467 = vld [vmem:[#allocation8 + $0xd50] sm:$0xff]
    %v2468 = vld [vmem:[#allocation8 + $0xd58] sm:$0xff]
    %v2469 = vld [vmem:[#allocation8 + $0xd60] sm:$0xff]
    %v2470 = vld [vmem:[#allocation8 + $0xd68] sm:$0xff]
    %v2471 = vld [vmem:[#allocation8 + $0xd70] sm:$0xff]
    %v2472 = vld [vmem:[#allocation8 + $0xd78] sm:$0xff]
    %v2473 = vld [vmem:[#allocation8 + $0xd80] sm:$0xff]
    %v2474 = vld [vmem:[#allocation8 + $0xd88] sm:$0xff]
    %v2475 = vld [vmem:[#allocation8 + $0xd90] sm:$0xff]
    %v2476 = vld [vmem:[#allocation8 + $0xd98] sm:$0xff]
    %v2477 = vld [vmem:[#allocation8 + $0xda0] sm:$0xff]
    %v2478 = vld [vmem:[#allocation8 + $0xda8] sm:$0xff]
    %v2479 = vld [vmem:[#allocation8 + $0xdb0] sm:$0xff]
    %v2480 = vld [vmem:[#allocation8 + $0xdb8] sm:$0xff]
    %v2481 = vld [vmem:[#allocation8 + $0xdc0] sm:$0xff]
    %v2482 = vld [vmem:[#allocation8 + $0xdc8] sm:$0xff]
    %v2483 = vld [vmem:[#allocation8 + $0xdd0] sm:$0xff]
    %v2484 = vld [vmem:[#allocation8 + $0xdd8] sm:$0xff]
    %v2485 = vld [vmem:[#allocation8 + $0xde0] sm:$0xff]
    %v2486 = vld [vmem:[#allocation8 + $0xde8] sm:$0xff]
    %v2487 = vld [vmem:[#allocation8 + $0xdf0] sm:$0xff]
    %v2488 = vld [vmem:[#allocation8 + $0xdf8] sm:$0xff]
    %v2489 = vld [vmem:[#allocation8 + $0xe00] sm:$0xff]
    %v2490 = vld [vmem:[#allocation8 + $0xe08] sm:$0xff]
    %v2491 = vld [vmem:[#allocation8 + $0xe10] sm:$0xff]
    %v2492 = vld [vmem:[#allocation8 + $0xe18] sm:$0xff]
    %v2493 = vld [vmem:[#allocation8 + $0xe20] sm:$0xff]
    %v2494 = vld [vmem:[#allocation8 + $0xe28] sm:$0xff]
    %v2495 = vld [vmem:[#allocation8 + $0xe30] sm:$0xff]
    %v2496 = vld [vmem:[#allocation8 + $0xe38] sm:$0xff]
    %v2497 = vld [vmem:[#allocation8 + $0xe40] sm:$0xff]
    %v2498 = vld [vmem:[#allocation8 + $0xe48] sm:$0xff]
    %v2499 = vld [vmem:[#allocation8 + $0xe50] sm:$0xff]
    %v2500 = vld [vmem:[#allocation8 + $0xe58] sm:$0xff]
    %v2501 = vld [vmem:[#allocation8 + $0xe60] sm:$0xff]
    %v2502 = vld [vmem:[#allocation8 + $0xe68] sm:$0xff]
    %v2503 = vld [vmem:[#allocation8 + $0xe70] sm:$0xff]
    %v2504 = vld [vmem:[#allocation8 + $0xe78] sm:$0xff]
    %v2505 = vld [vmem:[#allocation8 + $0xe80] sm:$0xff]
    %v2506 = vld [vmem:[#allocation8 + $0xe88] sm:$0xff]
    %v2507 = vld [vmem:[#allocation8 + $0xe90] sm:$0xff]
    %v2508 = vld [vmem:[#allocation8 + $0xe98] sm:$0xff]
    %v2509 = vld [vmem:[#allocation8 + $0xea0] sm:$0xff]
    %v2510 = vld [vmem:[#allocation8 + $0xea8] sm:$0xff]
    %v2511 = vld [vmem:[#allocation8 + $0xeb0] sm:$0xff]
    %v2512 = vld [vmem:[#allocation8 + $0xeb8] sm:$0xff]
    %v2513 = vld [vmem:[#allocation8 + $0xec0] sm:$0xff]
    %v2514 = vld [vmem:[#allocation8 + $0xec8] sm:$0xff]
    %v2515 = vld [vmem:[#allocation8 + $0xed0] sm:$0xff]
    %v2516 = vld [vmem:[#allocation8 + $0xed8] sm:$0xff]
    %v2517 = vld [vmem:[#allocation8 + $0xee0] sm:$0xff]
    %v2518 = vld [vmem:[#allocation8 + $0xee8] sm:$0xff]
    %v2519 = vld [vmem:[#allocation8 + $0xef0] sm:$0xff]
    %v2520 = vld [vmem:[#allocation8 + $0xef8] sm:$0xff]
    %v2521 = vld [vmem:[#allocation8 + $0xf00] sm:$0xff]
    %v2522 = vld [vmem:[#allocation8 + $0xf08] sm:$0xff]
    %v2523 = vld [vmem:[#allocation8 + $0xf10] sm:$0xff]
    %v2524 = vld [vmem:[#allocation8 + $0xf18] sm:$0xff]
    %v2525 = vld [vmem:[#allocation8 + $0xf20] sm:$0xff]
    %v2526 = vld [vmem:[#allocation8 + $0xf28] sm:$0xff]
    %v2527 = vld [vmem:[#allocation8 + $0xf30] sm:$0xff]
    %v2528 = vld [vmem:[#allocation8 + $0xf38] sm:$0xff]
    %v2529 = vld [vmem:[#allocation8 + $0xf40] sm:$0xff]
    %v2530 = vld [vmem:[#allocation8 + $0xf48] sm:$0xff]
    %v2531 = vld [vmem:[#allocation8 + $0xf50] sm:$0xff]
    %v2532 = vld [vmem:[#allocation8 + $0xf58] sm:$0xff]
    %v2533 = vld [vmem:[#allocation8 + $0xf60] sm:$0xff]
    %v2534 = vld [vmem:[#allocation8 + $0xf68] sm:$0xff]
    %v2535 = vld [vmem:[#allocation8 + $0xf70] sm:$0xff]
    %v2536 = vld [vmem:[#allocation8 + $0xf78] sm:$0xff]
    %v2537 = vld [vmem:[#allocation8 + $0xf80] sm:$0xff]
    %v2538 = vld [vmem:[#allocation8 + $0xf88] sm:$0xff]
    %v2539 = vld [vmem:[#allocation8 + $0xf90] sm:$0xff]
    %v2540 = vld [vmem:[#allocation8 + $0xf98] sm:$0xff]
    %v2541 = vld [vmem:[#allocation8 + $0xfa0] sm:$0xff]
    %v2542 = vld [vmem:[#allocation8 + $0xfa8] sm:$0xff]
    %v2543 = vld [vmem:[#allocation8 + $0xfb0] sm:$0xff]
    %v2544 = vld [vmem:[#allocation8 + $0xfb8] sm:$0xff]
    %v2545 = vld [vmem:[#allocation8 + $0xfc0] sm:$0xff]
    %v2546 = vld [vmem:[#allocation8 + $0xfc8] sm:$0xff]
    %v2547 = vld [vmem:[#allocation8 + $0xfd0] sm:$0xff]
    %v2548 = vld [vmem:[#allocation8 + $0xfd8] sm:$0xff]
    %v2549 = vld [vmem:[#allocation8 + $0xfe0] sm:$0xff]
    %v2550 = vld [vmem:[#allocation8 + $0xfe8] sm:$0xff]
    %v2551 = vld [vmem:[#allocation8 + $0xff0] sm:$0xff]
    %v2552 = vld [vmem:[#allocation8 + $0xff8] sm:$0xff]
    %v2553 = vld [vmem:[#allocation8 + $0x1000] sm:$0xff]
    %v2554 = vld [vmem:[#allocation8 + $0x1008] sm:$0xff]
    %v2555 = vld [vmem:[#allocation8 + $0x1010] sm:$0xff]
    %v2556 = vld [vmem:[#allocation8 + $0x1018] sm:$0xff]
    %v2557 = vld [vmem:[#allocation8 + $0x1020] sm:$0xff]
    %v2558 = vld [vmem:[#allocation8 + $0x1028] sm:$0xff]
    %v2559 = vld [vmem:[#allocation8 + $0x1030] sm:$0xff]
    %v2560 = vld [vmem:[#allocation8 + $0x1038] sm:$0xff]
    %v2561 = vld [vmem:[#allocation8 + $0x1040] sm:$0xff]
    %v2562 = vld [vmem:[#allocation8 + $0x1048] sm:$0xff]
    %v2563 = vld [vmem:[#allocation8 + $0x1050] sm:$0xff]
    %v2564 = vld [vmem:[#allocation8 + $0x1058] sm:$0xff]
    %v2565 = vld [vmem:[#allocation8 + $0x1060] sm:$0xff]
    %v2566 = vld [vmem:[#allocation8 + $0x1068] sm:$0xff]
    %v2567 = vld [vmem:[#allocation8 + $0x1070] sm:$0xff]
    %v2568 = vld [vmem:[#allocation8 + $0x1078] sm:$0xff]
    %v2569 = vld [vmem:[#allocation8 + $0x1080] sm:$0xff]
    %v2570 = vld [vmem:[#allocation8 + $0x1088] sm:$0xff]
    %v2571 = vld [vmem:[#allocation8 + $0x1090] sm:$0xff]
    %v2572 = vld [vmem:[#allocation8 + $0x1098] sm:$0xff]
    %v2573 = vld [vmem:[#allocation8 + $0x10a0] sm:$0xff]
    %v2574 = vld [vmem:[#allocation8 + $0x10a8] sm:$0xff]
    %v2575 = vld [vmem:[#allocation8 + $0x10b0] sm:$0xff]
    %v2576 = vld [vmem:[#allocation8 + $0x10b8] sm:$0xff]
    %v2577 = vld [vmem:[#allocation8 + $0x10c0] sm:$0xff]
    %v2578 = vld [vmem:[#allocation8 + $0x10c8] sm:$0xff]
    %v2579 = vld [vmem:[#allocation8 + $0x10d0] sm:$0xff]
    %v2580 = vld [vmem:[#allocation8 + $0x10d8] sm:$0xff]
    %v2581 = vld [vmem:[#allocation8 + $0x10e0] sm:$0xff]
    %v2582 = vld [vmem:[#allocation8 + $0x10e8] sm:$0xff]
    %v2583 = vld [vmem:[#allocation8 + $0x10f0] sm:$0xff]
    %v2584 = vld [vmem:[#allocation8 + $0x10f8] sm:$0xff]
    %v2585 = vld [vmem:[#allocation8 + $0x1100] sm:$0xff]
    %v2586 = vld [vmem:[#allocation8 + $0x1108] sm:$0xff]
    %v2587 = vld [vmem:[#allocation8 + $0x1110] sm:$0xff]
    %v2588 = vld [vmem:[#allocation8 + $0x1118] sm:$0xff]
    %v2589 = vld [vmem:[#allocation8 + $0x1120] sm:$0xff]
    %v2590 = vld [vmem:[#allocation8 + $0x1128] sm:$0xff]
    %v2591 = vld [vmem:[#allocation8 + $0x1130] sm:$0xff]
    %v2592 = vld [vmem:[#allocation8 + $0x1138] sm:$0xff]
    %v2593 = vld [vmem:[#allocation8 + $0x1140] sm:$0xff]
    %v2594 = vld [vmem:[#allocation8 + $0x1148] sm:$0xff]
    %v2595 = vld [vmem:[#allocation8 + $0x1150] sm:$0xff]
    %v2596 = vld [vmem:[#allocation8 + $0x1158] sm:$0xff]
    %v2597 = vld [vmem:[#allocation8 + $0x1160] sm:$0xff]
    %v2598 = vld [vmem:[#allocation8 + $0x1168] sm:$0xff]
    %v2599 = vld [vmem:[#allocation8 + $0x1170] sm:$0xff]
    %v2600 = vld [vmem:[#allocation8 + $0x1178] sm:$0xff]
    %v2601 = vld [vmem:[#allocation8 + $0x1180] sm:$0xff]
    %v2602 = vld [vmem:[#allocation8 + $0x1188] sm:$0xff]
    %v2603 = vld [vmem:[#allocation8 + $0x1190] sm:$0xff]
    %v2604 = vld [vmem:[#allocation8 + $0x1198] sm:$0xff]
    %v2605 = vld [vmem:[#allocation8 + $0x11a0] sm:$0xff]
    %v2606 = vld [vmem:[#allocation8 + $0x11a8] sm:$0xff]
    %v2607 = vld [vmem:[#allocation8 + $0x11b0] sm:$0xff]
    %v2608 = vld [vmem:[#allocation8 + $0x11b8] sm:$0xff]
    %v2609 = vld [vmem:[#allocation8 + $0x11c0] sm:$0xff]
    %v2610 = vld [vmem:[#allocation8 + $0x11c8] sm:$0xff]
    %v2611 = vld [vmem:[#allocation8 + $0x11d0] sm:$0xff]
    %v2612 = vld [vmem:[#allocation8 + $0x11d8] sm:$0xff]
    %v2613 = vld [vmem:[#allocation8 + $0x11e0] sm:$0xff]
    %v2614 = vld [vmem:[#allocation8 + $0x11e8] sm:$0xff]
    %v2615 = vld [vmem:[#allocation8 + $0x11f0] sm:$0xff]
    %v2616 = vld [vmem:[#allocation8 + $0x11f8] sm:$0xff]
    %v2617 = vld [vmem:[#allocation8 + $0x1200] sm:$0xff]
    %v2618 = vld [vmem:[#allocation8 + $0x1208] sm:$0xff]
    %v2619 = vld [vmem:[#allocation8 + $0x1210] sm:$0xff]
    %v2620 = vld [vmem:[#allocation8 + $0x1218] sm:$0xff]
    %v2621 = vld [vmem:[#allocation8 + $0x1220] sm:$0xff]
    %v2622 = vld [vmem:[#allocation8 + $0x1228] sm:$0xff]
    %v2623 = vld [vmem:[#allocation8 + $0x1230] sm:$0xff]
    %v2624 = vld [vmem:[#allocation8 + $0x1238] sm:$0xff]
    %v2625 = vld [vmem:[#allocation8 + $0x1240] sm:$0xff]
    %v2626 = vld [vmem:[#allocation8 + $0x1248] sm:$0xff]
    %v2627 = vld [vmem:[#allocation8 + $0x1250] sm:$0xff]
    %v2628 = vld [vmem:[#allocation8 + $0x1258] sm:$0xff]
    %v2629 = vld [vmem:[#allocation8 + $0x1260] sm:$0xff]
    %v2630 = vld [vmem:[#allocation8 + $0x1268] sm:$0xff]
    %v2631 = vld [vmem:[#allocation8 + $0x1270] sm:$0xff]
    %v2632 = vld [vmem:[#allocation8 + $0x1278] sm:$0xff]
    %v2633 = vld [vmem:[#allocation8 + $0x1280] sm:$0xff]
    %v2634 = vld [vmem:[#allocation8 + $0x1288] sm:$0xff]
    %v2635 = vld [vmem:[#allocation8 + $0x1290] sm:$0xff]
    %v2636 = vld [vmem:[#allocation8 + $0x1298] sm:$0xff]
    %v2637 = vld [vmem:[#allocation8 + $0x12a0] sm:$0xff]
    %v2638 = vld [vmem:[#allocation8 + $0x12a8] sm:$0xff]
    %v2639 = vld [vmem:[#allocation8 + $0x12b0] sm:$0xff]
    %v2640 = vld [vmem:[#allocation8 + $0x12b8] sm:$0xff]
    %v2641 = vld [vmem:[#allocation8 + $0x12c0] sm:$0xff]
    %v2642 = vld [vmem:[#allocation8 + $0x12c8] sm:$0xff]
    %v2643 = vld [vmem:[#allocation8 + $0x12d0] sm:$0xff]
    %v2644 = vld [vmem:[#allocation8 + $0x12d8] sm:$0xff]
    %v2645 = vld [vmem:[#allocation8 + $0x12e0] sm:$0xff]
    %v2646 = vld [vmem:[#allocation8 + $0x12e8] sm:$0xff]
    %v2647 = vld [vmem:[#allocation8 + $0x12f0] sm:$0xff]
    %v2648 = vld [vmem:[#allocation8 + $0x12f8] sm:$0xff]
    %v2649 = vld [vmem:[#allocation8 + $0x1300] sm:$0xff]
    %v2650 = vld [vmem:[#allocation8 + $0x1308] sm:$0xff]
    %v2651 = vld [vmem:[#allocation8 + $0x1310] sm:$0xff]
    %v2652 = vld [vmem:[#allocation8 + $0x1318] sm:$0xff]
    %v2653 = vld [vmem:[#allocation8 + $0x1320] sm:$0xff]
    %v2654 = vld [vmem:[#allocation8 + $0x1328] sm:$0xff]
    %v2655 = vld [vmem:[#allocation8 + $0x1330] sm:$0xff]
    %v2656 = vld [vmem:[#allocation8 + $0x1338] sm:$0xff]
    %v2657 = vld [vmem:[#allocation8 + $0x1340] sm:$0xff]
    %v2658 = vld [vmem:[#allocation8 + $0x1348] sm:$0xff]
    %v2659 = vld [vmem:[#allocation8 + $0x1350] sm:$0xff]
    %v2660 = vld [vmem:[#allocation8 + $0x1358] sm:$0xff]
    %v2661 = vld [vmem:[#allocation8 + $0x1360] sm:$0xff]
    %v2662 = vld [vmem:[#allocation8 + $0x1368] sm:$0xff]
    %v2663 = vld [vmem:[#allocation8 + $0x1370] sm:$0xff]
    %v2664 = vld [vmem:[#allocation8 + $0x1378] sm:$0xff]
    %v2665 = vld [vmem:[#allocation8 + $0x1380] sm:$0xff]
    %v2666 = vld [vmem:[#allocation8 + $0x1388] sm:$0xff]
    %v2667 = vld [vmem:[#allocation8 + $0x1390] sm:$0xff]
    %v2668 = vld [vmem:[#allocation8 + $0x1398] sm:$0xff]
    %v2669 = vld [vmem:[#allocation8 + $0x13a0] sm:$0xff]
    %v2670 = vld [vmem:[#allocation8 + $0x13a8] sm:$0xff]
    %v2671 = vld [vmem:[#allocation8 + $0x13b0] sm:$0xff]
    %v2672 = vld [vmem:[#allocation8 + $0x13b8] sm:$0xff]
    %v2673 = vld [vmem:[#allocation8 + $0x13c0] sm:$0xff]
    %v2674 = vld [vmem:[#allocation8 + $0x13c8] sm:$0xff]
    %v2675 = vld [vmem:[#allocation8 + $0x13d0] sm:$0xff]
    %v2676 = vld [vmem:[#allocation8 + $0x13d8] sm:$0xff]
    %v2677 = vld [vmem:[#allocation8 + $0x13e0] sm:$0xff]
    %v2678 = vld [vmem:[#allocation8 + $0x13e8] sm:$0xff]
    %v2679 = vld [vmem:[#allocation8 + $0x13f0] sm:$0xff]
    %v2680 = vld [vmem:[#allocation8 + $0x13f8] sm:$0xff]
    %v2681 = vld [vmem:[#allocation8 + $0x1400] sm:$0xff]
    %v2682 = vld [vmem:[#allocation8 + $0x1408] sm:$0xff]
    %v2683 = vld [vmem:[#allocation8 + $0x1410] sm:$0xff]
    %v2684 = vld [vmem:[#allocation8 + $0x1418] sm:$0xff]
    %v2685 = vld [vmem:[#allocation8 + $0x1420] sm:$0xff]
    %v2686 = vld [vmem:[#allocation8 + $0x1428] sm:$0xff]
    %v2687 = vld [vmem:[#allocation8 + $0x1430] sm:$0xff]
    %v2688 = vld [vmem:[#allocation8 + $0x1438] sm:$0xff]
    %v2689 = vld [vmem:[#allocation8 + $0x1440] sm:$0xff]
    %v2690 = vld [vmem:[#allocation8 + $0x1448] sm:$0xff]
    %v2691 = vld [vmem:[#allocation8 + $0x1450] sm:$0xff]
    %v2692 = vld [vmem:[#allocation8 + $0x1458] sm:$0xff]
    %v2693 = vld [vmem:[#allocation8 + $0x1460] sm:$0xff]
    %v2694 = vld [vmem:[#allocation8 + $0x1468] sm:$0xff]
    %v2695 = vld [vmem:[#allocation8 + $0x1470] sm:$0xff]
    %v2696 = vld [vmem:[#allocation8 + $0x1478] sm:$0xff]
    %v2697 = vld [vmem:[#allocation8 + $0x1480] sm:$0xff]
    %v2698 = vld [vmem:[#allocation8 + $0x1488] sm:$0xff]
    %v2699 = vld [vmem:[#allocation8 + $0x1490] sm:$0xff]
    %v2700 = vld [vmem:[#allocation8 + $0x1498] sm:$0xff]
    %v2701 = vld [vmem:[#allocation8 + $0x14a0] sm:$0xff]
    %v2702 = vld [vmem:[#allocation8 + $0x14a8] sm:$0xff]
    %v2703 = vld [vmem:[#allocation8 + $0x14b0] sm:$0xff]
    %v2704 = vld [vmem:[#allocation8 + $0x14b8] sm:$0xff]
    %v2705 = vld [vmem:[#allocation8 + $0x14c0] sm:$0xff]
    %v2706 = vld [vmem:[#allocation8 + $0x14c8] sm:$0xff]
    %v2707 = vld [vmem:[#allocation8 + $0x14d0] sm:$0xff]
    %v2708 = vld [vmem:[#allocation8 + $0x14d8] sm:$0xff]
    %v2709 = vld [vmem:[#allocation8 + $0x14e0] sm:$0xff]
    %v2710 = vld [vmem:[#allocation8 + $0x14e8] sm:$0xff]
    %v2711 = vld [vmem:[#allocation8 + $0x14f0] sm:$0xff]
    %v2712 = vld [vmem:[#allocation8 + $0x14f8] sm:$0xff]
    %v2713 = vld [vmem:[#allocation8 + $0x1500] sm:$0xff]
    %v2714 = vld [vmem:[#allocation8 + $0x1508] sm:$0xff]
    %v2715 = vld [vmem:[#allocation8 + $0x1510] sm:$0xff]
    %v2716 = vld [vmem:[#allocation8 + $0x1518] sm:$0xff]
    %v2717 = vld [vmem:[#allocation8 + $0x1520] sm:$0xff]
    %v2718 = vld [vmem:[#allocation8 + $0x1528] sm:$0xff]
    %v2719 = vld [vmem:[#allocation8 + $0x1530] sm:$0xff]
    %v2720 = vld [vmem:[#allocation8 + $0x1538] sm:$0xff]
    %v2721 = vld [vmem:[#allocation8 + $0x1540] sm:$0xff]
    %v2722 = vld [vmem:[#allocation8 + $0x1548] sm:$0xff]
    %v2723 = vld [vmem:[#allocation8 + $0x1550] sm:$0xff]
    %v2724 = vld [vmem:[#allocation8 + $0x1558] sm:$0xff]
    %v2725 = vld [vmem:[#allocation8 + $0x1560] sm:$0xff]
    %v2726 = vld [vmem:[#allocation8 + $0x1568] sm:$0xff]
    %v2727 = vld [vmem:[#allocation8 + $0x1570] sm:$0xff]
    %v2728 = vld [vmem:[#allocation8 + $0x1578] sm:$0xff]
    %v2729 = vld [vmem:[#allocation8 + $0x1580] sm:$0xff]
    %v2730 = vld [vmem:[#allocation8 + $0x1588] sm:$0xff]
    %v2731 = vld [vmem:[#allocation8 + $0x1590] sm:$0xff]
    %v2732 = vld [vmem:[#allocation8 + $0x1598] sm:$0xff]
    %v2733 = vld [vmem:[#allocation8 + $0x15a0] sm:$0xff]
    %v2734 = vld [vmem:[#allocation8 + $0x15a8] sm:$0xff]
    %v2735 = vld [vmem:[#allocation8 + $0x15b0] sm:$0xff]
    %v2736 = vld [vmem:[#allocation8 + $0x15b8] sm:$0xff]
    %v2737 = vld [vmem:[#allocation8 + $0x15c0] sm:$0xff]
    %v2738 = vld [vmem:[#allocation8 + $0x15c8] sm:$0xff]
    %v2739 = vld [vmem:[#allocation8 + $0x15d0] sm:$0xff]
    %v2740 = vld [vmem:[#allocation8 + $0x15d8] sm:$0xff]
    %v2741 = vld [vmem:[#allocation8 + $0x15e0] sm:$0xff]
    %v2742 = vld [vmem:[#allocation8 + $0x15e8] sm:$0xff]
    %v2743 = vld [vmem:[#allocation8 + $0x15f0] sm:$0xff]
    %v2744 = vld [vmem:[#allocation8 + $0x15f8] sm:$0xff]
    %v2745 = vld [vmem:[#allocation8 + $0x1600] sm:$0xff]
    %v2746 = vld [vmem:[#allocation8 + $0x1608] sm:$0xff]
    %v2747 = vld [vmem:[#allocation8 + $0x1610] sm:$0xff]
    %v2748 = vld [vmem:[#allocation8 + $0x1618] sm:$0xff]
    %v2749 = vld [vmem:[#allocation8 + $0x1620] sm:$0xff]
    %v2750 = vld [vmem:[#allocation8 + $0x1628] sm:$0xff]
    %v2751 = vld [vmem:[#allocation8 + $0x1630] sm:$0xff]
    %v2752 = vld [vmem:[#allocation8 + $0x1638] sm:$0xff]
    %v2753 = vld [vmem:[#allocation8 + $0x1640] sm:$0xff]
    %v2754 = vld [vmem:[#allocation8 + $0x1648] sm:$0xff]
    %v2755 = vld [vmem:[#allocation8 + $0x1650] sm:$0xff]
    %v2756 = vld [vmem:[#allocation8 + $0x1658] sm:$0xff]
    %v2757 = vld [vmem:[#allocation8 + $0x1660] sm:$0xff]
    %v2758 = vld [vmem:[#allocation8 + $0x1668] sm:$0xff]
    %v2759 = vld [vmem:[#allocation8 + $0x1670] sm:$0xff]
    %v2760 = vld [vmem:[#allocation8 + $0x1678] sm:$0xff]
    %v2761 = vld [vmem:[#allocation8 + $0x1680] sm:$0xff]
    %v2762 = vld [vmem:[#allocation8 + $0x1688] sm:$0xff]
    %v2763 = vld [vmem:[#allocation8 + $0x1690] sm:$0xff]
    %v2764 = vld [vmem:[#allocation8 + $0x1698] sm:$0xff]
    %v2765 = vld [vmem:[#allocation8 + $0x16a0] sm:$0xff]
    %v2766 = vld [vmem:[#allocation8 + $0x16a8] sm:$0xff]
    %v2767 = vld [vmem:[#allocation8 + $0x16b0] sm:$0xff]
    %v2768 = vld [vmem:[#allocation8 + $0x16b8] sm:$0xff]
    %v2769 = vld [vmem:[#allocation8 + $0x16c0] sm:$0xff]
    %v2770 = vld [vmem:[#allocation8 + $0x16c8] sm:$0xff]
    %v2771 = vld [vmem:[#allocation8 + $0x16d0] sm:$0xff]
    %v2772 = vld [vmem:[#allocation8 + $0x16d8] sm:$0xff]
    %v2773 = vld [vmem:[#allocation8 + $0x16e0] sm:$0xff]
    %v2774 = vld [vmem:[#allocation8 + $0x16e8] sm:$0xff]
    %v2775 = vld [vmem:[#allocation8 + $0x16f0] sm:$0xff]
    %v2776 = vld [vmem:[#allocation8 + $0x16f8] sm:$0xff]
    %v2777 = vld [vmem:[#allocation8 + $0x1700] sm:$0xff]
    %v2778 = vld [vmem:[#allocation8 + $0x1708] sm:$0xff]
    %v2779 = vld [vmem:[#allocation8 + $0x1710] sm:$0xff]
    %v2780 = vld [vmem:[#allocation8 + $0x1718] sm:$0xff]
    %v2781 = vld [vmem:[#allocation8 + $0x1720] sm:$0xff]
    %v2782 = vld [vmem:[#allocation8 + $0x1728] sm:$0xff]
    %v2783 = vld [vmem:[#allocation8 + $0x1730] sm:$0xff]
    %v2784 = vld [vmem:[#allocation8 + $0x1738] sm:$0xff]
    %v2785 = vld [vmem:[#allocation8 + $0x1740] sm:$0xff]
    %v2786 = vld [vmem:[#allocation8 + $0x1748] sm:$0xff]
    %v2787 = vld [vmem:[#allocation8 + $0x1750] sm:$0xff]
    %v2788 = vld [vmem:[#allocation8 + $0x1758] sm:$0xff]
    %v2789 = vld [vmem:[#allocation8 + $0x1760] sm:$0xff]
    %v2790 = vld [vmem:[#allocation8 + $0x1768] sm:$0xff]
    %v2791 = vld [vmem:[#allocation8 + $0x1770] sm:$0xff]
    %v2792 = vld [vmem:[#allocation8 + $0x1778] sm:$0xff]
    %v2793 = vld [vmem:[#allocation8 + $0x1780] sm:$0xff]
    %v2794 = vld [vmem:[#allocation8 + $0x1788] sm:$0xff]
    %v2795 = vld [vmem:[#allocation8 + $0x1790] sm:$0xff]
    %v2796 = vld [vmem:[#allocation8 + $0x1798] sm:$0xff]
    %v2797 = vld [vmem:[#allocation8 + $0x17a0] sm:$0xff]
    %v2798 = vld [vmem:[#allocation8 + $0x17a8] sm:$0xff]
    %v2799 = vld [vmem:[#allocation8 + $0x17b0] sm:$0xff]
    %v2800 = vld [vmem:[#allocation8 + $0x17b8] sm:$0xff]
    %v2801 = vld [vmem:[#allocation8 + $0x17c0] sm:$0xff]
    %v2802 = vld [vmem:[#allocation8 + $0x17c8] sm:$0xff]
    %v2803 = vld [vmem:[#allocation8 + $0x17d0] sm:$0xff]
    %v2804 = vld [vmem:[#allocation8 + $0x17d8] sm:$0xff]
    %v2805 = vld [vmem:[#allocation8 + $0x17e0] sm:$0xff]
    %v2806 = vld [vmem:[#allocation8 + $0x17e8] sm:$0xff]
    %v2807 = vld [vmem:[#allocation8 + $0x17f0] sm:$0xff]
    %v2808 = vld [vmem:[#allocation8 + $0x17f8] sm:$0xff]
    %v2809 = vld [vmem:[#allocation10] sm:$0x7]
    %v2811 = vperm.slane %v2809, 0
    %v2812 = vperm.slane %v2809, 1
    %v2813 = vperm.slane %v2809, 2
    %2817 = vmatpush.msra.mxu0 %v2086
    %2818 = vmatpush.msra.mxu0 %v2083
    %2819 = vmatpush.msra.mxu0 %v2080
    %2820 = vmatpush.msra.mxu0 %v2077
    %2821 = vmatpush.msra.mxu0 %v2074
    %2822 = vmatpush.msra.mxu0 %v2071
    %2823 = vmatpush.msra.mxu0 %v2068
    %2824 = vmatpush.msra.mxu0 %v2065
    %2825 = vmatpush.msra.mxu0 %v2062
    %2826 = vmatpush.msra.mxu0 %v2059
    %2827 = vmatpush.msra.mxu0 %v2056
    %2828 = vmatpush.msra.mxu0 %v2053
    %2829 = vmatpush.msra.mxu0 %v2050
    %2830 = vmatpush.msra.mxu0 %v2047
    %2831 = vmatpush.msra.mxu0 %v2044
    %2832 = vmatpush.msra.mxu0 %v2041
    %2833 = vmatmul.f32.gmra.mxu0 %v2009
    %v2834 = vpop.f32.mrf.mxu0
    %v2835 = vadd.f32 %v2811, %v2834
    %2836 = vmatmul.f32.gmra.mxu0 %v2025
    %v2837 = vpop.f32.mrf.mxu0
    %v2838 = vadd.f32 %v2811, %v2837
    %2839 = vdwg.mxu0
    %2840 = vmatpush.msra.mxu0 %v2134
    %2841 = vmatpush.msra.mxu0 %v2131
    %2842 = vmatpush.msra.mxu0 %v2128
    %2843 = vmatpush.msra.mxu0 %v2125
    %2844 = vmatpush.msra.mxu0 %v2122
    %2845 = vmatpush.msra.mxu0 %v2119
    %2846 = vmatpush.msra.mxu0 %v2116
    %2847 = vmatpush.msra.mxu0 %v2113
    %2848 = vmatpush.msra.mxu0 %v2110
    %2849 = vmatpush.msra.mxu0 %v2107
    %2850 = vmatpush.msra.mxu0 %v2104
    %2851 = vmatpush.msra.mxu0 %v2101
    %2852 = vmatpush.msra.mxu0 %v2098
    %2853 = vmatpush.msra.mxu0 %v2095
    %2854 = vmatpush.msra.mxu0 %v2092
    %2855 = vmatpush.msra.mxu0 %v2089
    %2856 = vmatmul.f32.gmra.mxu0 %v2010
    %v2857 = vpop.f32.mrf.mxu0
    %v2858 = vadd.f32 %v2835, %v2857
    %2859 = vmatmul.f32.gmra.mxu0 %v2026
    %v2860 = vpop.f32.mrf.mxu0
    %v2861 = vadd.f32 %v2838, %v2860
    %2862 = vdwg.mxu0
    %2863 = vmatpush.msra.mxu0 %v2182
    %2864 = vmatpush.msra.mxu0 %v2179
    %2865 = vmatpush.msra.mxu0 %v2176
    %2866 = vmatpush.msra.mxu0 %v2173
    %2867 = vmatpush.msra.mxu0 %v2170
    %2868 = vmatpush.msra.mxu0 %v2167
    %2869 = vmatpush.msra.mxu0 %v2164
    %2870 = vmatpush.msra.mxu0 %v2161
    %2871 = vmatpush.msra.mxu0 %v2158
    %2872 = vmatpush.msra.mxu0 %v2155
    %2873 = vmatpush.msra.mxu0 %v2152
    %2874 = vmatpush.msra.mxu0 %v2149
    %2875 = vmatpush.msra.mxu0 %v2146
    %2876 = vmatpush.msra.mxu0 %v2143
    %2877 = vmatpush.msra.mxu0 %v2140
    %2878 = vmatpush.msra.mxu0 %v2137
    %2879 = vmatmul.f32.gmra.mxu0 %v2011
    %v2880 = vpop.f32.mrf.mxu0
    %v2881 = vadd.f32 %v2858, %v2880
    %2882 = vmatmul.f32.gmra.mxu0 %v2027
    %v2883 = vpop.f32.mrf.mxu0
    %v2884 = vadd.f32 %v2861, %v2883
    %2885 = vdwg.mxu0
    %2886 = vmatpush.msra.mxu0 %v2230
    %2887 = vmatpush.msra.mxu0 %v2227
    %2888 = vmatpush.msra.mxu0 %v2224
    %2889 = vmatpush.msra.mxu0 %v2221
    %2890 = vmatpush.msra.mxu0 %v2218
    %2891 = vmatpush.msra.mxu0 %v2215
    %2892 = vmatpush.msra.mxu0 %v2212
    %2893 = vmatpush.msra.mxu0 %v2209
    %2894 = vmatpush.msra.mxu0 %v2206
    %2895 = vmatpush.msra.mxu0 %v2203
    %2896 = vmatpush.msra.mxu0 %v2200
    %2897 = vmatpush.msra.mxu0 %v2197
    %2898 = vmatpush.msra.mxu0 %v2194
    %2899 = vmatpush.msra.mxu0 %v2191
    %2900 = vmatpush.msra.mxu0 %v2188
    %2901 = vmatpush.msra.mxu0 %v2185
    %2902 = vmatmul.f32.gmra.mxu0 %v2012
    %v2903 = vpop.f32.mrf.mxu0
    %v2904 = vadd.f32 %v2881, %v2903
    %2905 = vmatmul.f32.gmra.mxu0 %v2028
    %v2906 = vpop.f32.mrf.mxu0
    %v2907 = vadd.f32 %v2884, %v2906
    %2908 = vdwg.mxu0
    %2909 = vmatpush.msra.mxu0 %v2278
    %2910 = vmatpush.msra.mxu0 %v2275
    %2911 = vmatpush.msra.mxu0 %v2272
    %2912 = vmatpush.msra.mxu0 %v2269
    %2913 = vmatpush.msra.mxu0 %v2266
    %2914 = vmatpush.msra.mxu0 %v2263
    %2915 = vmatpush.msra.mxu0 %v2260
    %2916 = vmatpush.msra.mxu0 %v2257
    %2917 = vmatpush.msra.mxu0 %v2254
    %2918 = vmatpush.msra.mxu0 %v2251
    %2919 = vmatpush.msra.mxu0 %v2248
    %2920 = vmatpush.msra.mxu0 %v2245
    %2921 = vmatpush.msra.mxu0 %v2242
    %2922 = vmatpush.msra.mxu0 %v2239
    %2923 = vmatpush.msra.mxu0 %v2236
    %2924 = vmatpush.msra.mxu0 %v2233
    %2925 = vmatmul.f32.gmra.mxu0 %v2013
    %v2926 = vpop.f32.mrf.mxu0
    %v2927 = vadd.f32 %v2904, %v2926
    %2928 = vmatmul.f32.gmra.mxu0 %v2029
    %v2929 = vpop.f32.mrf.mxu0
    %v2930 = vadd.f32 %v2907, %v2929
    %2931 = vdwg.mxu0
    %2932 = vmatpush.msra.mxu0 %v2326
    %2933 = vmatpush.msra.mxu0 %v2323
    %2934 = vmatpush.msra.mxu0 %v2320
    %2935 = vmatpush.msra.mxu0 %v2317
    %2936 = vmatpush.msra.mxu0 %v2314
    %2937 = vmatpush.msra.mxu0 %v2311
    %2938 = vmatpush.msra.mxu0 %v2308
    %2939 = vmatpush.msra.mxu0 %v2305
    %2940 = vmatpush.msra.mxu0 %v2302
    %2941 = vmatpush.msra.mxu0 %v2299
    %2942 = vmatpush.msra.mxu0 %v2296
    %2943 = vmatpush.msra.mxu0 %v2293
    %2944 = vmatpush.msra.mxu0 %v2290
    %2945 = vmatpush.msra.mxu0 %v2287
    %2946 = vmatpush.msra.mxu0 %v2284
    %2947 = vmatpush.msra.mxu0 %v2281
    %2948 = vmatmul.f32.gmra.mxu0 %v2014
    %v2949 = vpop.f32.mrf.mxu0
    %v2950 = vadd.f32 %v2927, %v2949
    %2951 = vmatmul.f32.gmra.mxu0 %v2030
    %v2952 = vpop.f32.mrf.mxu0
    %v2953 = vadd.f32 %v2930, %v2952
    %2954 = vdwg.mxu0
    %2955 = vmatpush.msra.mxu0 %v2374
    %2956 = vmatpush.msra.mxu0 %v2371
    %2957 = vmatpush.msra.mxu0 %v2368
    %2958 = vmatpush.msra.mxu0 %v2365
    %2959 = vmatpush.msra.mxu0 %v2362
    %2960 = vmatpush.msra.mxu0 %v2359
    %2961 = vmatpush.msra.mxu0 %v2356
    %2962 = vmatpush.msra.mxu0 %v2353
    %2963 = vmatpush.msra.mxu0 %v2350
    %2964 = vmatpush.msra.mxu0 %v2347
    %2965 = vmatpush.msra.mxu0 %v2344
    %2966 = vmatpush.msra.mxu0 %v2341
    %2967 = vmatpush.msra.mxu0 %v2338
    %2968 = vmatpush.msra.mxu0 %v2335
    %2969 = vmatpush.msra.mxu0 %v2332
    %2970 = vmatpush.msra.mxu0 %v2329
    %2971 = vmatmul.f32.gmra.mxu0 %v2015
    %v2972 = vpop.f32.mrf.mxu0
    %v2973 = vadd.f32 %v2950, %v2972
    %2974 = vmatmul.f32.gmra.mxu0 %v2031
    %v2975 = vpop.f32.mrf.mxu0
    %v2976 = vadd.f32 %v2953, %v2975
    %2977 = vdwg.mxu0
    %2978 = vmatpush.msra.mxu0 %v2422
    %2979 = vmatpush.msra.mxu0 %v2419
    %2980 = vmatpush.msra.mxu0 %v2416
    %2981 = vmatpush.msra.mxu0 %v2413
    %2982 = vmatpush.msra.mxu0 %v2410
    %2983 = vmatpush.msra.mxu0 %v2407
    %2984 = vmatpush.msra.mxu0 %v2404
    %2985 = vmatpush.msra.mxu0 %v2401
    %2986 = vmatpush.msra.mxu0 %v2398
    %2987 = vmatpush.msra.mxu0 %v2395
    %2988 = vmatpush.msra.mxu0 %v2392
    %2989 = vmatpush.msra.mxu0 %v2389
    %2990 = vmatpush.msra.mxu0 %v2386
    %2991 = vmatpush.msra.mxu0 %v2383
    %2992 = vmatpush.msra.mxu0 %v2380
    %2993 = vmatpush.msra.mxu0 %v2377
    %2994 = vmatmul.f32.gmra.mxu0 %v2016
    %v2995 = vpop.f32.mrf.mxu0
    %v2996 = vadd.f32 %v2973, %v2995
    %2997 = vmatmul.f32.gmra.mxu0 %v2032
    %v2998 = vpop.f32.mrf.mxu0
    %v2999 = vadd.f32 %v2976, %v2998
    %3000 = vdwg.mxu0
    %3001 = vmatpush.msra.mxu0 %v2470
    %3002 = vmatpush.msra.mxu0 %v2467
    %3003 = vmatpush.msra.mxu0 %v2464
    %3004 = vmatpush.msra.mxu0 %v2461
    %3005 = vmatpush.msra.mxu0 %v2458
    %3006 = vmatpush.msra.mxu0 %v2455
    %3007 = vmatpush.msra.mxu0 %v2452
    %3008 = vmatpush.msra.mxu0 %v2449
    %3009 = vmatpush.msra.mxu0 %v2446
    %3010 = vmatpush.msra.mxu0 %v2443
    %3011 = vmatpush.msra.mxu0 %v2440
    %3012 = vmatpush.msra.mxu0 %v2437
    %3013 = vmatpush.msra.mxu0 %v2434
    %3014 = vmatpush.msra.mxu0 %v2431
    %3015 = vmatpush.msra.mxu0 %v2428
    %3016 = vmatpush.msra.mxu0 %v2425
    %3017 = vmatmul.f32.gmra.mxu0 %v2017
    %v3018 = vpop.f32.mrf.mxu0
    %v3019 = vadd.f32 %v2996, %v3018
    %3020 = vmatmul.f32.gmra.mxu0 %v2033
    %v3021 = vpop.f32.mrf.mxu0
    %v3022 = vadd.f32 %v2999, %v3021
    %3023 = vdwg.mxu0
    %3024 = vmatpush.msra.mxu0 %v2518
    %3025 = vmatpush.msra.mxu0 %v2515
    %3026 = vmatpush.msra.mxu0 %v2512
    %3027 = vmatpush.msra.mxu0 %v2509
    %3028 = vmatpush.msra.mxu0 %v2506
    %3029 = vmatpush.msra.mxu0 %v2503
    %3030 = vmatpush.msra.mxu0 %v2500
    %3031 = vmatpush.msra.mxu0 %v2497
    %3032 = vmatpush.msra.mxu0 %v2494
    %3033 = vmatpush.msra.mxu0 %v2491
    %3034 = vmatpush.msra.mxu0 %v2488
    %3035 = vmatpush.msra.mxu0 %v2485
    %3036 = vmatpush.msra.mxu0 %v2482
    %3037 = vmatpush.msra.mxu0 %v2479
    %3038 = vmatpush.msra.mxu0 %v2476
    %3039 = vmatpush.msra.mxu0 %v2473
    %3040 = vmatmul.f32.gmra.mxu0 %v2018
    %v3041 = vpop.f32.mrf.mxu0
    %v3042 = vadd.f32 %v3019, %v3041
    %3043 = vmatmul.f32.gmra.mxu0 %v2034
    %v3044 = vpop.f32.mrf.mxu0
    %v3045 = vadd.f32 %v3022, %v3044
    %3046 = vdwg.mxu0
    %3047 = vmatpush.msra.mxu0 %v2566
    %3048 = vmatpush.msra.mxu0 %v2563
    %3049 = vmatpush.msra.mxu0 %v2560
    %3050 = vmatpush.msra.mxu0 %v2557
    %3051 = vmatpush.msra.mxu0 %v2554
    %3052 = vmatpush.msra.mxu0 %v2551
    %3053 = vmatpush.msra.mxu0 %v2548
    %3054 = vmatpush.msra.mxu0 %v2545
    %3055 = vmatpush.msra.mxu0 %v2542
    %3056 = vmatpush.msra.mxu0 %v2539
    %3057 = vmatpush.msra.mxu0 %v2536
    %3058 = vmatpush.msra.mxu0 %v2533
    %3059 = vmatpush.msra.mxu0 %v2530
    %3060 = vmatpush.msra.mxu0 %v2527
    %3061 = vmatpush.msra.mxu0 %v2524
    %3062 = vmatpush.msra.mxu0 %v2521
    %3063 = vmatmul.f32.gmra.mxu0 %v2019
    %v3064 = vpop.f32.mrf.mxu0
    %v3065 = vadd.f32 %v3042, %v3064
    %3066 = vmatmul.f32.gmra.mxu0 %v2035
    %v3067 = vpop.f32.mrf.mxu0
    %v3068 = vadd.f32 %v3045, %v3067
    %3069 = vdwg.mxu0
    %3070 = vmatpush.msra.mxu0 %v2614
    %3071 = vmatpush.msra.mxu0 %v2611
    %3072 = vmatpush.msra.mxu0 %v2608
    %3073 = vmatpush.msra.mxu0 %v2605
    %3074 = vmatpush.msra.mxu0 %v2602
    %3075 = vmatpush.msra.mxu0 %v2599
    %3076 = vmatpush.msra.mxu0 %v2596
    %3077 = vmatpush.msra.mxu0 %v2593
    %3078 = vmatpush.msra.mxu0 %v2590
    %3079 = vmatpush.msra.mxu0 %v2587
    %3080 = vmatpush.msra.mxu0 %v2584
    %3081 = vmatpush.msra.mxu0 %v2581
    %3082 = vmatpush.msra.mxu0 %v2578
    %3083 = vmatpush.msra.mxu0 %v2575
    %3084 = vmatpush.msra.mxu0 %v2572
    %3085 = vmatpush.msra.mxu0 %v2569
    %3086 = vmatmul.f32.gmra.mxu0 %v2020
    %v3087 = vpop.f32.mrf.mxu0
    %v3088 = vadd.f32 %v3065, %v3087
    %3089 = vmatmul.f32.gmra.mxu0 %v2036
    %v3090 = vpop.f32.mrf.mxu0
    %v3091 = vadd.f32 %v3068, %v3090
    %3092 = vdwg.mxu0
    %3093 = vmatpush.msra.mxu0 %v2662
    %3094 = vmatpush.msra.mxu0 %v2659
    %3095 = vmatpush.msra.mxu0 %v2656
    %3096 = vmatpush.msra.mxu0 %v2653
    %3097 = vmatpush.msra.mxu0 %v2650
    %3098 = vmatpush.msra.mxu0 %v2647
    %3099 = vmatpush.msra.mxu0 %v2644
    %3100 = vmatpush.msra.mxu0 %v2641
    %3101 = vmatpush.msra.mxu0 %v2638
    %3102 = vmatpush.msra.mxu0 %v2635
    %3103 = vmatpush.msra.mxu0 %v2632
    %3104 = vmatpush.msra.mxu0 %v2629
    %3105 = vmatpush.msra.mxu0 %v2626
    %3106 = vmatpush.msra.mxu0 %v2623
    %3107 = vmatpush.msra.mxu0 %v2620
    %3108 = vmatpush.msra.mxu0 %v2617
    %3109 = vmatmul.f32.gmra.mxu0 %v2021
    %v3110 = vpop.f32.mrf.mxu0
    %v3111 = vadd.f32 %v3088, %v3110
    %3112 = vmatmul.f32.gmra.mxu0 %v2037
    %v3113 = vpop.f32.mrf.mxu0
    %v3114 = vadd.f32 %v3091, %v3113
    %3115 = vdwg.mxu0
    %3116 = vmatpush.msra.mxu0 %v2710
    %3117 = vmatpush.msra.mxu0 %v2707
    %3118 = vmatpush.msra.mxu0 %v2704
    %3119 = vmatpush.msra.mxu0 %v2701
    %3120 = vmatpush.msra.mxu0 %v2698
    %3121 = vmatpush.msra.mxu0 %v2695
    %3122 = vmatpush.msra.mxu0 %v2692
    %3123 = vmatpush.msra.mxu0 %v2689
    %3124 = vmatpush.msra.mxu0 %v2686
    %3125 = vmatpush.msra.mxu0 %v2683
    %3126 = vmatpush.msra.mxu0 %v2680
    %3127 = vmatpush.msra.mxu0 %v2677
    %3128 = vmatpush.msra.mxu0 %v2674
    %3129 = vmatpush.msra.mxu0 %v2671
    %3130 = vmatpush.msra.mxu0 %v2668
    %3131 = vmatpush.msra.mxu0 %v2665
    %3132 = vmatmul.f32.gmra.mxu0 %v2022
    %v3133 = vpop.f32.mrf.mxu0
    %v3134 = vadd.f32 %v3111, %v3133
    %3135 = vmatmul.f32.gmra.mxu0 %v2038
    %v3136 = vpop.f32.mrf.mxu0
    %v3137 = vadd.f32 %v3114, %v3136
    %3138 = vdwg.mxu0
    %3139 = vmatpush.msra.mxu0 %v2758
    %3140 = vmatpush.msra.mxu0 %v2755
    %3141 = vmatpush.msra.mxu0 %v2752
    %3142 = vmatpush.msra.mxu0 %v2749
    %3143 = vmatpush.msra.mxu0 %v2746
    %3144 = vmatpush.msra.mxu0 %v2743
    %3145 = vmatpush.msra.mxu0 %v2740
    %3146 = vmatpush.msra.mxu0 %v2737
    %3147 = vmatpush.msra.mxu0 %v2734
    %3148 = vmatpush.msra.mxu0 %v2731
    %3149 = vmatpush.msra.mxu0 %v2728
    %3150 = vmatpush.msra.mxu0 %v2725
    %3151 = vmatpush.msra.mxu0 %v2722
    %3152 = vmatpush.msra.mxu0 %v2719
    %3153 = vmatpush.msra.mxu0 %v2716
    %3154 = vmatpush.msra.mxu0 %v2713
    %3155 = vmatmul.f32.gmra.mxu0 %v2023
    %v3156 = vpop.f32.mrf.mxu0
    %v3157 = vadd.f32 %v3134, %v3156
    %3158 = vmatmul.f32.gmra.mxu0 %v2039
    %v3159 = vpop.f32.mrf.mxu0
    %v3160 = vadd.f32 %v3137, %v3159
    %3161 = vdwg.mxu0
    %3162 = vmatpush.msra.mxu0 %v2806
    %3163 = vmatpush.msra.mxu0 %v2803
    %3164 = vmatpush.msra.mxu0 %v2800
    %3165 = vmatpush.msra.mxu0 %v2797
    %3166 = vmatpush.msra.mxu0 %v2794
    %3167 = vmatpush.msra.mxu0 %v2791
    %3168 = vmatpush.msra.mxu0 %v2788
    %3169 = vmatpush.msra.mxu0 %v2785
    %3170 = vmatpush.msra.mxu0 %v2782
    %3171 = vmatpush.msra.mxu0 %v2779
    %3172 = vmatpush.msra.mxu0 %v2776
    %3173 = vmatpush.msra.mxu0 %v2773
    %3174 = vmatpush.msra.mxu0 %v2770
    %3175 = vmatpush.msra.mxu0 %v2767
    %3176 = vmatpush.msra.mxu0 %v2764
    %3177 = vmatpush.msra.mxu0 %v2761
    %3178 = vmatmul.f32.gmra.mxu0 %v2024
    %v3179 = vpop.f32.mrf.mxu0
    %v3180 = vadd.f32 %v3157, %v3179
    %3181 = vmatmul.f32.gmra.mxu0 %v2040
    %v3182 = vpop.f32.mrf.mxu0
    %v3183 = vadd.f32 %v3160, %v3182
    %3184 = vdwg.mxu0
    %3185 = vmatpush.msra.mxu0 %v2087
    %3186 = vmatpush.msra.mxu0 %v2084
    %3187 = vmatpush.msra.mxu0 %v2081
    %3188 = vmatpush.msra.mxu0 %v2078
    %3189 = vmatpush.msra.mxu0 %v2075
    %3190 = vmatpush.msra.mxu0 %v2072
    %3191 = vmatpush.msra.mxu0 %v2069
    %3192 = vmatpush.msra.mxu0 %v2066
    %3193 = vmatpush.msra.mxu0 %v2063
    %3194 = vmatpush.msra.mxu0 %v2060
    %3195 = vmatpush.msra.mxu0 %v2057
    %3196 = vmatpush.msra.mxu0 %v2054
    %3197 = vmatpush.msra.mxu0 %v2051
    %3198 = vmatpush.msra.mxu0 %v2048
    %3199 = vmatpush.msra.mxu0 %v2045
    %3200 = vmatpush.msra.mxu0 %v2042
    %3201 = vmatmul.f32.gmra.mxu0 %v2009
    %v3202 = vpop.f32.mrf.mxu0
    %v3203 = vadd.f32 %v2812, %v3202
    %3204 = vmatmul.f32.gmra.mxu0 %v2025
    %v3205 = vpop.f32.mrf.mxu0
    %v3206 = vadd.f32 %v2812, %v3205
    %3207 = vdwg.mxu0
    %3208 = vmatpush.msra.mxu0 %v2135
    %3209 = vmatpush.msra.mxu0 %v2132
    %3210 = vmatpush.msra.mxu0 %v2129
    %3211 = vmatpush.msra.mxu0 %v2126
    %3212 = vmatpush.msra.mxu0 %v2123
    %3213 = vmatpush.msra.mxu0 %v2120
    %3214 = vmatpush.msra.mxu0 %v2117
    %3215 = vmatpush.msra.mxu0 %v2114
    %3216 = vmatpush.msra.mxu0 %v2111
    %3217 = vmatpush.msra.mxu0 %v2108
    %3218 = vmatpush.msra.mxu0 %v2105
    %3219 = vmatpush.msra.mxu0 %v2102
    %3220 = vmatpush.msra.mxu0 %v2099
    %3221 = vmatpush.msra.mxu0 %v2096
    %3222 = vmatpush.msra.mxu0 %v2093
    %3223 = vmatpush.msra.mxu0 %v2090
    %3224 = vmatmul.f32.gmra.mxu0 %v2010
    %v3225 = vpop.f32.mrf.mxu0
    %v3226 = vadd.f32 %v3203, %v3225
    %3227 = vmatmul.f32.gmra.mxu0 %v2026
    %v3228 = vpop.f32.mrf.mxu0
    %v3229 = vadd.f32 %v3206, %v3228
    %3230 = vdwg.mxu0
    %3231 = vmatpush.msra.mxu0 %v2183
    %3232 = vmatpush.msra.mxu0 %v2180
    %3233 = vmatpush.msra.mxu0 %v2177
    %3234 = vmatpush.msra.mxu0 %v2174
    %3235 = vmatpush.msra.mxu0 %v2171
    %3236 = vmatpush.msra.mxu0 %v2168
    %3237 = vmatpush.msra.mxu0 %v2165
    %3238 = vmatpush.msra.mxu0 %v2162
    %3239 = vmatpush.msra.mxu0 %v2159
    %3240 = vmatpush.msra.mxu0 %v2156
    %3241 = vmatpush.msra.mxu0 %v2153
    %3242 = vmatpush.msra.mxu0 %v2150
    %3243 = vmatpush.msra.mxu0 %v2147
    %3244 = vmatpush.msra.mxu0 %v2144
    %3245 = vmatpush.msra.mxu0 %v2141
    %3246 = vmatpush.msra.mxu0 %v2138
    %3247 = vmatmul.f32.gmra.mxu0 %v2011
    %v3248 = vpop.f32.mrf.mxu0
    %v3249 = vadd.f32 %v3226, %v3248
    %3250 = vmatmul.f32.gmra.mxu0 %v2027
    %v3251 = vpop.f32.mrf.mxu0
    %v3252 = vadd.f32 %v3229, %v3251
    %3253 = vdwg.mxu0
    %3254 = vmatpush.msra.mxu0 %v2231
    %3255 = vmatpush.msra.mxu0 %v2228
    %3256 = vmatpush.msra.mxu0 %v2225
    %3257 = vmatpush.msra.mxu0 %v2222
    %3258 = vmatpush.msra.mxu0 %v2219
    %3259 = vmatpush.msra.mxu0 %v2216
    %3260 = vmatpush.msra.mxu0 %v2213
    %3261 = vmatpush.msra.mxu0 %v2210
    %3262 = vmatpush.msra.mxu0 %v2207
    %3263 = vmatpush.msra.mxu0 %v2204
    %3264 = vmatpush.msra.mxu0 %v2201
    %3265 = vmatpush.msra.mxu0 %v2198
    %3266 = vmatpush.msra.mxu0 %v2195
    %3267 = vmatpush.msra.mxu0 %v2192
    %3268 = vmatpush.msra.mxu0 %v2189
    %3269 = vmatpush.msra.mxu0 %v2186
    %3270 = vmatmul.f32.gmra.mxu0 %v2012
    %v3271 = vpop.f32.mrf.mxu0
    %v3272 = vadd.f32 %v3249, %v3271
    %3273 = vmatmul.f32.gmra.mxu0 %v2028
    %v3274 = vpop.f32.mrf.mxu0
    %v3275 = vadd.f32 %v3252, %v3274
    %3276 = vdwg.mxu0
    %3277 = vmatpush.msra.mxu0 %v2279
    %3278 = vmatpush.msra.mxu0 %v2276
    %3279 = vmatpush.msra.mxu0 %v2273
    %3280 = vmatpush.msra.mxu0 %v2270
    %3281 = vmatpush.msra.mxu0 %v2267
    %3282 = vmatpush.msra.mxu0 %v2264
    %3283 = vmatpush.msra.mxu0 %v2261
    %3284 = vmatpush.msra.mxu0 %v2258
    %3285 = vmatpush.msra.mxu0 %v2255
    %3286 = vmatpush.msra.mxu0 %v2252
    %3287 = vmatpush.msra.mxu0 %v2249
    %3288 = vmatpush.msra.mxu0 %v2246
    %3289 = vmatpush.msra.mxu0 %v2243
    %3290 = vmatpush.msra.mxu0 %v2240
    %3291 = vmatpush.msra.mxu0 %v2237
    %3292 = vmatpush.msra.mxu0 %v2234
    %3293 = vmatmul.f32.gmra.mxu0 %v2013
    %v3294 = vpop.f32.mrf.mxu0
    %v3295 = vadd.f32 %v3272, %v3294
    %3296 = vmatmul.f32.gmra.mxu0 %v2029
    %v3297 = vpop.f32.mrf.mxu0
    %v3298 = vadd.f32 %v3275, %v3297
    %3299 = vdwg.mxu0
    %3300 = vmatpush.msra.mxu0 %v2327
    %3301 = vmatpush.msra.mxu0 %v2324
    %3302 = vmatpush.msra.mxu0 %v2321
    %3303 = vmatpush.msra.mxu0 %v2318
    %3304 = vmatpush.msra.mxu0 %v2315
    %3305 = vmatpush.msra.mxu0 %v2312
    %3306 = vmatpush.msra.mxu0 %v2309
    %3307 = vmatpush.msra.mxu0 %v2306
    %3308 = vmatpush.msra.mxu0 %v2303
    %3309 = vmatpush.msra.mxu0 %v2300
    %3310 = vmatpush.msra.mxu0 %v2297
    %3311 = vmatpush.msra.mxu0 %v2294
    %3312 = vmatpush.msra.mxu0 %v2291
    %3313 = vmatpush.msra.mxu0 %v2288
    %3314 = vmatpush.msra.mxu0 %v2285
    %3315 = vmatpush.msra.mxu0 %v2282
    %3316 = vmatmul.f32.gmra.mxu0 %v2014
    %v3317 = vpop.f32.mrf.mxu0
    %v3318 = vadd.f32 %v3295, %v3317
    %3319 = vmatmul.f32.gmra.mxu0 %v2030
    %v3320 = vpop.f32.mrf.mxu0
    %v3321 = vadd.f32 %v3298, %v3320
    %3322 = vdwg.mxu0
    %3323 = vmatpush.msra.mxu0 %v2375
    %3324 = vmatpush.msra.mxu0 %v2372
    %3325 = vmatpush.msra.mxu0 %v2369
    %3326 = vmatpush.msra.mxu0 %v2366
    %3327 = vmatpush.msra.mxu0 %v2363
    %3328 = vmatpush.msra.mxu0 %v2360
    %3329 = vmatpush.msra.mxu0 %v2357
    %3330 = vmatpush.msra.mxu0 %v2354
    %3331 = vmatpush.msra.mxu0 %v2351
    %3332 = vmatpush.msra.mxu0 %v2348
    %3333 = vmatpush.msra.mxu0 %v2345
    %3334 = vmatpush.msra.mxu0 %v2342
    %3335 = vmatpush.msra.mxu0 %v2339
    %3336 = vmatpush.msra.mxu0 %v2336
    %3337 = vmatpush.msra.mxu0 %v2333
    %3338 = vmatpush.msra.mxu0 %v2330
    %3339 = vmatmul.f32.gmra.mxu0 %v2015
    %v3340 = vpop.f32.mrf.mxu0
    %v3341 = vadd.f32 %v3318, %v3340
    %3342 = vmatmul.f32.gmra.mxu0 %v2031
    %v3343 = vpop.f32.mrf.mxu0
    %v3344 = vadd.f32 %v3321, %v3343
    %3345 = vdwg.mxu0
    %3346 = vmatpush.msra.mxu0 %v2423
    %3347 = vmatpush.msra.mxu0 %v2420
    %3348 = vmatpush.msra.mxu0 %v2417
    %3349 = vmatpush.msra.mxu0 %v2414
    %3350 = vmatpush.msra.mxu0 %v2411
    %3351 = vmatpush.msra.mxu0 %v2408
    %3352 = vmatpush.msra.mxu0 %v2405
    %3353 = vmatpush.msra.mxu0 %v2402
    %3354 = vmatpush.msra.mxu0 %v2399
    %3355 = vmatpush.msra.mxu0 %v2396
    %3356 = vmatpush.msra.mxu0 %v2393
    %3357 = vmatpush.msra.mxu0 %v2390
    %3358 = vmatpush.msra.mxu0 %v2387
    %3359 = vmatpush.msra.mxu0 %v2384
    %3360 = vmatpush.msra.mxu0 %v2381
    %3361 = vmatpush.msra.mxu0 %v2378
    %3362 = vmatmul.f32.gmra.mxu0 %v2016
    %v3363 = vpop.f32.mrf.mxu0
    %v3364 = vadd.f32 %v3341, %v3363
    %3365 = vmatmul.f32.gmra.mxu0 %v2032
    %v3366 = vpop.f32.mrf.mxu0
    %v3367 = vadd.f32 %v3344, %v3366
    %3368 = vdwg.mxu0
    %3369 = vmatpush.msra.mxu0 %v2471
    %3370 = vmatpush.msra.mxu0 %v2468
    %3371 = vmatpush.msra.mxu0 %v2465
    %3372 = vmatpush.msra.mxu0 %v2462
    %3373 = vmatpush.msra.mxu0 %v2459
    %3374 = vmatpush.msra.mxu0 %v2456
    %3375 = vmatpush.msra.mxu0 %v2453
    %3376 = vmatpush.msra.mxu0 %v2450
    %3377 = vmatpush.msra.mxu0 %v2447
    %3378 = vmatpush.msra.mxu0 %v2444
    %3379 = vmatpush.msra.mxu0 %v2441
    %3380 = vmatpush.msra.mxu0 %v2438
    %3381 = vmatpush.msra.mxu0 %v2435
    %3382 = vmatpush.msra.mxu0 %v2432
    %3383 = vmatpush.msra.mxu0 %v2429
    %3384 = vmatpush.msra.mxu0 %v2426
    %3385 = vmatmul.f32.gmra.mxu0 %v2017
    %v3386 = vpop.f32.mrf.mxu0
    %v3387 = vadd.f32 %v3364, %v3386
    %3388 = vmatmul.f32.gmra.mxu0 %v2033
    %v3389 = vpop.f32.mrf.mxu0
    %v3390 = vadd.f32 %v3367, %v3389
    %3391 = vdwg.mxu0
    %3392 = vmatpush.msra.mxu0 %v2519
    %3393 = vmatpush.msra.mxu0 %v2516
    %3394 = vmatpush.msra.mxu0 %v2513
    %3395 = vmatpush.msra.mxu0 %v2510
    %3396 = vmatpush.msra.mxu0 %v2507
    %3397 = vmatpush.msra.mxu0 %v2504
    %3398 = vmatpush.msra.mxu0 %v2501
    %3399 = vmatpush.msra.mxu0 %v2498
    %3400 = vmatpush.msra.mxu0 %v2495
    %3401 = vmatpush.msra.mxu0 %v2492
    %3402 = vmatpush.msra.mxu0 %v2489
    %3403 = vmatpush.msra.mxu0 %v2486
    %3404 = vmatpush.msra.mxu0 %v2483
    %3405 = vmatpush.msra.mxu0 %v2480
    %3406 = vmatpush.msra.mxu0 %v2477
    %3407 = vmatpush.msra.mxu0 %v2474
    %3408 = vmatmul.f32.gmra.mxu0 %v2018
    %v3409 = vpop.f32.mrf.mxu0
    %v3410 = vadd.f32 %v3387, %v3409
    %3411 = vmatmul.f32.gmra.mxu0 %v2034
    %v3412 = vpop.f32.mrf.mxu0
    %v3413 = vadd.f32 %v3390, %v3412
    %3414 = vdwg.mxu0
    %3415 = vmatpush.msra.mxu0 %v2567
    %3416 = vmatpush.msra.mxu0 %v2564
    %3417 = vmatpush.msra.mxu0 %v2561
    %3418 = vmatpush.msra.mxu0 %v2558
    %3419 = vmatpush.msra.mxu0 %v2555
    %3420 = vmatpush.msra.mxu0 %v2552
    %3421 = vmatpush.msra.mxu0 %v2549
    %3422 = vmatpush.msra.mxu0 %v2546
    %3423 = vmatpush.msra.mxu0 %v2543
    %3424 = vmatpush.msra.mxu0 %v2540
    %3425 = vmatpush.msra.mxu0 %v2537
    %3426 = vmatpush.msra.mxu0 %v2534
    %3427 = vmatpush.msra.mxu0 %v2531
    %3428 = vmatpush.msra.mxu0 %v2528
    %3429 = vmatpush.msra.mxu0 %v2525
    %3430 = vmatpush.msra.mxu0 %v2522
    %3431 = vmatmul.f32.gmra.mxu0 %v2019
    %v3432 = vpop.f32.mrf.mxu0
    %v3433 = vadd.f32 %v3410, %v3432
    %3434 = vmatmul.f32.gmra.mxu0 %v2035
    %v3435 = vpop.f32.mrf.mxu0
    %v3436 = vadd.f32 %v3413, %v3435
    %3437 = vdwg.mxu0
    %3438 = vmatpush.msra.mxu0 %v2615
    %3439 = vmatpush.msra.mxu0 %v2612
    %3440 = vmatpush.msra.mxu0 %v2609
    %3441 = vmatpush.msra.mxu0 %v2606
    %3442 = vmatpush.msra.mxu0 %v2603
    %3443 = vmatpush.msra.mxu0 %v2600
    %3444 = vmatpush.msra.mxu0 %v2597
    %3445 = vmatpush.msra.mxu0 %v2594
    %3446 = vmatpush.msra.mxu0 %v2591
    %3447 = vmatpush.msra.mxu0 %v2588
    %3448 = vmatpush.msra.mxu0 %v2585
    %3449 = vmatpush.msra.mxu0 %v2582
    %3450 = vmatpush.msra.mxu0 %v2579
    %3451 = vmatpush.msra.mxu0 %v2576
    %3452 = vmatpush.msra.mxu0 %v2573
    %3453 = vmatpush.msra.mxu0 %v2570
    %3454 = vmatmul.f32.gmra.mxu0 %v2020
    %v3455 = vpop.f32.mrf.mxu0
    %v3456 = vadd.f32 %v3433, %v3455
    %3457 = vmatmul.f32.gmra.mxu0 %v2036
    %v3458 = vpop.f32.mrf.mxu0
    %v3459 = vadd.f32 %v3436, %v3458
    %3460 = vdwg.mxu0
    %3461 = vmatpush.msra.mxu0 %v2663
    %3462 = vmatpush.msra.mxu0 %v2660
    %3463 = vmatpush.msra.mxu0 %v2657
    %3464 = vmatpush.msra.mxu0 %v2654
    %3465 = vmatpush.msra.mxu0 %v2651
    %3466 = vmatpush.msra.mxu0 %v2648
    %3467 = vmatpush.msra.mxu0 %v2645
    %3468 = vmatpush.msra.mxu0 %v2642
    %3469 = vmatpush.msra.mxu0 %v2639
    %3470 = vmatpush.msra.mxu0 %v2636
    %3471 = vmatpush.msra.mxu0 %v2633
    %3472 = vmatpush.msra.mxu0 %v2630
    %3473 = vmatpush.msra.mxu0 %v2627
    %3474 = vmatpush.msra.mxu0 %v2624
    %3475 = vmatpush.msra.mxu0 %v2621
    %3476 = vmatpush.msra.mxu0 %v2618
    %3477 = vmatmul.f32.gmra.mxu0 %v2021
    %v3478 = vpop.f32.mrf.mxu0
    %v3479 = vadd.f32 %v3456, %v3478
    %3480 = vmatmul.f32.gmra.mxu0 %v2037
    %v3481 = vpop.f32.mrf.mxu0
    %v3482 = vadd.f32 %v3459, %v3481
    %3483 = vdwg.mxu0
    %3484 = vmatpush.msra.mxu0 %v2711
    %3485 = vmatpush.msra.mxu0 %v2708
    %3486 = vmatpush.msra.mxu0 %v2705
    %3487 = vmatpush.msra.mxu0 %v2702
    %3488 = vmatpush.msra.mxu0 %v2699
    %3489 = vmatpush.msra.mxu0 %v2696
    %3490 = vmatpush.msra.mxu0 %v2693
    %3491 = vmatpush.msra.mxu0 %v2690
    %3492 = vmatpush.msra.mxu0 %v2687
    %3493 = vmatpush.msra.mxu0 %v2684
    %3494 = vmatpush.msra.mxu0 %v2681
    %3495 = vmatpush.msra.mxu0 %v2678
    %3496 = vmatpush.msra.mxu0 %v2675
    %3497 = vmatpush.msra.mxu0 %v2672
    %3498 = vmatpush.msra.mxu0 %v2669
    %3499 = vmatpush.msra.mxu0 %v2666
    %3500 = vmatmul.f32.gmra.mxu0 %v2022
    %v3501 = vpop.f32.mrf.mxu0
    %v3502 = vadd.f32 %v3479, %v3501
    %3503 = vmatmul.f32.gmra.mxu0 %v2038
    %v3504 = vpop.f32.mrf.mxu0
    %v3505 = vadd.f32 %v3482, %v3504
    %3506 = vdwg.mxu0
    %3507 = vmatpush.msra.mxu0 %v2759
    %3508 = vmatpush.msra.mxu0 %v2756
    %3509 = vmatpush.msra.mxu0 %v2753
    %3510 = vmatpush.msra.mxu0 %v2750
    %3511 = vmatpush.msra.mxu0 %v2747
    %3512 = vmatpush.msra.mxu0 %v2744
    %3513 = vmatpush.msra.mxu0 %v2741
    %3514 = vmatpush.msra.mxu0 %v2738
    %3515 = vmatpush.msra.mxu0 %v2735
    %3516 = vmatpush.msra.mxu0 %v2732
    %3517 = vmatpush.msra.mxu0 %v2729
    %3518 = vmatpush.msra.mxu0 %v2726
    %3519 = vmatpush.msra.mxu0 %v2723
    %3520 = vmatpush.msra.mxu0 %v2720
    %3521 = vmatpush.msra.mxu0 %v2717
    %3522 = vmatpush.msra.mxu0 %v2714
    %3523 = vmatmul.f32.gmra.mxu0 %v2023
    %v3524 = vpop.f32.mrf.mxu0
    %v3525 = vadd.f32 %v3502, %v3524
    %3526 = vmatmul.f32.gmra.mxu0 %v2039
    %v3527 = vpop.f32.mrf.mxu0
    %v3528 = vadd.f32 %v3505, %v3527
    %3529 = vdwg.mxu0
    %3530 = vmatpush.msra.mxu0 %v2807
    %3531 = vmatpush.msra.mxu0 %v2804
    %3532 = vmatpush.msra.mxu0 %v2801
    %3533 = vmatpush.msra.mxu0 %v2798
    %3534 = vmatpush.msra.mxu0 %v2795
    %3535 = vmatpush.msra.mxu0 %v2792
    %3536 = vmatpush.msra.mxu0 %v2789
    %3537 = vmatpush.msra.mxu0 %v2786
    %3538 = vmatpush.msra.mxu0 %v2783
    %3539 = vmatpush.msra.mxu0 %v2780
    %3540 = vmatpush.msra.mxu0 %v2777
    %3541 = vmatpush.msra.mxu0 %v2774
    %3542 = vmatpush.msra.mxu0 %v2771
    %3543 = vmatpush.msra.mxu0 %v2768
    %3544 = vmatpush.msra.mxu0 %v2765
    %3545 = vmatpush.msra.mxu0 %v2762
    %3546 = vmatmul.f32.gmra.mxu0 %v2024
    %v3547 = vpop.f32.mrf.mxu0
    %v3548 = vadd.f32 %v3525, %v3547
    %3549 = vmatmul.f32.gmra.mxu0 %v2040
    %v3550 = vpop.f32.mrf.mxu0
    %v3551 = vadd.f32 %v3528, %v3550
    %3552 = vdwg.mxu0
    %3553 = vmatpush.msra.mxu0 %v2088
    %3554 = vmatpush.msra.mxu0 %v2085
    %3555 = vmatpush.msra.mxu0 %v2082
    %3556 = vmatpush.msra.mxu0 %v2079
    %3557 = vmatpush.msra.mxu0 %v2076
    %3558 = vmatpush.msra.mxu0 %v2073
    %3559 = vmatpush.msra.mxu0 %v2070
    %3560 = vmatpush.msra.mxu0 %v2067
    %3561 = vmatpush.msra.mxu0 %v2064
    %3562 = vmatpush.msra.mxu0 %v2061
    %3563 = vmatpush.msra.mxu0 %v2058
    %3564 = vmatpush.msra.mxu0 %v2055
    %3565 = vmatpush.msra.mxu0 %v2052
    %3566 = vmatpush.msra.mxu0 %v2049
    %3567 = vmatpush.msra.mxu0 %v2046
    %3568 = vmatpush.msra.mxu0 %v2043
    %3569 = vmatmul.f32.gmra.mxu0 %v2009
    %v3570 = vpop.f32.mrf.mxu0
    %v3571 = vadd.f32 %v2813, %v3570
    %3572 = vmatmul.f32.gmra.mxu0 %v2025
    %v3573 = vpop.f32.mrf.mxu0
    %v3574 = vadd.f32 %v2813, %v3573
    %3575 = vdwg.mxu0
    %3576 = vmatpush.msra.mxu0 %v2136
    %3577 = vmatpush.msra.mxu0 %v2133
    %3578 = vmatpush.msra.mxu0 %v2130
    %3579 = vmatpush.msra.mxu0 %v2127
    %3580 = vmatpush.msra.mxu0 %v2124
    %3581 = vmatpush.msra.mxu0 %v2121
    %3582 = vmatpush.msra.mxu0 %v2118
    %3583 = vmatpush.msra.mxu0 %v2115
    %3584 = vmatpush.msra.mxu0 %v2112
    %3585 = vmatpush.msra.mxu0 %v2109
    %3586 = vmatpush.msra.mxu0 %v2106
    %3587 = vmatpush.msra.mxu0 %v2103
    %3588 = vmatpush.msra.mxu0 %v2100
    %3589 = vmatpush.msra.mxu0 %v2097
    %3590 = vmatpush.msra.mxu0 %v2094
    %3591 = vmatpush.msra.mxu0 %v2091
    %3592 = vmatmul.f32.gmra.mxu0 %v2010
    %v3593 = vpop.f32.mrf.mxu0
    %v3594 = vadd.f32 %v3571, %v3593
    %3595 = vmatmul.f32.gmra.mxu0 %v2026
    %v3596 = vpop.f32.mrf.mxu0
    %v3597 = vadd.f32 %v3574, %v3596
    %3598 = vdwg.mxu0
    %3599 = vmatpush.msra.mxu0 %v2184
    %3600 = vmatpush.msra.mxu0 %v2181
    %3601 = vmatpush.msra.mxu0 %v2178
    %3602 = vmatpush.msra.mxu0 %v2175
    %3603 = vmatpush.msra.mxu0 %v2172
    %3604 = vmatpush.msra.mxu0 %v2169
    %3605 = vmatpush.msra.mxu0 %v2166
    %3606 = vmatpush.msra.mxu0 %v2163
    %3607 = vmatpush.msra.mxu0 %v2160
    %3608 = vmatpush.msra.mxu0 %v2157
    %3609 = vmatpush.msra.mxu0 %v2154
    %3610 = vmatpush.msra.mxu0 %v2151
    %3611 = vmatpush.msra.mxu0 %v2148
    %3612 = vmatpush.msra.mxu0 %v2145
    %3613 = vmatpush.msra.mxu0 %v2142
    %3614 = vmatpush.msra.mxu0 %v2139
    %3615 = vmatmul.f32.gmra.mxu0 %v2011
    %v3616 = vpop.f32.mrf.mxu0
    %v3617 = vadd.f32 %v3594, %v3616
    %3618 = vmatmul.f32.gmra.mxu0 %v2027
    %v3619 = vpop.f32.mrf.mxu0
    %v3620 = vadd.f32 %v3597, %v3619
    %3621 = vdwg.mxu0
    %3622 = vmatpush.msra.mxu0 %v2232
    %3623 = vmatpush.msra.mxu0 %v2229
    %3624 = vmatpush.msra.mxu0 %v2226
    %3625 = vmatpush.msra.mxu0 %v2223
    %3626 = vmatpush.msra.mxu0 %v2220
    %3627 = vmatpush.msra.mxu0 %v2217
    %3628 = vmatpush.msra.mxu0 %v2214
    %3629 = vmatpush.msra.mxu0 %v2211
    %3630 = vmatpush.msra.mxu0 %v2208
    %3631 = vmatpush.msra.mxu0 %v2205
    %3632 = vmatpush.msra.mxu0 %v2202
    %3633 = vmatpush.msra.mxu0 %v2199
    %3634 = vmatpush.msra.mxu0 %v2196
    %3635 = vmatpush.msra.mxu0 %v2193
    %3636 = vmatpush.msra.mxu0 %v2190
    %3637 = vmatpush.msra.mxu0 %v2187
    %3638 = vmatmul.f32.gmra.mxu0 %v2012
    %v3639 = vpop.f32.mrf.mxu0
    %v3640 = vadd.f32 %v3617, %v3639
    %3641 = vmatmul.f32.gmra.mxu0 %v2028
    %v3642 = vpop.f32.mrf.mxu0
    %v3643 = vadd.f32 %v3620, %v3642
    %3644 = vdwg.mxu0
    %3645 = vmatpush.msra.mxu0 %v2280
    %3646 = vmatpush.msra.mxu0 %v2277
    %3647 = vmatpush.msra.mxu0 %v2274
    %3648 = vmatpush.msra.mxu0 %v2271
    %3649 = vmatpush.msra.mxu0 %v2268
    %3650 = vmatpush.msra.mxu0 %v2265
    %3651 = vmatpush.msra.mxu0 %v2262
    %3652 = vmatpush.msra.mxu0 %v2259
    %3653 = vmatpush.msra.mxu0 %v2256
    %3654 = vmatpush.msra.mxu0 %v2253
    %3655 = vmatpush.msra.mxu0 %v2250
    %3656 = vmatpush.msra.mxu0 %v2247
    %3657 = vmatpush.msra.mxu0 %v2244
    %3658 = vmatpush.msra.mxu0 %v2241
    %3659 = vmatpush.msra.mxu0 %v2238
    %3660 = vmatpush.msra.mxu0 %v2235
    %3661 = vmatmul.f32.gmra.mxu0 %v2013
    %v3662 = vpop.f32.mrf.mxu0
    %v3663 = vadd.f32 %v3640, %v3662
    %3664 = vmatmul.f32.gmra.mxu0 %v2029
    %v3665 = vpop.f32.mrf.mxu0
    %v3666 = vadd.f32 %v3643, %v3665
    %3667 = vdwg.mxu0
    %3668 = vmatpush.msra.mxu0 %v2328
    %3669 = vmatpush.msra.mxu0 %v2325
    %3670 = vmatpush.msra.mxu0 %v2322
    %3671 = vmatpush.msra.mxu0 %v2319
    %3672 = vmatpush.msra.mxu0 %v2316
    %3673 = vmatpush.msra.mxu0 %v2313
    %3674 = vmatpush.msra.mxu0 %v2310
    %3675 = vmatpush.msra.mxu0 %v2307
    %3676 = vmatpush.msra.mxu0 %v2304
    %3677 = vmatpush.msra.mxu0 %v2301
    %3678 = vmatpush.msra.mxu0 %v2298
    %3679 = vmatpush.msra.mxu0 %v2295
    %3680 = vmatpush.msra.mxu0 %v2292
    %3681 = vmatpush.msra.mxu0 %v2289
    %3682 = vmatpush.msra.mxu0 %v2286
    %3683 = vmatpush.msra.mxu0 %v2283
    %3684 = vmatmul.f32.gmra.mxu0 %v2014
    %v3685 = vpop.f32.mrf.mxu0
    %v3686 = vadd.f32 %v3663, %v3685
    %3687 = vmatmul.f32.gmra.mxu0 %v2030
    %v3688 = vpop.f32.mrf.mxu0
    %v3689 = vadd.f32 %v3666, %v3688
    %3690 = vdwg.mxu0
    %3691 = vmatpush.msra.mxu0 %v2376
    %3692 = vmatpush.msra.mxu0 %v2373
    %3693 = vmatpush.msra.mxu0 %v2370
    %3694 = vmatpush.msra.mxu0 %v2367
    %3695 = vmatpush.msra.mxu0 %v2364
    %3696 = vmatpush.msra.mxu0 %v2361
    %3697 = vmatpush.msra.mxu0 %v2358
    %3698 = vmatpush.msra.mxu0 %v2355
    %3699 = vmatpush.msra.mxu0 %v2352
    %3700 = vmatpush.msra.mxu0 %v2349
    %3701 = vmatpush.msra.mxu0 %v2346
    %3702 = vmatpush.msra.mxu0 %v2343
    %3703 = vmatpush.msra.mxu0 %v2340
    %3704 = vmatpush.msra.mxu0 %v2337
    %3705 = vmatpush.msra.mxu0 %v2334
    %3706 = vmatpush.msra.mxu0 %v2331
    %3707 = vmatmul.f32.gmra.mxu0 %v2015
    %v3708 = vpop.f32.mrf.mxu0
    %v3709 = vadd.f32 %v3686, %v3708
    %3710 = vmatmul.f32.gmra.mxu0 %v2031
    %v3711 = vpop.f32.mrf.mxu0
    %v3712 = vadd.f32 %v3689, %v3711
    %3713 = vdwg.mxu0
    %3714 = vmatpush.msra.mxu0 %v2424
    %3715 = vmatpush.msra.mxu0 %v2421
    %3716 = vmatpush.msra.mxu0 %v2418
    %3717 = vmatpush.msra.mxu0 %v2415
    %3718 = vmatpush.msra.mxu0 %v2412
    %3719 = vmatpush.msra.mxu0 %v2409
    %3720 = vmatpush.msra.mxu0 %v2406
    %3721 = vmatpush.msra.mxu0 %v2403
    %3722 = vmatpush.msra.mxu0 %v2400
    %3723 = vmatpush.msra.mxu0 %v2397
    %3724 = vmatpush.msra.mxu0 %v2394
    %3725 = vmatpush.msra.mxu0 %v2391
    %3726 = vmatpush.msra.mxu0 %v2388
    %3727 = vmatpush.msra.mxu0 %v2385
    %3728 = vmatpush.msra.mxu0 %v2382
    %3729 = vmatpush.msra.mxu0 %v2379
    %3730 = vmatmul.f32.gmra.mxu0 %v2016
    %v3731 = vpop.f32.mrf.mxu0
    %v3732 = vadd.f32 %v3709, %v3731
    %3733 = vmatmul.f32.gmra.mxu0 %v2032
    %v3734 = vpop.f32.mrf.mxu0
    %v3735 = vadd.f32 %v3712, %v3734
    %3736 = vdwg.mxu0
    %3737 = vmatpush.msra.mxu0 %v2472
    %3738 = vmatpush.msra.mxu0 %v2469
    %3739 = vmatpush.msra.mxu0 %v2466
    %3740 = vmatpush.msra.mxu0 %v2463
    %3741 = vmatpush.msra.mxu0 %v2460
    %3742 = vmatpush.msra.mxu0 %v2457
    %3743 = vmatpush.msra.mxu0 %v2454
    %3744 = vmatpush.msra.mxu0 %v2451
    %3745 = vmatpush.msra.mxu0 %v2448
    %3746 = vmatpush.msra.mxu0 %v2445
    %3747 = vmatpush.msra.mxu0 %v2442
    %3748 = vmatpush.msra.mxu0 %v2439
    %3749 = vmatpush.msra.mxu0 %v2436
    %3750 = vmatpush.msra.mxu0 %v2433
    %3751 = vmatpush.msra.mxu0 %v2430
    %3752 = vmatpush.msra.mxu0 %v2427
    %3753 = vmatmul.f32.gmra.mxu0 %v2017
    %v3754 = vpop.f32.mrf.mxu0
    %v3755 = vadd.f32 %v3732, %v3754
    %3756 = vmatmul.f32.gmra.mxu0 %v2033
    %v3757 = vpop.f32.mrf.mxu0
    %v3758 = vadd.f32 %v3735, %v3757
    %3759 = vdwg.mxu0
    %3760 = vmatpush.msra.mxu0 %v2520
    %3761 = vmatpush.msra.mxu0 %v2517
    %3762 = vmatpush.msra.mxu0 %v2514
    %3763 = vmatpush.msra.mxu0 %v2511
    %3764 = vmatpush.msra.mxu0 %v2508
    %3765 = vmatpush.msra.mxu0 %v2505
    %3766 = vmatpush.msra.mxu0 %v2502
    %3767 = vmatpush.msra.mxu0 %v2499
    %3768 = vmatpush.msra.mxu0 %v2496
    %3769 = vmatpush.msra.mxu0 %v2493
    %3770 = vmatpush.msra.mxu0 %v2490
    %3771 = vmatpush.msra.mxu0 %v2487
    %3772 = vmatpush.msra.mxu0 %v2484
    %3773 = vmatpush.msra.mxu0 %v2481
    %3774 = vmatpush.msra.mxu0 %v2478
    %3775 = vmatpush.msra.mxu0 %v2475
    %3776 = vmatmul.f32.gmra.mxu0 %v2018
    %v3777 = vpop.f32.mrf.mxu0
    %v3778 = vadd.f32 %v3755, %v3777
    %3779 = vmatmul.f32.gmra.mxu0 %v2034
    %v3780 = vpop.f32.mrf.mxu0
    %v3781 = vadd.f32 %v3758, %v3780
    %3782 = vdwg.mxu0
    %3783 = vmatpush.msra.mxu0 %v2568
    %3784 = vmatpush.msra.mxu0 %v2565
    %3785 = vmatpush.msra.mxu0 %v2562
    %3786 = vmatpush.msra.mxu0 %v2559
    %3787 = vmatpush.msra.mxu0 %v2556
    %3788 = vmatpush.msra.mxu0 %v2553
    %3789 = vmatpush.msra.mxu0 %v2550
    %3790 = vmatpush.msra.mxu0 %v2547
    %3791 = vmatpush.msra.mxu0 %v2544
    %3792 = vmatpush.msra.mxu0 %v2541
    %3793 = vmatpush.msra.mxu0 %v2538
    %3794 = vmatpush.msra.mxu0 %v2535
    %3795 = vmatpush.msra.mxu0 %v2532
    %3796 = vmatpush.msra.mxu0 %v2529
    %3797 = vmatpush.msra.mxu0 %v2526
    %3798 = vmatpush.msra.mxu0 %v2523
    %3799 = vmatmul.f32.gmra.mxu0 %v2019
    %v3800 = vpop.f32.mrf.mxu0
    %v3801 = vadd.f32 %v3778, %v3800
    %3802 = vmatmul.f32.gmra.mxu0 %v2035
    %v3803 = vpop.f32.mrf.mxu0
    %v3804 = vadd.f32 %v3781, %v3803
    %3805 = vdwg.mxu0
    %3806 = vmatpush.msra.mxu0 %v2616
    %3807 = vmatpush.msra.mxu0 %v2613
    %3808 = vmatpush.msra.mxu0 %v2610
    %3809 = vmatpush.msra.mxu0 %v2607
    %3810 = vmatpush.msra.mxu0 %v2604
    %3811 = vmatpush.msra.mxu0 %v2601
    %3812 = vmatpush.msra.mxu0 %v2598
    %3813 = vmatpush.msra.mxu0 %v2595
    %3814 = vmatpush.msra.mxu0 %v2592
    %3815 = vmatpush.msra.mxu0 %v2589
    %3816 = vmatpush.msra.mxu0 %v2586
    %3817 = vmatpush.msra.mxu0 %v2583
    %3818 = vmatpush.msra.mxu0 %v2580
    %3819 = vmatpush.msra.mxu0 %v2577
    %3820 = vmatpush.msra.mxu0 %v2574
    %3821 = vmatpush.msra.mxu0 %v2571
    %3822 = vmatmul.f32.gmra.mxu0 %v2020
    %v3823 = vpop.f32.mrf.mxu0
    %v3824 = vadd.f32 %v3801, %v3823
    %3825 = vmatmul.f32.gmra.mxu0 %v2036
    %v3826 = vpop.f32.mrf.mxu0
    %v3827 = vadd.f32 %v3804, %v3826
    %3828 = vdwg.mxu0
    %3829 = vmatpush.msra.mxu0 %v2664
    %3830 = vmatpush.msra.mxu0 %v2661
    %3831 = vmatpush.msra.mxu0 %v2658
    %3832 = vmatpush.msra.mxu0 %v2655
    %3833 = vmatpush.msra.mxu0 %v2652
    %3834 = vmatpush.msra.mxu0 %v2649
    %3835 = vmatpush.msra.mxu0 %v2646
    %3836 = vmatpush.msra.mxu0 %v2643
    %3837 = vmatpush.msra.mxu0 %v2640
    %3838 = vmatpush.msra.mxu0 %v2637
    %3839 = vmatpush.msra.mxu0 %v2634
    %3840 = vmatpush.msra.mxu0 %v2631
    %3841 = vmatpush.msra.mxu0 %v2628
    %3842 = vmatpush.msra.mxu0 %v2625
    %3843 = vmatpush.msra.mxu0 %v2622
    %3844 = vmatpush.msra.mxu0 %v2619
    %3845 = vmatmul.f32.gmra.mxu0 %v2021
    %v3846 = vpop.f32.mrf.mxu0
    %v3847 = vadd.f32 %v3824, %v3846
    %3848 = vmatmul.f32.gmra.mxu0 %v2037
    %v3849 = vpop.f32.mrf.mxu0
    %v3850 = vadd.f32 %v3827, %v3849
    %3851 = vdwg.mxu0
    %3852 = vmatpush.msra.mxu0 %v2712
    %3853 = vmatpush.msra.mxu0 %v2709
    %3854 = vmatpush.msra.mxu0 %v2706
    %3855 = vmatpush.msra.mxu0 %v2703
    %3856 = vmatpush.msra.mxu0 %v2700
    %3857 = vmatpush.msra.mxu0 %v2697
    %3858 = vmatpush.msra.mxu0 %v2694
    %3859 = vmatpush.msra.mxu0 %v2691
    %3860 = vmatpush.msra.mxu0 %v2688
    %3861 = vmatpush.msra.mxu0 %v2685
    %3862 = vmatpush.msra.mxu0 %v2682
    %3863 = vmatpush.msra.mxu0 %v2679
    %3864 = vmatpush.msra.mxu0 %v2676
    %3865 = vmatpush.msra.mxu0 %v2673
    %3866 = vmatpush.msra.mxu0 %v2670
    %3867 = vmatpush.msra.mxu0 %v2667
    %3868 = vmatmul.f32.gmra.mxu0 %v2022
    %v3869 = vpop.f32.mrf.mxu0
    %v3870 = vadd.f32 %v3847, %v3869
    %3871 = vmatmul.f32.gmra.mxu0 %v2038
    %v3872 = vpop.f32.mrf.mxu0
    %v3873 = vadd.f32 %v3850, %v3872
    %3874 = vdwg.mxu0
    %3875 = vmatpush.msra.mxu0 %v2760
    %3876 = vmatpush.msra.mxu0 %v2757
    %3877 = vmatpush.msra.mxu0 %v2754
    %3878 = vmatpush.msra.mxu0 %v2751
    %3879 = vmatpush.msra.mxu0 %v2748
    %3880 = vmatpush.msra.mxu0 %v2745
    %3881 = vmatpush.msra.mxu0 %v2742
    %3882 = vmatpush.msra.mxu0 %v2739
    %3883 = vmatpush.msra.mxu0 %v2736
    %3884 = vmatpush.msra.mxu0 %v2733
    %3885 = vmatpush.msra.mxu0 %v2730
    %3886 = vmatpush.msra.mxu0 %v2727
    %3887 = vmatpush.msra.mxu0 %v2724
    %3888 = vmatpush.msra.mxu0 %v2721
    %3889 = vmatpush.msra.mxu0 %v2718
    %3890 = vmatpush.msra.mxu0 %v2715
    %3891 = vmatmul.f32.gmra.mxu0 %v2023
    %v3892 = vpop.f32.mrf.mxu0
    %v3893 = vadd.f32 %v3870, %v3892
    %3894 = vmatmul.f32.gmra.mxu0 %v2039
    %v3895 = vpop.f32.mrf.mxu0
    %v3896 = vadd.f32 %v3873, %v3895
    %3897 = vdwg.mxu0
    %3898 = vmatpush.msra.mxu0 %v2808
    %3899 = vmatpush.msra.mxu0 %v2805
    %3900 = vmatpush.msra.mxu0 %v2802
    %3901 = vmatpush.msra.mxu0 %v2799
    %3902 = vmatpush.msra.mxu0 %v2796
    %3903 = vmatpush.msra.mxu0 %v2793
    %3904 = vmatpush.msra.mxu0 %v2790
    %3905 = vmatpush.msra.mxu0 %v2787
    %3906 = vmatpush.msra.mxu0 %v2784
    %3907 = vmatpush.msra.mxu0 %v2781
    %3908 = vmatpush.msra.mxu0 %v2778
    %3909 = vmatpush.msra.mxu0 %v2775
    %3910 = vmatpush.msra.mxu0 %v2772
    %3911 = vmatpush.msra.mxu0 %v2769
    %3912 = vmatpush.msra.mxu0 %v2766
    %3913 = vmatpush.msra.mxu0 %v2763
    %3914 = vmatmul.f32.gmra.mxu0 %v2024
    %v3915 = vpop.f32.mrf.mxu0
    %v3916 = vadd.f32 %v3893, %v3915
    %3917 = vmatmul.f32.gmra.mxu0 %v2040
    %v3918 = vpop.f32.mrf.mxu0
    %v3919 = vadd.f32 %v3896, %v3918
    %3920 = vdwg.mxu0
    %3921 = vst [vmem:[#allocation11] sm:$0xff] %v3180
    %3922 = vst [vmem:[#allocation11 + $0x8] sm:$0xff] %v3548
    %3923 = vst [vmem:[#allocation11 + $0x10] sm:$0xff] %v3916
    %3924 = vst [vmem:[#allocation11 + $0x18] sm:$0xff] %v3183
    %3925 = vst [vmem:[#allocation11 + $0x20] sm:$0xff] %v3551
    %3926 = vst [vmem:[#allocation11 + $0x28] sm:$0xff] %v3919
    // Predicated region
    $region42: #{tpu_custom_call.1} parent=1 // pred_check
      _
    $region43: #{tpu_custom_call.1} parent=1 // pred_check_branch
      %3928 = sbr.rel (0) target = $region45
    $region44: #{tpu_custom_call.1} parent=1 // pred_region
      %3930 = vsyncadd [#allocation4], 0
      %s3931 = sshll.u32 [#allocation11], 4
      %s3932 = int_to_ptr.vmem [resolvable:$true] %s3931
      %s3933 = sshll.u32 %s5, 4
      %s3934 = int_to_ptr.hbm [resolvable:$true] %s3933
      %3939 = dma.vmem_to_hbm [thread:$0]  %s3932, 768, %s3934, [#allocation4], 384, 384, 24
    $region45: #{tpu_custom_call.1} parent=1 // pred_fallthru
      _
    // Predicated region
    $region46: #{tpu_custom_call.1} parent=1 // pred_check
      _
    $region47: #{tpu_custom_call.1} parent=1 // pred_check_branch
      %3941 = sbr.rel (0) target = $region49
    $region48: #{tpu_custom_call.1} parent=1 // pred_region
      %3943 = dma.done [#allocation4], 768
    $region49: #{tpu_custom_call.1} parent=1 // pred_fallthru
      _
    %3944 = vsyncpa [#allocation3], 1
    %3945 = vsyncpa [#allocation6], 1
    %3946 = vsyncpa [#allocation9], 1
    %3947 = vsyncpa [#allocation4], 1

</llo_original>
